<compile_context>
chip_gen: v7x
topology: tpu7x:2x2x1
jax: 0.10.0
libtpu: 0.0.40
codegen_flags: <defaults>
</compile_context>

<pallas_src>
import functools

import jax
import jax.numpy as jnp
import numpy as np
from jax import lax
from jax.experimental import pallas as pl
from jax.experimental.pallas import tpu as pltpu


# --------------------------------------------------------------------------
# Kernels
# --------------------------------------------------------------------------

def _conv_dense_kernel(x_ref, wc_ref, bc_ref, wd_ref, bd_ref, o_ref,
                       *, ksize, dilation, t_out):
    """Fused TDNNLayer (dilated Conv1d + ReLU) + DenseLayer (Linear + ReLU).

    x_ref : (1, T_in, C_in)   time on sublanes, channels lane-dense
    wc_ref: (K, C_in, C_mid)  conv weight, tap-major, pre-transposed
    bc_ref: (1, C_mid)
    wd_ref: (C_mid, C_out)    dense weight, pre-transposed
    bd_ref: (1, C_out)
    o_ref : (1, T_out, C_out)
    """
    x = x_ref[0]                                               # (T_in, C_in)
    # Conv as K time-shifted MXU matmuls, f32 accumulation.
    acc = jnp.dot(x[0:t_out, :], wc_ref[0],
                  preferred_element_type=jnp.float32)
    for k in range(1, ksize):                                  # static unroll
        xs = x[k * dilation:k * dilation + t_out, :]
        acc = acc + jnp.dot(xs, wc_ref[k],
                            preferred_element_type=jnp.float32)
    h = jnp.maximum(acc + bc_ref[...], 0.0)                    # (T_out, C_mid)
    y = jnp.dot(h, wd_ref[...], preferred_element_type=jnp.float32) + bd_ref[...]
    o_ref[0] = jnp.maximum(y, 0.0).astype(o_ref.dtype)


def _tail_kernel(x_ref, w9_ref, b9_ref, w10_ref, b10_ref,
                 wm_ref, ws_ref, bf_ref, o_ref, *, n_frames):
    """Fused tail: Linear(512,512)+ReLU -> Linear(512,1500)+ReLU ->
    stats pooling (mean, unbiased std over time) -> Linear(3000,512).

    x_ref : (1, T, 512)     w9_ref : (512, 512)    w10_ref : (512, 1500)
    wm_ref/ws_ref : (1500, 512)   bf_ref : (1, 512)
    o_ref : (1, 1, 512)     e = mean @ Wm + std @ Ws + b
    """
    x = x_ref[0]                                               # (T, 512)
    h = jnp.maximum(
        jnp.dot(x, w9_ref[...], preferred_element_type=jnp.float32)
        + b9_ref[...], 0.0)                                    # (T, 512)
    h = jnp.maximum(
        jnp.dot(h, w10_ref[...], preferred_element_type=jnp.float32)
        + b10_ref[...], 0.0)                                   # (T, 1500)
    inv_n = 1.0 / n_frames
    mean = jnp.sum(h, axis=0, keepdims=True) * inv_n           # (1, 1500)
    d = h - mean
    var = jnp.sum(d * d, axis=0, keepdims=True) * (1.0 / (n_frames - 1))
    std = jnp.sqrt(var)                                        # (1, 1500)
    e = (jnp.dot(mean, wm_ref[...], preferred_element_type=jnp.float32)
         + jnp.dot(std, ws_ref[...], preferred_element_type=jnp.float32)
         + bf_ref[...])
    o_ref[0] = e.astype(o_ref.dtype)


# --------------------------------------------------------------------------
# Pallas wrappers
# --------------------------------------------------------------------------

def _parallel():
    return pltpu.CompilerParams(dimension_semantics=("parallel",))


def conv_dense_layer(x, wc, bc, wd, bd, *, dilation):
    """x: (B, T_in, C_in) -> (B, T_out, C_out)."""
    B, t_in, c_in = x.shape
    ksize, _, c_mid = wc.shape
    c_out = wd.shape[1]
    t_out = t_in - (ksize - 1) * dilation
    kern = functools.partial(_conv_dense_kernel, ksize=ksize,
                             dilation=dilation, t_out=t_out)
    return pl.pallas_call(
        kern,
        out_shape=jax.ShapeDtypeStruct((B, t_out, c_out), x.dtype),
        grid=(B,),
        in_specs=[
            pl.BlockSpec((1, t_in, c_in), lambda b: (b, 0, 0)),
            pl.BlockSpec((ksize, c_in, c_mid), lambda b: (0, 0, 0)),
            pl.BlockSpec((1, c_mid), lambda b: (0, 0)),
            pl.BlockSpec((c_mid, c_out), lambda b: (0, 0)),
            pl.BlockSpec((1, c_out), lambda b: (0, 0)),
        ],
        out_specs=pl.BlockSpec((1, t_out, c_out), lambda b: (b, 0, 0)),
        compiler_params=_parallel(),
    )(x, wc, bc, wd, bd)


def tail_layer(x, w9, b9, w10, b10, wm, ws, bf):
    """x: (B, T, 512) -> (B, 512): dense9 + dense10 + stats + final Linear."""
    B, t, c_in = x.shape
    c9 = w9.shape[1]
    c10 = w10.shape[1]
    e_dim = wm.shape[1]
    kern = functools.partial(_tail_kernel, n_frames=t)
    out = pl.pallas_call(
        kern,
        out_shape=jax.ShapeDtypeStruct((B, 1, e_dim), x.dtype),
        grid=(B,),
        in_specs=[
            pl.BlockSpec((1, t, c_in), lambda b: (b, 0, 0)),
            pl.BlockSpec((c_in, c9), lambda b: (0, 0)),
            pl.BlockSpec((1, c9), lambda b: (0, 0)),
            pl.BlockSpec((c9, c10), lambda b: (0, 0)),
            pl.BlockSpec((1, c10), lambda b: (0, 0)),
            pl.BlockSpec((c10, e_dim), lambda b: (0, 0)),
            pl.BlockSpec((c10, e_dim), lambda b: (0, 0)),
            pl.BlockSpec((1, e_dim), lambda b: (0, 0)),
        ],
        out_specs=pl.BlockSpec((1, 1, e_dim), lambda b: (b, 0, 0)),
        compiler_params=_parallel(),
    )(x, w9, b9, w10, b10, wm, ws, bf)
    return out.reshape(B, e_dim)


def tdnn_forward(x, params):
    """Eval-mode TDNN forward. x: (B, num_features, T) -> (B, 512)."""
    h = jnp.transpose(x, (0, 2, 1))            # tiny (B,30,T) -> (B,T,30)
    for (wc, bc, dil), (wd, bd) in zip(params["convs"], params["dense_after_conv"]):
        h = conv_dense_layer(h, wc, bc, wd, bd, dilation=dil)
    (w9, b9), (w10, b10) = params["dense9"], params["dense10"]
    wm, ws, bf = params["final"]
    return tail_layer(h, w9, b9, w10, b10, wm, ws, bf)   # (B, 512)


# --------------------------------------------------------------------------
# Pure-JAX reference (intended x-vector semantics, channel-first layout)
# --------------------------------------------------------------------------

def reference_forward(x, ref):
    def conv_relu(h, w, b, d):
        o = lax.conv_general_dilated(
            h, w, window_strides=(1,), padding="VALID", rhs_dilation=(d,),
            dimension_numbers=("NCH", "OIH", "NCH"))
        return jnp.maximum(o + b[None, :, None], 0.0)

    def dense_relu(h, w, b):                   # per-frame Linear over channels
        o = jnp.einsum("bct,oc->bot", h, w) + b[None, :, None]
        return jnp.maximum(o, 0.0)

    h = x
    for (wc, bc, d), (wd, bd) in zip(ref["convs"], ref["dense_after_conv"]):
        h = conv_relu(h, wc, bc, d)
        h = dense_relu(h, wd, bd)
    h = dense_relu(h, *ref["dense9"])
    h = dense_relu(h, *ref["dense10"])         # (B, 1500, T')
    n = h.shape[-1]
    mean = h.mean(axis=-1)
    std = jnp.sqrt(((h - mean[..., None]) ** 2).sum(-1) / (n - 1))
    stats = jnp.concatenate([mean, std], axis=-1)     # (B, 3000)
    w12, b12 = ref["final"]
    return stats @ w12.T + b12


# --------------------------------------------------------------------------
# Main
# --------------------------------------------------------------------------

if __name__ == "__main__":
    B, NFEAT, T = 2, 30, 128
    C, C_POOL, EMB = 512, 1500, 512
    conv_cfg = [(NFEAT, 5, 1), (C, 3, 2), (C, 3, 3), (C, 3, 4)]  # (cin, k, dil)

    key = jax.random.PRNGKey(0)
    n_keys = 1 + 2 * len(conv_cfg) * 2 + 2 * 3
    keys = iter(jax.random.split(key, n_keys + 4))

    def kaiming_conv(k, cout, cin, ks):        # kaiming_normal_, fan_out, relu
        std = np.sqrt(2.0 / (cout * ks))
        return std * jax.random.normal(k, (cout, cin, ks), jnp.float32)

    def xavier_linear(k, cout, cin):           # xavier_uniform_
        bound = np.sqrt(6.0 / (cin + cout))
        return jax.random.uniform(k, (cout, cin), jnp.float32, -bound, bound)

    def bias(k, n):                            # module zeroes biases; small
        return jax.random.uniform(k, (n,), jnp.float32, -0.05, 0.05)

    x = jax.random.normal(next(keys), (B, NFEAT, T), dtype=jnp.float32)

    ref_params = {"convs": [], "dense_after_conv": []}
    for cin, ks, dil in conv_cfg:
        ref_params["convs"].append(
            (kaiming_conv(next(keys), C, cin, ks), bias(next(keys), C), dil))
        ref_params["dense_after_conv"].append(
            (xavier_linear(next(keys), C, C), bias(next(keys), C)))
    ref_params["dense9"] = (xavier_linear(next(keys), C, C), bias(next(keys), C))
    ref_params["dense10"] = (xavier_linear(next(keys), C_POOL, C),
                             bias(next(keys), C_POOL))
    w12 = xavier_linear(next(keys), EMB, 2 * C_POOL)
    b12 = bias(next(keys), EMB)
    ref_params["final"] = (w12, b12)

    # Kernel-layout parameters (pre-transposed so kernels run x @ W on the MXU).
    params = {
        "convs": [(jnp.transpose(wc, (2, 1, 0)), bc.reshape(1, -1), dil)
                  for (wc, bc, dil) in ref_params["convs"]],
        "dense_after_conv": [(wd.T, bd.reshape(1, -1))
                             for (wd, bd) in ref_params["dense_after_conv"]],
        "dense9": (ref_params["dense9"][0].T,
                   ref_params["dense9"][1].reshape(1, -1)),
        "dense10": (ref_params["dense10"][0].T,
                    ref_params["dense10"][1].reshape(1, -1)),
        "final": (w12[:, :C_POOL].T, w12[:, C_POOL:].T, b12.reshape(1, -1)),
    }

    emb = tdnn_forward(x, params)
    emb = jax.block_until_ready(emb)
    assert emb.shape == (B, EMB), emb.shape

    ref = reference_forward(x, ref_params)
    np.testing.assert_allclose(np.asarray(emb), np.asarray(ref),
                               rtol=5e-4, atol=5e-5)

    print("KERNEL_OK")
</pallas_src>

<mosaic_0001>
module attributes {stable_mosaic.version = 11 : i64} {
  func.func @_conv_dense_kernel(%arg0: i32, %arg1: memref<1x128x30xf32, #tpu.memory_space<vmem>>, %arg2: memref<5x30x512xf32, #tpu.memory_space<vmem>>, %arg3: memref<1x512xf32, #tpu.memory_space<vmem>>, %arg4: memref<512x512xf32, #tpu.memory_space<vmem>>, %arg5: memref<1x512xf32, #tpu.memory_space<vmem>>, %arg6: memref<1x124x512xf32, #tpu.memory_space<vmem>>) attributes {dimension_semantics = [#tpu.dimension_semantics<parallel>], iteration_bounds = array<i64: 2>, scalar_prefetch = 0 : i64, scratch_operands = 0 : i64, tpu.core_type = #tpu.core_type<tc>, window_params = [{transform_indices = @transform_0, window_bounds = array<i64: 1, 128, 30>}, {pipeline_mode = #tpu.pipeline_mode<synchronous>, transform_indices = @transform_1, window_bounds = array<i64: 5, 30, 512>}, {pipeline_mode = #tpu.pipeline_mode<synchronous>, transform_indices = @transform_2, window_bounds = array<i64: 1, 512>}, {pipeline_mode = #tpu.pipeline_mode<synchronous>, transform_indices = @transform_3, window_bounds = array<i64: 512, 512>}, {pipeline_mode = #tpu.pipeline_mode<synchronous>, transform_indices = @transform_4, window_bounds = array<i64: 1, 512>}, {transform_indices = @transform_5, window_bounds = array<i64: 1, 124, 512>}]} {
    %c0 = arith.constant 0 : index
    %c0_0 = arith.constant 0 : index
    %c0_1 = arith.constant 0 : index
    %0 = vector.load %arg1[%c0, %c0_0, %c0_1] : memref<1x128x30xf32, #tpu.memory_space<vmem>>, vector<1x128x30xf32>
    %1 = vector.shape_cast %0 : vector<1x128x30xf32> to vector<128x30xf32>
    %2 = vector.extract_strided_slice %1 {offsets = [0, 0], sizes = [124, 30], strides = [1, 1]} : vector<128x30xf32> to vector<124x30xf32>
    %c0_2 = arith.constant 0 : index
    %c0_3 = arith.constant 0 : index
    %c0_4 = arith.constant 0 : index
    %3 = vector.load %arg2[%c0_2, %c0_3, %c0_4] : memref<5x30x512xf32, #tpu.memory_space<vmem>>, vector<1x30x512xf32>
    %4 = vector.shape_cast %3 : vector<1x30x512xf32> to vector<30x512xf32>
    %cst = arith.constant dense<0.000000e+00> : vector<124x512xf32>
    %5 = tpu.matmul %2, %4, %cst {dimension_numbers = #tpu.dot_dimension_numbers<[1], [0], [0], [1], [0, 0, 1, 1], [], []>} : vector<124x30xf32>, vector<30x512xf32>, vector<124x512xf32> -> vector<124x512xf32>
    %6 = vector.extract_strided_slice %1 {offsets = [1, 0], sizes = [124, 30], strides = [1, 1]} : vector<128x30xf32> to vector<124x30xf32>
    %c1 = arith.constant 1 : index
    %c0_5 = arith.constant 0 : index
    %c0_6 = arith.constant 0 : index
    %7 = vector.load %arg2[%c1, %c0_5, %c0_6] : memref<5x30x512xf32, #tpu.memory_space<vmem>>, vector<1x30x512xf32>
    %8 = vector.shape_cast %7 : vector<1x30x512xf32> to vector<30x512xf32>
    %cst_7 = arith.constant dense<0.000000e+00> : vector<124x512xf32>
    %9 = tpu.matmul %6, %8, %cst_7 {dimension_numbers = #tpu.dot_dimension_numbers<[1], [0], [0], [1], [0, 0, 1, 1], [], []>} : vector<124x30xf32>, vector<30x512xf32>, vector<124x512xf32> -> vector<124x512xf32>
    %10 = arith.addf %5, %9 : vector<124x512xf32>
    %11 = vector.extract_strided_slice %1 {offsets = [2, 0], sizes = [124, 30], strides = [1, 1]} : vector<128x30xf32> to vector<124x30xf32>
    %c2 = arith.constant 2 : index
    %c0_8 = arith.constant 0 : index
    %c0_9 = arith.constant 0 : index
    %12 = vector.load %arg2[%c2, %c0_8, %c0_9] : memref<5x30x512xf32, #tpu.memory_space<vmem>>, vector<1x30x512xf32>
    %13 = vector.shape_cast %12 : vector<1x30x512xf32> to vector<30x512xf32>
    %cst_10 = arith.constant dense<0.000000e+00> : vector<124x512xf32>
    %14 = tpu.matmul %11, %13, %cst_10 {dimension_numbers = #tpu.dot_dimension_numbers<[1], [0], [0], [1], [0, 0, 1, 1], [], []>} : vector<124x30xf32>, vector<30x512xf32>, vector<124x512xf32> -> vector<124x512xf32>
    %15 = arith.addf %10, %14 : vector<124x512xf32>
    %16 = vector.extract_strided_slice %1 {offsets = [3, 0], sizes = [124, 30], strides = [1, 1]} : vector<128x30xf32> to vector<124x30xf32>
    %c3 = arith.constant 3 : index
    %c0_11 = arith.constant 0 : index
    %c0_12 = arith.constant 0 : index
    %17 = vector.load %arg2[%c3, %c0_11, %c0_12] : memref<5x30x512xf32, #tpu.memory_space<vmem>>, vector<1x30x512xf32>
    %18 = vector.shape_cast %17 : vector<1x30x512xf32> to vector<30x512xf32>
    %cst_13 = arith.constant dense<0.000000e+00> : vector<124x512xf32>
    %19 = tpu.matmul %16, %18, %cst_13 {dimension_numbers = #tpu.dot_dimension_numbers<[1], [0], [0], [1], [0, 0, 1, 1], [], []>} : vector<124x30xf32>, vector<30x512xf32>, vector<124x512xf32> -> vector<124x512xf32>
    %20 = arith.addf %15, %19 : vector<124x512xf32>
    %21 = vector.extract_strided_slice %1 {offsets = [4, 0], sizes = [124, 30], strides = [1, 1]} : vector<128x30xf32> to vector<124x30xf32>
    %c4 = arith.constant 4 : index
    %c0_14 = arith.constant 0 : index
    %c0_15 = arith.constant 0 : index
    %22 = vector.load %arg2[%c4, %c0_14, %c0_15] : memref<5x30x512xf32, #tpu.memory_space<vmem>>, vector<1x30x512xf32>
    %23 = vector.shape_cast %22 : vector<1x30x512xf32> to vector<30x512xf32>
    %cst_16 = arith.constant dense<0.000000e+00> : vector<124x512xf32>
    %24 = tpu.matmul %21, %23, %cst_16 {dimension_numbers = #tpu.dot_dimension_numbers<[1], [0], [0], [1], [0, 0, 1, 1], [], []>} : vector<124x30xf32>, vector<30x512xf32>, vector<124x512xf32> -> vector<124x512xf32>
    %25 = arith.addf %20, %24 : vector<124x512xf32>
    %c0_17 = arith.constant 0 : index
    %c0_18 = arith.constant 0 : index
    %26 = vector.load %arg3[%c0_17, %c0_18] : memref<1x512xf32, #tpu.memory_space<vmem>>, vector<1x512xf32>
    %27 = vector.broadcast %26 : vector<1x512xf32> to vector<124x512xf32>
    %28 = arith.addf %25, %27 : vector<124x512xf32>
    %cst_19 = arith.constant 0.000000e+00 : f32
    %29 = vector.broadcast %cst_19 : f32 to vector<124x512xf32>
    %30 = arith.maximumf %28, %29 : vector<124x512xf32>
    %c0_20 = arith.constant 0 : index
    %c0_21 = arith.constant 0 : index
    %31 = vector.load %arg4[%c0_20, %c0_21] : memref<512x512xf32, #tpu.memory_space<vmem>>, vector<512x512xf32>
    %cst_22 = arith.constant dense<0.000000e+00> : vector<124x512xf32>
    %32 = tpu.matmul %30, %31, %cst_22 {dimension_numbers = #tpu.dot_dimension_numbers<[1], [0], [0], [1], [0, 0, 1, 1], [], []>} : vector<124x512xf32>, vector<512x512xf32>, vector<124x512xf32> -> vector<124x512xf32>
    %c0_23 = arith.constant 0 : index
    %c0_24 = arith.constant 0 : index
    %33 = vector.load %arg5[%c0_23, %c0_24] : memref<1x512xf32, #tpu.memory_space<vmem>>, vector<1x512xf32>
    %34 = vector.broadcast %33 : vector<1x512xf32> to vector<124x512xf32>
    %35 = arith.addf %32, %34 : vector<124x512xf32>
    %cst_25 = arith.constant 0.000000e+00 : f32
    %36 = vector.broadcast %cst_25 : f32 to vector<124x512xf32>
    %37 = arith.maximumf %35, %36 : vector<124x512xf32>
    %c0_26 = arith.constant 0 : index
    %c0_27 = arith.constant 0 : index
    %c0_28 = arith.constant 0 : index
    %38 = vector.load %arg6[%c0_26, %c0_27, %c0_28] : memref<1x124x512xf32, #tpu.memory_space<vmem>>, vector<1x124x512xf32>
    %39 = vector.shape_cast %38 : vector<1x124x512xf32> to vector<124x512xf32>
    %40 = vector.shape_cast %37 : vector<124x512xf32> to vector<1x124x512xf32>
    tpu.vector_store %arg6[%c0_26, %c0_27, %c0_28], %40 {strides = array<i32>} : memref<1x124x512xf32, #tpu.memory_space<vmem>>, vector<1x124x512xf32>,
    return
  }
  func.func @transform_0(%arg0: i32) -> (i32, i32, i32) {
    %c0_i32 = arith.constant 0 : i32
    %c0_i32_0 = arith.constant 0 : i32
    %c0_i32_1 = arith.constant 0 : i32
    return %arg0, %c0_i32, %c0_i32_0 : i32, i32, i32
  }
  func.func @transform_1(%arg0: i32) -> (i32, i32, i32) {
    %c0_i32 = arith.constant 0 : i32
    %c0_i32_0 = arith.constant 0 : i32
    %c0_i32_1 = arith.constant 0 : i32
    %c0_i32_2 = arith.constant 0 : i32
    return %c0_i32, %c0_i32_0, %c0_i32_1 : i32, i32, i32
  }
  func.func @transform_2(%arg0: i32) -> (i32, i32) {
    %c0_i32 = arith.constant 0 : i32
    %c0_i32_0 = arith.constant 0 : i32
    %c0_i32_1 = arith.constant 0 : i32
    return %c0_i32, %c0_i32_0 : i32, i32
  }
  func.func @transform_3(%arg0: i32) -> (i32, i32) {
    %c0_i32 = arith.constant 0 : i32
    %c0_i32_0 = arith.constant 0 : i32
    %c0_i32_1 = arith.constant 0 : i32
    return %c0_i32, %c0_i32_0 : i32, i32
  }
  func.func @transform_4(%arg0: i32) -> (i32, i32) {
    %c0_i32 = arith.constant 0 : i32
    %c0_i32_0 = arith.constant 0 : i32
    %c0_i32_1 = arith.constant 0 : i32
    return %c0_i32, %c0_i32_0 : i32, i32
  }
  func.func @transform_5(%arg0: i32) -> (i32, i32, i32) {
    %c0_i32 = arith.constant 0 : i32
    %c0_i32_0 = arith.constant 0 : i32
    %c0_i32_1 = arith.constant 0 : i32
    return %arg0, %c0_i32, %c0_i32_0 : i32, i32, i32
  }
}

</mosaic_0001>

<llo_original>
// kernel: tpu_custom_call.1
$region0: #{tpu_custom_call.1}
  #allocation0 [shape = 'u32[]', space=smem, size = 0x4, offset = 0x4, fixed_abs, tag = 'smem constant byte address 0x4 - core index']
  #allocation1 [shape = 'u32[144,128]{1,0:T(1,128)}', space=vmem, size = 0x12000, scoped, tag = 'internal scratch']
  %s0 = inlined_call_operand.vmem [shape: f32[2,128,30], index: 0, kind: input, shape index: {}]
  %s1 = inlined_call_operand.hbm [shape: f32[5,30,512], index: 1, kind: input, shape index: {}]
  %s2 = inlined_call_operand.vmem [shape: f32[1,512], index: 2, kind: input, shape index: {}]
  %s3 = inlined_call_operand.hbm [shape: f32[512,512], index: 3, kind: input, shape index: {}]
  %s4 = inlined_call_operand.vmem [shape: f32[1,512], index: 4, kind: input, shape index: {}]
  %s5 = inlined_call_operand.vmem [shape: f32[2,124,512], index: 5, kind: output, shape index: {}]
  %s6 = sld [smem:[#allocation0]]
  $region61: #{tpu_custom_call.1} parent=0
    _
  %s8 = ssub.s32 1, %s6
  %s9 = scalar_select 0, %s8, %s6
  $region1: #{tpu_custom_call.1} parent=0
    #allocation2 [shape = 'u8[327680]{0}', space=vmem, size = 0x50000, scoped, tag = 'input window, operand 1, single buffered']
    #allocation3 [shape = 's32[2]{0}', space=sflag, size = 0x8, scoped, tag = 'scoped memory for tpu_custom_call.1']
    #allocation4 [shape = 'u8[1048576]{0}', space=vmem, size = 0x100000, scoped, tag = 'input window, operand 3, single buffered']
    #allocation5 [shape = 's32[1]{0}', space=sflag, size = 0x4, scoped, tag = 'scoped memory for tpu_custom_call.1']
    %10 = vsyncpa [#allocation3], 0
    %11 = vsyncpa [#allocation5], 0
    loop: start=0, step=1, limit=4
    $region2: #{tpu_custom_call.1} parent=1 // loop_pre_header
      _
    $region3: #{tpu_custom_call.1} parent=1 // loop_header
      %s13 = sphi 0, %s17
      %p14 = scmp.ge.s32.totalorder %s13, 4
      %s23 = sphi 0, %s25
      %s26 = sphi 0, %s23
      %s27 = sphi 0, %s26
      %s43 = sphi 0, %s27
      %s47 = sphi 0, %s47
      %s49 = sphi 0, %s47
      %s50 = sphi 0, %s49
      %s64 = sphi 0, %s50
      %s68 = sphi 0, %s68
      %s70 = sphi 0, %s68
      %s71 = sphi 0, %s70
      %s85 = sphi 0, %s71
      %s89 = sphi 0, %s89
      %s91 = sphi 0, %s89
      %s92 = sphi 0, %s91
      %s106 = sphi 0, %s92
      %s110 = sphi 0, %s110
      %s112 = sphi 0, %s110
      %s113 = sphi 0, %s112
      %s127 = sphi 0, %s113
      %s133 = sphi 0, %s135
      %s136 = sphi 0, %s133
      %s137 = sphi 0, %s136
      %s153 = sphi 0, %s137
    $region4: #{tpu_custom_call.1} parent=1 // loop_header_branch
      %16 = sbr.rel (%p14) target = $region8
    $region5: #{tpu_custom_call.1} parent=1 // loop_body
      %s18 = ssub.s32 %s13, 1
      %s19 = ssub.s32 %s13, 2
      %s20 = sadd.s32 %s13, 1
      %s21 = ssub.s32 %s13, %s20
      %p22 = scmp.eq.s32.totalorder %s21, 0
      %s24 = sadd.s32 %s23, 1
      %s25 = scalar_select %p22, %s23, %s24
      %p28 = pneg %p22
      %p29 = scmp.eq.s32.totalorder %s13, 1
      %p30 = por %p28, %p29
      %p31 = scmp.ne.s32.totalorder %s23, %s26
      %p32 = scmp.eq.s32.totalorder %s13, 0
      %p33 = por %p31, %p32
      %p34 = scmp.ne.s32.totalorder %s23, %s26
      %p35 = scmp.eq.s32.totalorder %s18, 1
      %p36 = por %p34, %p35
      %p37 = scmp.ne.s32.totalorder %s26, %s27
      %p38 = scmp.eq.s32.totalorder %s18, 0
      %p39 = por %p37, %p38
      %p40 = scmp.ne.s32.totalorder %s26, %s27
      %p41 = scmp.eq.s32.totalorder %s19, 1
      %p42 = por %p40, %p41
      %p44 = scmp.ne.s32.totalorder %s27, %s43
      %p45 = scmp.eq.s32.totalorder %s19, 0
      %p46 = por %p44, %p45
      %s48 = sadd.s32 %s47, 1
      %p51 = scmp.eq.s32.totalorder %s13, 1
      %p52 = scmp.ne.s32.totalorder %s47, %s49
      %p53 = scmp.eq.s32.totalorder %s13, 0
      %p54 = por %p52, %p53
      %p55 = scmp.ne.s32.totalorder %s47, %s49
      %p56 = scmp.eq.s32.totalorder %s18, 1
      %p57 = por %p55, %p56
      %p58 = scmp.ne.s32.totalorder %s49, %s50
      %p59 = scmp.eq.s32.totalorder %s18, 0
      %p60 = por %p58, %p59
      %p61 = scmp.ne.s32.totalorder %s49, %s50
      %p62 = scmp.eq.s32.totalorder %s19, 1
      %p63 = por %p61, %p62
      %p65 = scmp.ne.s32.totalorder %s50, %s64
      %p66 = scmp.eq.s32.totalorder %s19, 0
      %p67 = por %p65, %p66
      %s69 = sadd.s32 %s68, 1
      %p72 = scmp.eq.s32.totalorder %s13, 1
      %p73 = scmp.ne.s32.totalorder %s68, %s70
      %p74 = scmp.eq.s32.totalorder %s13, 0
      %p75 = por %p73, %p74
      %p76 = scmp.ne.s32.totalorder %s68, %s70
      %p77 = scmp.eq.s32.totalorder %s18, 1
      %p78 = por %p76, %p77
      %p79 = scmp.ne.s32.totalorder %s70, %s71
      %p80 = scmp.eq.s32.totalorder %s18, 0
      %p81 = por %p79, %p80
      %p82 = scmp.ne.s32.totalorder %s70, %s71
      %p83 = scmp.eq.s32.totalorder %s19, 1
      %p84 = por %p82, %p83
      %p86 = scmp.ne.s32.totalorder %s71, %s85
      %p87 = scmp.eq.s32.totalorder %s19, 0
      %p88 = por %p86, %p87
      %s90 = sadd.s32 %s89, 1
      %p93 = scmp.eq.s32.totalorder %s13, 1
      %p94 = scmp.ne.s32.totalorder %s89, %s91
      %p95 = scmp.eq.s32.totalorder %s13, 0
      %p96 = por %p94, %p95
      %p97 = scmp.ne.s32.totalorder %s89, %s91
      %p98 = scmp.eq.s32.totalorder %s18, 1
      %p99 = por %p97, %p98
      %p100 = scmp.ne.s32.totalorder %s91, %s92
      %p101 = scmp.eq.s32.totalorder %s18, 0
      %p102 = por %p100, %p101
      %p103 = scmp.ne.s32.totalorder %s91, %s92
      %p104 = scmp.eq.s32.totalorder %s19, 1
      %p105 = por %p103, %p104
      %p107 = scmp.ne.s32.totalorder %s92, %s106
      %p108 = scmp.eq.s32.totalorder %s19, 0
      %p109 = por %p107, %p108
      %s111 = sadd.s32 %s110, 1
      %p114 = scmp.eq.s32.totalorder %s13, 1
      %p115 = scmp.ne.s32.totalorder %s110, %s112
      %p116 = scmp.eq.s32.totalorder %s13, 0
      %p117 = por %p115, %p116
      %p118 = scmp.ne.s32.totalorder %s110, %s112
      %p119 = scmp.eq.s32.totalorder %s18, 1
      %p120 = por %p118, %p119
      %p121 = scmp.ne.s32.totalorder %s112, %s113
      %p122 = scmp.eq.s32.totalorder %s18, 0
      %p123 = por %p121, %p122
      %p124 = scmp.ne.s32.totalorder %s112, %s113
      %p125 = scmp.eq.s32.totalorder %s19, 1
      %p126 = por %p124, %p125
      %p128 = scmp.ne.s32.totalorder %s113, %s127
      %p129 = scmp.eq.s32.totalorder %s19, 0
      %p130 = por %p128, %p129
      %s131 = ssub.s32 %s13, %s20
      %p132 = scmp.eq.s32.totalorder %s131, 0
      %s134 = sadd.s32 %s133, 1
      %s135 = scalar_select %p132, %s133, %s134
      %p138 = pneg %p132
      %p139 = scmp.eq.s32.totalorder %s13, 1
      %p140 = por %p138, %p139
      %p141 = scmp.ne.s32.totalorder %s133, %s136
      %p142 = scmp.eq.s32.totalorder %s13, 0
      %p143 = por %p141, %p142
      %p144 = scmp.ne.s32.totalorder %s133, %s136
      %p145 = scmp.eq.s32.totalorder %s18, 1
      %p146 = por %p144, %p145
      %p147 = scmp.ne.s32.totalorder %s136, %s137
      %p148 = scmp.eq.s32.totalorder %s18, 0
      %p149 = por %p147, %p148
      %p150 = scmp.ne.s32.totalorder %s136, %s137
      %p151 = scmp.eq.s32.totalorder %s19, 1
      %p152 = por %p150, %p151
      %p154 = scmp.ne.s32.totalorder %s137, %s153
      %p155 = scmp.eq.s32.totalorder %s19, 0
      %p156 = por %p154, %p155
      %p157 = scmp.le.s32.totalorder 1, %s13
      %p158 = scmp.lt.s32.totalorder %s13, 3
      %p159 = pnand %p157, %p158
      %p160 = pneg %p159
      // Predicated region
      $region9: #{tpu_custom_call.1} parent=5 // pred_check
        _
      $region10: #{tpu_custom_call.1} parent=5 // pred_check_branch
        %162 = sbr.rel (%p159) target = $region12
      $region11: #{tpu_custom_call.1} parent=5 // pred_region
        %s163 = ssub.s32 %s13, 1
        // Predicated region
        $region13: #{tpu_custom_call.1} parent=11 // pred_check
          %p164 = pneg %p60
        $region14: #{tpu_custom_call.1} parent=11 // pred_check_branch
          %166 = sbr.rel (%p164) target = $region16
        $region15: #{tpu_custom_call.1} parent=11 // pred_region
          %s168 = ssub.s32 10240, 10240
          %169 = vsyncadd [#allocation3], %s168
          %s170 = sshll.u32 [#allocation2], 4
          %s171 = int_to_ptr.vmem [resolvable:$true] %s170
          %176 = dma.hbm_to_vmem [thread:$0]  %s1, 10240, %s171, [#allocation3], 512, 512, 32
        $region16: #{tpu_custom_call.1} parent=11 // pred_fallthru
          _
        // Predicated region
        $region17: #{tpu_custom_call.1} parent=11 // pred_check
          %p177 = pneg %p81
        $region18: #{tpu_custom_call.1} parent=11 // pred_check_branch
          %179 = sbr.rel (%p177) target = $region20
        $region19: #{tpu_custom_call.1} parent=11 // pred_region
          _
        $region20: #{tpu_custom_call.1} parent=11 // pred_fallthru
          _
        // Predicated region
        $region21: #{tpu_custom_call.1} parent=11 // pred_check
          %p180 = pneg %p102
        $region22: #{tpu_custom_call.1} parent=11 // pred_check_branch
          %182 = sbr.rel (%p180) target = $region24
        $region23: #{tpu_custom_call.1} parent=11 // pred_region
          %s184 = ssub.s32 32768, 32768
          %185 = vsyncadd [#allocation5], %s184
          %s186 = sshll.u32 [#allocation4], 4
          %s187 = int_to_ptr.vmem [resolvable:$true] %s186
          %192 = dma.hbm_to_vmem [thread:$0]  %s3, 32768, %s187, [#allocation5], 512, 512, 32
        $region24: #{tpu_custom_call.1} parent=11 // pred_fallthru
          _
        // Predicated region
        $region25: #{tpu_custom_call.1} parent=11 // pred_check
          %p193 = pneg %p123
        $region26: #{tpu_custom_call.1} parent=11 // pred_check_branch
          %195 = sbr.rel (%p193) target = $region28
        $region27: #{tpu_custom_call.1} parent=11 // pred_region
          _
        $region28: #{tpu_custom_call.1} parent=11 // pred_fallthru
          _
      $region12: #{tpu_custom_call.1} parent=5 // pred_fallthru
        _
      %p196 = scmp.lt.s32.totalorder %s13, 2
      // Predicated region
      $region29: #{tpu_custom_call.1} parent=5 // pred_check
        %p197 = pneg %p196
      $region30: #{tpu_custom_call.1} parent=5 // pred_check_branch
        %199 = sbr.rel (%p197) target = $region32
      $region31: #{tpu_custom_call.1} parent=5 // pred_region
        // Predicated region
        $region33: #{tpu_custom_call.1} parent=31 // pred_check
          %p200 = pneg %p33
        $region34: #{tpu_custom_call.1} parent=31 // pred_check_branch
          %202 = sbr.rel (%p200) target = $region36
        $region35: #{tpu_custom_call.1} parent=31 // pred_region
          %p203 = scmp.lt.s32.totalorder %s13, 1
          %s204 = scalar_select %p203, %s13, 1
          %s205 = smul.addr %s204, 16
          %s206 = smul.addr %s205, 8
          %s207 = scalar_lea.vmem %s0, %s206
        $region36: #{tpu_custom_call.1} parent=31 // pred_fallthru
          _
      $region32: #{tpu_custom_call.1} parent=5 // pred_fallthru
        _
      %p208 = scmp.le.s32.totalorder 1, %s13
      %p209 = scmp.lt.s32.totalorder %s13, 3
      %p210 = pnand %p208, %p209
      %p211 = pneg %p210
      // Predicated region
      $region37: #{tpu_custom_call.1} parent=5 // pred_check
        _
      $region38: #{tpu_custom_call.1} parent=5 // pred_check_branch
        %213 = sbr.rel (%p210) target = $region40
      $region39: #{tpu_custom_call.1} parent=5 // pred_region
        %s214 = ssub.s32 %s13, 1
        // Predicated region
        $region41: #{tpu_custom_call.1} parent=39 // pred_check
          %p215 = pneg %p60
        $region42: #{tpu_custom_call.1} parent=39 // pred_check_branch
          %217 = sbr.rel (%p215) target = $region44
        $region43: #{tpu_custom_call.1} parent=39 // pred_region
          %218 = dma.done [#allocation3], 10240
        $region44: #{tpu_custom_call.1} parent=39 // pred_fallthru
          _
        // Predicated region
        $region45: #{tpu_custom_call.1} parent=39 // pred_check
          %p219 = pneg %p102
        $region46: #{tpu_custom_call.1} parent=39 // pred_check_branch
          %221 = sbr.rel (%p219) target = $region48
        $region47: #{tpu_custom_call.1} parent=39 // pred_region
          %222 = dma.done [#allocation5], 32768
        $region48: #{tpu_custom_call.1} parent=39 // pred_fallthru
          _
        %p223 = scmp.lt.s32.totalorder %s18, 1
        %s224 = scalar_select %p223, %s18, 1
        %s225 = smul.addr %s224, 16
        %s226 = smul.addr %s225, 8
        %s227 = scalar_lea.vmem %s0, %s226
        %p228 = pneg %p39
        %p229 = pneg %p36
        %p230 = pneg %p60
        %p231 = pneg %p57
        %p232 = pneg %p81
        %p233 = pneg %p78
        %p234 = pneg %p102
        %p235 = pneg %p99
        %p236 = pneg %p123
        %p237 = pneg %p120
        %p238 = pneg %p149
        %p239 = pneg %p146
        %p240 = scmp.lt.s32.totalorder %s18, 1
        %s241 = scalar_select %p240, %s18, 1
        %s242 = smul.addr %s241, 64
        %s243 = smul.addr %s242, 8
        %s244 = scalar_lea.vmem %s5, %s243
        %p245 = scmp.lt.s32.totalorder %s18, 1
        %s246 = scalar_select %p245, %s18, 1
        %s247 = smul.addr %s246, 16
        %s248 = smul.addr %s247, 8
        %s249 = scalar_lea.vmem %s0, %s248
        %p250 = scmp.lt.s32.totalorder %s18, 1
        %s251 = scalar_select %p250, %s18, 1
        %s252 = smul.addr %s251, 64
        %s253 = smul.addr %s252, 8
        %s254 = scalar_lea.vmem %s5, %s253
        %v255 = vld [vmem:[%s249] sm:$0xff]
        %v256 = vld [vmem:[%s249 + $0x8] sm:$0xff]
        %v257 = vld [vmem:[%s249 + $0x10] sm:$0xff]
        %v258 = vld [vmem:[%s249 + $0x18] sm:$0xff]
        %v259 = vld [vmem:[%s249 + $0x20] sm:$0xff]
        %v260 = vld [vmem:[%s249 + $0x28] sm:$0xff]
        %v261 = vld [vmem:[%s249 + $0x30] sm:$0xff]
        %v262 = vld [vmem:[%s249 + $0x38] sm:$0xff]
        %v263 = vld [vmem:[%s249 + $0x40] sm:$0xff]
        %v264 = vld [vmem:[%s249 + $0x48] sm:$0xff]
        %v265 = vld [vmem:[%s249 + $0x50] sm:$0xff]
        %v266 = vld [vmem:[%s249 + $0x58] sm:$0xff]
        %v267 = vld [vmem:[%s249 + $0x60] sm:$0xff]
        %v268 = vld [vmem:[%s249 + $0x68] sm:$0xff]
        %v269 = vld [vmem:[%s249 + $0x70] sm:$0xff]
        %v270 = vld [vmem:[%s249 + $0x78] sm:$0xff]
        %v271 = vld [vmem:[#allocation2] sm:$0xff]
        %v272 = vld [vmem:[#allocation2 + $0x8] sm:$0xff]
        %v273 = vld [vmem:[#allocation2 + $0x10] sm:$0xff]
        %v274 = vld [vmem:[#allocation2 + $0x18] sm:$0xff]
        %v275 = vld [vmem:[#allocation2 + $0x20] sm:$0xff]
        %v276 = vld [vmem:[#allocation2 + $0x28] sm:$0xff]
        %v277 = vld [vmem:[#allocation2 + $0x30] sm:$0xff]
        %v278 = vld [vmem:[#allocation2 + $0x38] sm:$0xff]
        %v279 = vld [vmem:[#allocation2 + $0x40] sm:$0xff]
        %v280 = vld [vmem:[#allocation2 + $0x48] sm:$0xff]
        %v281 = vld [vmem:[#allocation2 + $0x50] sm:$0xff]
        %v282 = vld [vmem:[#allocation2 + $0x58] sm:$0xff]
        %v283 = vld [vmem:[#allocation2 + $0x60] sm:$0x3f]
        %v284 = vld [vmem:[#allocation2 + $0x68] sm:$0x3f]
        %v285 = vld [vmem:[#allocation2 + $0x70] sm:$0x3f]
        %v286 = vld [vmem:[#allocation2 + $0x78] sm:$0x3f]
        %s287 = scalar_lea.vmem [#allocation2], 128
        %v288 = vld [vmem:[%s287] sm:$0xff]
        %v289 = vld [vmem:[%s287 + $0x8] sm:$0xff]
        %v290 = vld [vmem:[%s287 + $0x10] sm:$0xff]
        %v291 = vld [vmem:[%s287 + $0x18] sm:$0xff]
        %v292 = vld [vmem:[%s287 + $0x20] sm:$0xff]
        %v293 = vld [vmem:[%s287 + $0x28] sm:$0xff]
        %v294 = vld [vmem:[%s287 + $0x30] sm:$0xff]
        %v295 = vld [vmem:[%s287 + $0x38] sm:$0xff]
        %v296 = vld [vmem:[%s287 + $0x40] sm:$0xff]
        %v297 = vld [vmem:[%s287 + $0x48] sm:$0xff]
        %v298 = vld [vmem:[%s287 + $0x50] sm:$0xff]
        %v299 = vld [vmem:[%s287 + $0x58] sm:$0xff]
        %v300 = vld [vmem:[%s287 + $0x60] sm:$0x3f]
        %v301 = vld [vmem:[%s287 + $0x68] sm:$0x3f]
        %v302 = vld [vmem:[%s287 + $0x70] sm:$0x3f]
        %v303 = vld [vmem:[%s287 + $0x78] sm:$0x3f]
        %vm320 = vcmask 1046528
        %v321 = vrot.slane %v255, 1
        %v322 = vrot.slane %v256, 1
        %v323 = vsel %vm320, %v321, %v322
        %v324 = vrot.slane %v257, 1
        %v325 = vsel %vm320, %v322, %v324
        %v326 = vrot.slane %v258, 1
        %v327 = vsel %vm320, %v324, %v326
        %v328 = vrot.slane %v259, 1
        %v329 = vsel %vm320, %v326, %v328
        %v330 = vrot.slane %v260, 1
        %v331 = vsel %vm320, %v328, %v330
        %v332 = vrot.slane %v261, 1
        %v333 = vsel %vm320, %v330, %v332
        %v334 = vrot.slane %v262, 1
        %v335 = vsel %vm320, %v332, %v334
        %v336 = vrot.slane %v263, 1
        %v337 = vsel %vm320, %v334, %v336
        %v338 = vrot.slane %v264, 1
        %v339 = vsel %vm320, %v336, %v338
        %v340 = vrot.slane %v265, 1
        %v341 = vsel %vm320, %v338, %v340
        %v342 = vrot.slane %v266, 1
        %v343 = vsel %vm320, %v340, %v342
        %v344 = vrot.slane %v267, 1
        %v345 = vsel %vm320, %v342, %v344
        %v346 = vrot.slane %v268, 1
        %v347 = vsel %vm320, %v344, %v346
        %v348 = vrot.slane %v269, 1
        %v349 = vsel %vm320, %v346, %v348
        %v350 = vrot.slane %v270, 1
        %v351 = vsel %vm320, %v348, %v350
        %vm352 = vcmask 244736
        %v353 = vsel %vm352, %v323, 0
        %v355 = vsel %vm352, %v325, 0
        %v357 = vsel %vm352, %v327, 0
        %v359 = vsel %vm352, %v329, 0
        %v361 = vsel %vm352, %v331, 0
        %v363 = vsel %vm352, %v333, 0
        %v365 = vsel %vm352, %v335, 0
        %v367 = vsel %vm352, %v337, 0
        %v369 = vsel %vm352, %v339, 0
        %v371 = vsel %vm352, %v341, 0
        %v373 = vsel %vm352, %v343, 0
        %v375 = vsel %vm352, %v345, 0
        %v377 = vsel %vm352, %v347, 0
        %v379 = vsel %vm352, %v349, 0
        %v381 = vsel %vm352, %v351, 0
        %v383 = vsel %vm352, %v350, 0
        %vm385 = vcmask 1045504
        %v387 = vsel %vm385, %v300, 0
        %v390 = vsel %vm385, %v301, 0
        %v393 = vsel %vm385, %v302, 0
        %v396 = vsel %vm385, %v303, 0
        %398 = vmatprep.subr.mxu0 %v289
        %399 = vmatpush1.msra.mxu0 %v288
        %400 = vmatprep.subr.mxu0 %v293
        %401 = vmatpush1.msra.mxu0 %v292
        %402 = vmatprep.subr.mxu0 %v297
        %403 = vmatpush1.msra.mxu0 %v296
        %404 = vmatprep.subr.mxu0 %v390
        %405 = vmatpush1.msra.mxu0 %v387
        %406 = vmatprep.subr.mxu0 0.0
        %407 = vmatpush1.msra.mxu0 0.0
        %408 = vmatprep.subr.mxu0 0.0
        %409 = vmatpush1.msra.mxu0 0.0
        %410 = vmatprep.subr.mxu0 0.0
        %411 = vmatpush1.msra.mxu0 0.0
        %412 = vmatprep.subr.mxu0 0.0
        %413 = vmatpush1.msra.mxu0 0.0
        %414 = vmatprep.subr.mxu0 0.0
        %415 = vmatpush1.msra.mxu0 0.0
        %416 = vmatprep.subr.mxu0 0.0
        %417 = vmatpush1.msra.mxu0 0.0
        %418 = vmatprep.subr.mxu0 0.0
        %419 = vmatpush1.msra.mxu0 0.0
        %420 = vmatprep.subr.mxu0 0.0
        %421 = vmatpush1.msra.mxu0 0.0
        %422 = vmatprep.subr.mxu0 0.0
        %423 = vmatpush1.msra.mxu0 0.0
        %424 = vmatprep.subr.mxu0 0.0
        %425 = vmatpush1.msra.mxu0 0.0
        %426 = vmatprep.subr.mxu0 0.0
        %427 = vmatpush1.msra.mxu0 0.0
        %428 = vmatprep.subr.mxu0 0.0
        %429 = vmatpush1.msra.mxu0 0.0
        %430 = vmatprep.subr.mxu0 0.0
        %431 = vmatpush1.msra.mxu0 0.0
        %432 = vmatprep.subr.mxu0 0.0
        %433 = vmatpush1.msra.mxu0 0.0
        %434 = vmatprep.subr.mxu0 0.0
        %435 = vmatpush1.msra.mxu0 0.0
        %436 = vmatprep.subr.mxu0 0.0
        %437 = vmatpush1.msra.mxu0 0.0
        %438 = vmatprep.subr.mxu0 0.0
        %439 = vmatpush1.msra.mxu0 0.0
        %440 = vmatprep.subr.mxu0 0.0
        %441 = vmatpush1.msra.mxu0 0.0
        %442 = vmatprep.subr.mxu0 0.0
        %443 = vmatpush1.msra.mxu0 0.0
        %444 = vmatprep.subr.mxu0 0.0
        %445 = vmatpush1.msra.mxu0 0.0
        %446 = vmatprep.subr.mxu0 0.0
        %447 = vmatpush1.msra.mxu0 0.0
        %448 = vmatprep.subr.mxu0 0.0
        %449 = vmatpush1.msra.mxu0 0.0
        %450 = vmatprep.subr.mxu0 0.0
        %451 = vmatpush1.msra.mxu0 0.0
        %452 = vmatprep.subr.mxu0 0.0
        %453 = vmatpush1.msra.mxu0 0.0
        %454 = vmatprep.subr.mxu0 0.0
        %455 = vmatpush1.msra.mxu0 0.0
        %456 = vmatprep.subr.mxu0 0.0
        %457 = vmatpush1.msra.mxu0 0.0
        %458 = vmatprep.subr.mxu0 0.0
        %459 = vmatpush1.msra.mxu0 0.0
        %460 = vmatprep.subr.mxu0 0.0
        %461 = vmatpush1.msra.mxu0 0.0
        %462 = vmatprep.mubr.f32.mxu0 0.0
        %463 = vmatmul.mubr.f32.gmra.mrb[0].mxu0 %v353
        %v464 = vpop.f32.mrb[0].mxu0
        %v465 = vadd.f32 0.0, %v464
        %v466 = vpop.f32.mrb[0].mxu0
        %v467 = vadd.f32 0.0, %v466
        %468 = vmatprep.mubr.f32.mxu0 0.0
        %469 = vmatmul.mubr.f32.gmra.mrb[0].mxu0 %v355
        %v470 = vpop.f32.mrb[0].mxu0
        %v471 = vadd.f32 0.0, %v470
        %v472 = vpop.f32.mrb[0].mxu0
        %v473 = vadd.f32 0.0, %v472
        %474 = vmatprep.mubr.f32.mxu0 0.0
        %475 = vmatmul.mubr.f32.gmra.mrb[0].mxu0 %v357
        %v476 = vpop.f32.mrb[0].mxu0
        %v477 = vadd.f32 0.0, %v476
        %v478 = vpop.f32.mrb[0].mxu0
        %v479 = vadd.f32 0.0, %v478
        %480 = vmatprep.mubr.f32.mxu0 0.0
        %481 = vmatmul.mubr.f32.gmra.mrb[0].mxu0 %v359
        %v482 = vpop.f32.mrb[0].mxu0
        %v483 = vadd.f32 0.0, %v482
        %v484 = vpop.f32.mrb[0].mxu0
        %v485 = vadd.f32 0.0, %v484
        %486 = vmatprep.mubr.f32.mxu0 0.0
        %487 = vmatmul.mubr.f32.gmra.mrb[0].mxu0 %v361
        %v488 = vpop.f32.mrb[0].mxu0
        %v489 = vadd.f32 0.0, %v488
        %v490 = vpop.f32.mrb[0].mxu0
        %v491 = vadd.f32 0.0, %v490
        %492 = vmatprep.mubr.f32.mxu0 0.0
        %493 = vmatmul.mubr.f32.gmra.mrb[0].mxu0 %v363
        %v494 = vpop.f32.mrb[0].mxu0
        %v495 = vadd.f32 0.0, %v494
        %v496 = vpop.f32.mrb[0].mxu0
        %v497 = vadd.f32 0.0, %v496
        %498 = vmatprep.mubr.f32.mxu0 0.0
        %499 = vmatmul.mubr.f32.gmra.mrb[0].mxu0 %v365
        %v500 = vpop.f32.mrb[0].mxu0
        %v501 = vadd.f32 0.0, %v500
        %v502 = vpop.f32.mrb[0].mxu0
        %v503 = vadd.f32 0.0, %v502
        %504 = vmatprep.mubr.f32.mxu0 0.0
        %505 = vmatmul.mubr.f32.gmra.mrb[0].mxu0 %v367
        %v506 = vpop.f32.mrb[0].mxu0
        %v507 = vadd.f32 0.0, %v506
        %v508 = vpop.f32.mrb[0].mxu0
        %v509 = vadd.f32 0.0, %v508
        %510 = vmatprep.mubr.f32.mxu0 0.0
        %511 = vmatmul.mubr.f32.gmra.mrb[0].mxu0 %v369
        %v512 = vpop.f32.mrb[0].mxu0
        %v513 = vadd.f32 0.0, %v512
        %v514 = vpop.f32.mrb[0].mxu0
        %v515 = vadd.f32 0.0, %v514
        %516 = vmatprep.mubr.f32.mxu0 0.0
        %517 = vmatmul.mubr.f32.gmra.mrb[0].mxu0 %v371
        %v518 = vpop.f32.mrb[0].mxu0
        %v519 = vadd.f32 0.0, %v518
        %v520 = vpop.f32.mrb[0].mxu0
        %v521 = vadd.f32 0.0, %v520
        %522 = vmatprep.mubr.f32.mxu0 0.0
        %523 = vmatmul.mubr.f32.gmra.mrb[0].mxu0 %v373
        %v524 = vpop.f32.mrb[0].mxu0
        %v525 = vadd.f32 0.0, %v524
        %v526 = vpop.f32.mrb[0].mxu0
        %v527 = vadd.f32 0.0, %v526
        %528 = vmatprep.mubr.f32.mxu0 0.0
        %529 = vmatmul.mubr.f32.gmra.mrb[0].mxu0 %v375
        %v530 = vpop.f32.mrb[0].mxu0
        %v531 = vadd.f32 0.0, %v530
        %v532 = vpop.f32.mrb[0].mxu0
        %v533 = vadd.f32 0.0, %v532
        %534 = vmatprep.mubr.f32.mxu0 0.0
        %535 = vmatmul.mubr.f32.gmra.mrb[0].mxu0 %v377
        %v536 = vpop.f32.mrb[0].mxu0
        %v537 = vadd.f32 0.0, %v536
        %v538 = vpop.f32.mrb[0].mxu0
        %v539 = vadd.f32 0.0, %v538
        %540 = vmatprep.mubr.f32.mxu0 0.0
        %541 = vmatmul.mubr.f32.gmra.mrb[0].mxu0 %v379
        %v542 = vpop.f32.mrb[0].mxu0
        %v543 = vadd.f32 0.0, %v542
        %v544 = vpop.f32.mrb[0].mxu0
        %v545 = vadd.f32 0.0, %v544
        %546 = vmatprep.mubr.f32.mxu0 0.0
        %547 = vmatmul.mubr.f32.gmra.mrb[0].mxu0 %v381
        %v548 = vpop.f32.mrb[0].mxu0
        %v549 = vadd.f32 0.0, %v548
        %v550 = vpop.f32.mrb[0].mxu0
        %v551 = vadd.f32 0.0, %v550
        %552 = vmatprep.mubr.f32.mxu0 0.0
        %553 = vmatmul.mubr.f32.gmra.mrb[0].mxu0 %v383
        %v554 = vpop.f32.mrb[0].mxu0
        %v555 = vadd.f32 0.0, %v554
        %v556 = vpop.f32.mrb[0].mxu0
        %v557 = vadd.f32 0.0, %v556
        %558 = vdwg.mxu0
        %559 = vmatprep.subr.mxu0 %v291
        %560 = vmatpush1.msra.mxu0 %v290
        %561 = vmatprep.subr.mxu0 %v295
        %562 = vmatpush1.msra.mxu0 %v294
        %563 = vmatprep.subr.mxu0 %v299
        %564 = vmatpush1.msra.mxu0 %v298
        %565 = vmatprep.subr.mxu0 %v396
        %566 = vmatpush1.msra.mxu0 %v393
        %567 = vmatprep.subr.mxu0 0.0
        %568 = vmatpush1.msra.mxu0 0.0
        %569 = vmatprep.subr.mxu0 0.0
        %570 = vmatpush1.msra.mxu0 0.0
        %571 = vmatprep.subr.mxu0 0.0
        %572 = vmatpush1.msra.mxu0 0.0
        %573 = vmatprep.subr.mxu0 0.0
        %574 = vmatpush1.msra.mxu0 0.0
        %575 = vmatprep.subr.mxu0 0.0
        %576 = vmatpush1.msra.mxu0 0.0
        %577 = vmatprep.subr.mxu0 0.0
        %578 = vmatpush1.msra.mxu0 0.0
        %579 = vmatprep.subr.mxu0 0.0
        %580 = vmatpush1.msra.mxu0 0.0
        %581 = vmatprep.subr.mxu0 0.0
        %582 = vmatpush1.msra.mxu0 0.0
        %583 = vmatprep.subr.mxu0 0.0
        %584 = vmatpush1.msra.mxu0 0.0
        %585 = vmatprep.subr.mxu0 0.0
        %586 = vmatpush1.msra.mxu0 0.0
        %587 = vmatprep.subr.mxu0 0.0
        %588 = vmatpush1.msra.mxu0 0.0
        %589 = vmatprep.subr.mxu0 0.0
        %590 = vmatpush1.msra.mxu0 0.0
        %591 = vmatprep.subr.mxu0 0.0
        %592 = vmatpush1.msra.mxu0 0.0
        %593 = vmatprep.subr.mxu0 0.0
        %594 = vmatpush1.msra.mxu0 0.0
        %595 = vmatprep.subr.mxu0 0.0
        %596 = vmatpush1.msra.mxu0 0.0
        %597 = vmatprep.subr.mxu0 0.0
        %598 = vmatpush1.msra.mxu0 0.0
        %599 = vmatprep.subr.mxu0 0.0
        %600 = vmatpush1.msra.mxu0 0.0
        %601 = vmatprep.subr.mxu0 0.0
        %602 = vmatpush1.msra.mxu0 0.0
        %603 = vmatprep.subr.mxu0 0.0
        %604 = vmatpush1.msra.mxu0 0.0
        %605 = vmatprep.subr.mxu0 0.0
        %606 = vmatpush1.msra.mxu0 0.0
        %607 = vmatprep.subr.mxu0 0.0
        %608 = vmatpush1.msra.mxu0 0.0
        %609 = vmatprep.subr.mxu0 0.0
        %610 = vmatpush1.msra.mxu0 0.0
        %611 = vmatprep.subr.mxu0 0.0
        %612 = vmatpush1.msra.mxu0 0.0
        %613 = vmatprep.subr.mxu0 0.0
        %614 = vmatpush1.msra.mxu0 0.0
        %615 = vmatprep.subr.mxu0 0.0
        %616 = vmatpush1.msra.mxu0 0.0
        %617 = vmatprep.subr.mxu0 0.0
        %618 = vmatpush1.msra.mxu0 0.0
        %619 = vmatprep.subr.mxu0 0.0
        %620 = vmatpush1.msra.mxu0 0.0
        %621 = vmatprep.subr.mxu0 0.0
        %622 = vmatpush1.msra.mxu0 0.0
        %623 = vmatprep.mubr.f32.mxu0 0.0
        %624 = vmatmul.mubr.f32.gmra.mrb[0].mxu0 %v353
        %v625 = vpop.f32.mrb[0].mxu0
        %v626 = vadd.f32 0.0, %v625
        %v627 = vpop.f32.mrb[0].mxu0
        %v628 = vadd.f32 0.0, %v627
        %629 = vmatprep.mubr.f32.mxu0 0.0
        %630 = vmatmul.mubr.f32.gmra.mrb[0].mxu0 %v355
        %v631 = vpop.f32.mrb[0].mxu0
        %v632 = vadd.f32 0.0, %v631
        %v633 = vpop.f32.mrb[0].mxu0
        %v634 = vadd.f32 0.0, %v633
        %635 = vmatprep.mubr.f32.mxu0 0.0
        %636 = vmatmul.mubr.f32.gmra.mrb[0].mxu0 %v357
        %v637 = vpop.f32.mrb[0].mxu0
        %v638 = vadd.f32 0.0, %v637
        %v639 = vpop.f32.mrb[0].mxu0
        %v640 = vadd.f32 0.0, %v639
        %641 = vmatprep.mubr.f32.mxu0 0.0
        %642 = vmatmul.mubr.f32.gmra.mrb[0].mxu0 %v359
        %v643 = vpop.f32.mrb[0].mxu0
        %v644 = vadd.f32 0.0, %v643
        %v645 = vpop.f32.mrb[0].mxu0
        %v646 = vadd.f32 0.0, %v645
        %647 = vmatprep.mubr.f32.mxu0 0.0
        %648 = vmatmul.mubr.f32.gmra.mrb[0].mxu0 %v361
        %v649 = vpop.f32.mrb[0].mxu0
        %v650 = vadd.f32 0.0, %v649
        %v651 = vpop.f32.mrb[0].mxu0
        %v652 = vadd.f32 0.0, %v651
        %653 = vmatprep.mubr.f32.mxu0 0.0
        %654 = vmatmul.mubr.f32.gmra.mrb[0].mxu0 %v363
        %v655 = vpop.f32.mrb[0].mxu0
        %v656 = vadd.f32 0.0, %v655
        %v657 = vpop.f32.mrb[0].mxu0
        %v658 = vadd.f32 0.0, %v657
        %659 = vmatprep.mubr.f32.mxu0 0.0
        %660 = vmatmul.mubr.f32.gmra.mrb[0].mxu0 %v365
        %v661 = vpop.f32.mrb[0].mxu0
        %v662 = vadd.f32 0.0, %v661
        %v663 = vpop.f32.mrb[0].mxu0
        %v664 = vadd.f32 0.0, %v663
        %665 = vmatprep.mubr.f32.mxu0 0.0
        %666 = vmatmul.mubr.f32.gmra.mrb[0].mxu0 %v367
        %v667 = vpop.f32.mrb[0].mxu0
        %v668 = vadd.f32 0.0, %v667
        %v669 = vpop.f32.mrb[0].mxu0
        %v670 = vadd.f32 0.0, %v669
        %671 = vmatprep.mubr.f32.mxu0 0.0
        %672 = vmatmul.mubr.f32.gmra.mrb[0].mxu0 %v369
        %v673 = vpop.f32.mrb[0].mxu0
        %v674 = vadd.f32 0.0, %v673
        %v675 = vpop.f32.mrb[0].mxu0
        %v676 = vadd.f32 0.0, %v675
        %677 = vmatprep.mubr.f32.mxu0 0.0
        %678 = vmatmul.mubr.f32.gmra.mrb[0].mxu0 %v371
        %v679 = vpop.f32.mrb[0].mxu0
        %v680 = vadd.f32 0.0, %v679
        %v681 = vpop.f32.mrb[0].mxu0
        %v682 = vadd.f32 0.0, %v681
        %683 = vmatprep.mubr.f32.mxu0 0.0
        %684 = vmatmul.mubr.f32.gmra.mrb[0].mxu0 %v373
        %v685 = vpop.f32.mrb[0].mxu0
        %v686 = vadd.f32 0.0, %v685
        %v687 = vpop.f32.mrb[0].mxu0
        %v688 = vadd.f32 0.0, %v687
        %689 = vmatprep.mubr.f32.mxu0 0.0
        %690 = vmatmul.mubr.f32.gmra.mrb[0].mxu0 %v375
        %v691 = vpop.f32.mrb[0].mxu0
        %v692 = vadd.f32 0.0, %v691
        %v693 = vpop.f32.mrb[0].mxu0
        %v694 = vadd.f32 0.0, %v693
        %695 = vmatprep.mubr.f32.mxu0 0.0
        %696 = vmatmul.mubr.f32.gmra.mrb[0].mxu0 %v377
        %v697 = vpop.f32.mrb[0].mxu0
        %v698 = vadd.f32 0.0, %v697
        %v699 = vpop.f32.mrb[0].mxu0
        %v700 = vadd.f32 0.0, %v699
        %701 = vmatprep.mubr.f32.mxu0 0.0
        %702 = vmatmul.mubr.f32.gmra.mrb[0].mxu0 %v379
        %v703 = vpop.f32.mrb[0].mxu0
        %v704 = vadd.f32 0.0, %v703
        %v705 = vpop.f32.mrb[0].mxu0
        %v706 = vadd.f32 0.0, %v705
        %707 = vmatprep.mubr.f32.mxu0 0.0
        %708 = vmatmul.mubr.f32.gmra.mrb[0].mxu0 %v381
        %v709 = vpop.f32.mrb[0].mxu0
        %v710 = vadd.f32 0.0, %v709
        %v711 = vpop.f32.mrb[0].mxu0
        %v712 = vadd.f32 0.0, %v711
        %713 = vmatprep.mubr.f32.mxu0 0.0
        %714 = vmatmul.mubr.f32.gmra.mrb[0].mxu0 %v383
        %v715 = vpop.f32.mrb[0].mxu0
        %v716 = vadd.f32 0.0, %v715
        %v717 = vpop.f32.mrb[0].mxu0
        %v718 = vadd.f32 0.0, %v717
        %719 = vdwg.mxu0
        %v720 = vsel %vm352, %v255, 0
        %v722 = vsel %vm352, %v256, 0
        %v724 = vsel %vm352, %v257, 0
        %v726 = vsel %vm352, %v258, 0
        %v728 = vsel %vm352, %v259, 0
        %v730 = vsel %vm352, %v260, 0
        %v732 = vsel %vm352, %v261, 0
        %v734 = vsel %vm352, %v262, 0
        %v736 = vsel %vm352, %v263, 0
        %v738 = vsel %vm352, %v264, 0
        %v740 = vsel %vm352, %v265, 0
        %v742 = vsel %vm352, %v266, 0
        %v744 = vsel %vm352, %v267, 0
        %v746 = vsel %vm352, %v268, 0
        %v748 = vsel %vm352, %v269, 0
        %v750 = vsel %vm352, %v270, 0
        %v753 = vsel %vm385, %v283, 0
        %v756 = vsel %vm385, %v284, 0
        %v759 = vsel %vm385, %v285, 0
        %v762 = vsel %vm385, %v286, 0
        %764 = vmatprep.subr.mxu0 %v272
        %765 = vmatpush1.msra.mxu0 %v271
        %766 = vmatprep.subr.mxu0 %v276
        %767 = vmatpush1.msra.mxu0 %v275
        %768 = vmatprep.subr.mxu0 %v280
        %769 = vmatpush1.msra.mxu0 %v279
        %770 = vmatprep.subr.mxu0 %v756
        %771 = vmatpush1.msra.mxu0 %v753
        %772 = vmatprep.subr.mxu0 0.0
        %773 = vmatpush1.msra.mxu0 0.0
        %774 = vmatprep.subr.mxu0 0.0
        %775 = vmatpush1.msra.mxu0 0.0
        %776 = vmatprep.subr.mxu0 0.0
        %777 = vmatpush1.msra.mxu0 0.0
        %778 = vmatprep.subr.mxu0 0.0
        %779 = vmatpush1.msra.mxu0 0.0
        %780 = vmatprep.subr.mxu0 0.0
        %781 = vmatpush1.msra.mxu0 0.0
        %782 = vmatprep.subr.mxu0 0.0
        %783 = vmatpush1.msra.mxu0 0.0
        %784 = vmatprep.subr.mxu0 0.0
        %785 = vmatpush1.msra.mxu0 0.0
        %786 = vmatprep.subr.mxu0 0.0
        %787 = vmatpush1.msra.mxu0 0.0
        %788 = vmatprep.subr.mxu0 0.0
        %789 = vmatpush1.msra.mxu0 0.0
        %790 = vmatprep.subr.mxu0 0.0
        %791 = vmatpush1.msra.mxu0 0.0
        %792 = vmatprep.subr.mxu0 0.0
        %793 = vmatpush1.msra.mxu0 0.0
        %794 = vmatprep.subr.mxu0 0.0
        %795 = vmatpush1.msra.mxu0 0.0
        %796 = vmatprep.subr.mxu0 0.0
        %797 = vmatpush1.msra.mxu0 0.0
        %798 = vmatprep.subr.mxu0 0.0
        %799 = vmatpush1.msra.mxu0 0.0
        %800 = vmatprep.subr.mxu0 0.0
        %801 = vmatpush1.msra.mxu0 0.0
        %802 = vmatprep.subr.mxu0 0.0
        %803 = vmatpush1.msra.mxu0 0.0
        %804 = vmatprep.subr.mxu0 0.0
        %805 = vmatpush1.msra.mxu0 0.0
        %806 = vmatprep.subr.mxu0 0.0
        %807 = vmatpush1.msra.mxu0 0.0
        %808 = vmatprep.subr.mxu0 0.0
        %809 = vmatpush1.msra.mxu0 0.0
        %810 = vmatprep.subr.mxu0 0.0
        %811 = vmatpush1.msra.mxu0 0.0
        %812 = vmatprep.subr.mxu0 0.0
        %813 = vmatpush1.msra.mxu0 0.0
        %814 = vmatprep.subr.mxu0 0.0
        %815 = vmatpush1.msra.mxu0 0.0
        %816 = vmatprep.subr.mxu0 0.0
        %817 = vmatpush1.msra.mxu0 0.0
        %818 = vmatprep.subr.mxu0 0.0
        %819 = vmatpush1.msra.mxu0 0.0
        %820 = vmatprep.subr.mxu0 0.0
        %821 = vmatpush1.msra.mxu0 0.0
        %822 = vmatprep.subr.mxu0 0.0
        %823 = vmatpush1.msra.mxu0 0.0
        %824 = vmatprep.subr.mxu0 0.0
        %825 = vmatpush1.msra.mxu0 0.0
        %826 = vmatprep.subr.mxu0 0.0
        %827 = vmatpush1.msra.mxu0 0.0
        %828 = vmatprep.mubr.f32.mxu0 0.0
        %829 = vmatmul.mubr.f32.gmra.mrb[0].mxu0 %v720
        %v830 = vpop.f32.mrb[0].mxu0
        %v831 = vadd.f32 %v465, %v830
        %v832 = vpop.f32.mrb[0].mxu0
        %v833 = vadd.f32 %v467, %v832
        %834 = vmatprep.mubr.f32.mxu0 0.0
        %835 = vmatmul.mubr.f32.gmra.mrb[0].mxu0 %v722
        %v836 = vpop.f32.mrb[0].mxu0
        %v837 = vadd.f32 %v471, %v836
        %v838 = vpop.f32.mrb[0].mxu0
        %v839 = vadd.f32 %v473, %v838
        %840 = vmatprep.mubr.f32.mxu0 0.0
        %841 = vmatmul.mubr.f32.gmra.mrb[0].mxu0 %v724
        %v842 = vpop.f32.mrb[0].mxu0
        %v843 = vadd.f32 %v477, %v842
        %v844 = vpop.f32.mrb[0].mxu0
        %v845 = vadd.f32 %v479, %v844
        %846 = vmatprep.mubr.f32.mxu0 0.0
        %847 = vmatmul.mubr.f32.gmra.mrb[0].mxu0 %v726
        %v848 = vpop.f32.mrb[0].mxu0
        %v849 = vadd.f32 %v483, %v848
        %v850 = vpop.f32.mrb[0].mxu0
        %v851 = vadd.f32 %v485, %v850
        %852 = vmatprep.mubr.f32.mxu0 0.0
        %853 = vmatmul.mubr.f32.gmra.mrb[0].mxu0 %v728
        %v854 = vpop.f32.mrb[0].mxu0
        %v855 = vadd.f32 %v489, %v854
        %v856 = vpop.f32.mrb[0].mxu0
        %v857 = vadd.f32 %v491, %v856
        %858 = vmatprep.mubr.f32.mxu0 0.0
        %859 = vmatmul.mubr.f32.gmra.mrb[0].mxu0 %v730
        %v860 = vpop.f32.mrb[0].mxu0
        %v861 = vadd.f32 %v495, %v860
        %v862 = vpop.f32.mrb[0].mxu0
        %v863 = vadd.f32 %v497, %v862
        %864 = vmatprep.mubr.f32.mxu0 0.0
        %865 = vmatmul.mubr.f32.gmra.mrb[0].mxu0 %v732
        %v866 = vpop.f32.mrb[0].mxu0
        %v867 = vadd.f32 %v501, %v866
        %v868 = vpop.f32.mrb[0].mxu0
        %v869 = vadd.f32 %v503, %v868
        %870 = vmatprep.mubr.f32.mxu0 0.0
        %871 = vmatmul.mubr.f32.gmra.mrb[0].mxu0 %v734
        %v872 = vpop.f32.mrb[0].mxu0
        %v873 = vadd.f32 %v507, %v872
        %v874 = vpop.f32.mrb[0].mxu0
        %v875 = vadd.f32 %v509, %v874
        %876 = vmatprep.mubr.f32.mxu0 0.0
        %877 = vmatmul.mubr.f32.gmra.mrb[0].mxu0 %v736
        %v878 = vpop.f32.mrb[0].mxu0
        %v879 = vadd.f32 %v513, %v878
        %v880 = vpop.f32.mrb[0].mxu0
        %v881 = vadd.f32 %v515, %v880
        %882 = vmatprep.mubr.f32.mxu0 0.0
        %883 = vmatmul.mubr.f32.gmra.mrb[0].mxu0 %v738
        %v884 = vpop.f32.mrb[0].mxu0
        %v885 = vadd.f32 %v519, %v884
        %v886 = vpop.f32.mrb[0].mxu0
        %v887 = vadd.f32 %v521, %v886
        %888 = vmatprep.mubr.f32.mxu0 0.0
        %889 = vmatmul.mubr.f32.gmra.mrb[0].mxu0 %v740
        %v890 = vpop.f32.mrb[0].mxu0
        %v891 = vadd.f32 %v525, %v890
        %v892 = vpop.f32.mrb[0].mxu0
        %v893 = vadd.f32 %v527, %v892
        %894 = vmatprep.mubr.f32.mxu0 0.0
        %895 = vmatmul.mubr.f32.gmra.mrb[0].mxu0 %v742
        %v896 = vpop.f32.mrb[0].mxu0
        %v897 = vadd.f32 %v531, %v896
        %v898 = vpop.f32.mrb[0].mxu0
        %v899 = vadd.f32 %v533, %v898
        %900 = vmatprep.mubr.f32.mxu0 0.0
        %901 = vmatmul.mubr.f32.gmra.mrb[0].mxu0 %v744
        %v902 = vpop.f32.mrb[0].mxu0
        %v903 = vadd.f32 %v537, %v902
        %v904 = vpop.f32.mrb[0].mxu0
        %v905 = vadd.f32 %v539, %v904
        %906 = vmatprep.mubr.f32.mxu0 0.0
        %907 = vmatmul.mubr.f32.gmra.mrb[0].mxu0 %v746
        %v908 = vpop.f32.mrb[0].mxu0
        %v909 = vadd.f32 %v543, %v908
        %v910 = vpop.f32.mrb[0].mxu0
        %v911 = vadd.f32 %v545, %v910
        %912 = vmatprep.mubr.f32.mxu0 0.0
        %913 = vmatmul.mubr.f32.gmra.mrb[0].mxu0 %v748
        %v914 = vpop.f32.mrb[0].mxu0
        %v915 = vadd.f32 %v549, %v914
        %v916 = vpop.f32.mrb[0].mxu0
        %v917 = vadd.f32 %v551, %v916
        %918 = vmatprep.mubr.f32.mxu0 0.0
        %919 = vmatmul.mubr.f32.gmra.mrb[0].mxu0 %v750
        %v920 = vpop.f32.mrb[0].mxu0
        %v921 = vadd.f32 %v555, %v920
        %v922 = vpop.f32.mrb[0].mxu0
        %v923 = vadd.f32 %v557, %v922
        %924 = vdwg.mxu0
        %925 = vmatprep.subr.mxu0 %v274
        %926 = vmatpush1.msra.mxu0 %v273
        %927 = vmatprep.subr.mxu0 %v278
        %928 = vmatpush1.msra.mxu0 %v277
        %929 = vmatprep.subr.mxu0 %v282
        %930 = vmatpush1.msra.mxu0 %v281
        %931 = vmatprep.subr.mxu0 %v762
        %932 = vmatpush1.msra.mxu0 %v759
        %933 = vmatprep.subr.mxu0 0.0
        %934 = vmatpush1.msra.mxu0 0.0
        %935 = vmatprep.subr.mxu0 0.0
        %936 = vmatpush1.msra.mxu0 0.0
        %937 = vmatprep.subr.mxu0 0.0
        %938 = vmatpush1.msra.mxu0 0.0
        %939 = vmatprep.subr.mxu0 0.0
        %940 = vmatpush1.msra.mxu0 0.0
        %941 = vmatprep.subr.mxu0 0.0
        %942 = vmatpush1.msra.mxu0 0.0
        %943 = vmatprep.subr.mxu0 0.0
        %944 = vmatpush1.msra.mxu0 0.0
        %945 = vmatprep.subr.mxu0 0.0
        %946 = vmatpush1.msra.mxu0 0.0
        %947 = vmatprep.subr.mxu0 0.0
        %948 = vmatpush1.msra.mxu0 0.0
        %949 = vmatprep.subr.mxu0 0.0
        %950 = vmatpush1.msra.mxu0 0.0
        %951 = vmatprep.subr.mxu0 0.0
        %952 = vmatpush1.msra.mxu0 0.0
        %953 = vmatprep.subr.mxu0 0.0
        %954 = vmatpush1.msra.mxu0 0.0
        %955 = vmatprep.subr.mxu0 0.0
        %956 = vmatpush1.msra.mxu0 0.0
        %957 = vmatprep.subr.mxu0 0.0
        %958 = vmatpush1.msra.mxu0 0.0
        %959 = vmatprep.subr.mxu0 0.0
        %960 = vmatpush1.msra.mxu0 0.0
        %961 = vmatprep.subr.mxu0 0.0
        %962 = vmatpush1.msra.mxu0 0.0
        %963 = vmatprep.subr.mxu0 0.0
        %964 = vmatpush1.msra.mxu0 0.0
        %965 = vmatprep.subr.mxu0 0.0
        %966 = vmatpush1.msra.mxu0 0.0
        %967 = vmatprep.subr.mxu0 0.0
        %968 = vmatpush1.msra.mxu0 0.0
        %969 = vmatprep.subr.mxu0 0.0
        %970 = vmatpush1.msra.mxu0 0.0
        %971 = vmatprep.subr.mxu0 0.0
        %972 = vmatpush1.msra.mxu0 0.0
        %973 = vmatprep.subr.mxu0 0.0
        %974 = vmatpush1.msra.mxu0 0.0
        %975 = vmatprep.subr.mxu0 0.0
        %976 = vmatpush1.msra.mxu0 0.0
        %977 = vmatprep.subr.mxu0 0.0
        %978 = vmatpush1.msra.mxu0 0.0
        %979 = vmatprep.subr.mxu0 0.0
        %980 = vmatpush1.msra.mxu0 0.0
        %981 = vmatprep.subr.mxu0 0.0
        %982 = vmatpush1.msra.mxu0 0.0
        %983 = vmatprep.subr.mxu0 0.0
        %984 = vmatpush1.msra.mxu0 0.0
        %985 = vmatprep.subr.mxu0 0.0
        %986 = vmatpush1.msra.mxu0 0.0
        %987 = vmatprep.subr.mxu0 0.0
        %988 = vmatpush1.msra.mxu0 0.0
        %989 = vmatprep.mubr.f32.mxu0 0.0
        %990 = vmatmul.mubr.f32.gmra.mrb[0].mxu0 %v720
        %v991 = vpop.f32.mrb[0].mxu0
        %v992 = vadd.f32 %v626, %v991
        %v993 = vpop.f32.mrb[0].mxu0
        %v994 = vadd.f32 %v628, %v993
        %995 = vmatprep.mubr.f32.mxu0 0.0
        %996 = vmatmul.mubr.f32.gmra.mrb[0].mxu0 %v722
        %v997 = vpop.f32.mrb[0].mxu0
        %v998 = vadd.f32 %v632, %v997
        %v999 = vpop.f32.mrb[0].mxu0
        %v1000 = vadd.f32 %v634, %v999
        %1001 = vmatprep.mubr.f32.mxu0 0.0
        %1002 = vmatmul.mubr.f32.gmra.mrb[0].mxu0 %v724
        %v1003 = vpop.f32.mrb[0].mxu0
        %v1004 = vadd.f32 %v638, %v1003
        %v1005 = vpop.f32.mrb[0].mxu0
        %v1006 = vadd.f32 %v640, %v1005
        %1007 = vmatprep.mubr.f32.mxu0 0.0
        %1008 = vmatmul.mubr.f32.gmra.mrb[0].mxu0 %v726
        %v1009 = vpop.f32.mrb[0].mxu0
        %v1010 = vadd.f32 %v644, %v1009
        %v1011 = vpop.f32.mrb[0].mxu0
        %v1012 = vadd.f32 %v646, %v1011
        %1013 = vmatprep.mubr.f32.mxu0 0.0
        %1014 = vmatmul.mubr.f32.gmra.mrb[0].mxu0 %v728
        %v1015 = vpop.f32.mrb[0].mxu0
        %v1016 = vadd.f32 %v650, %v1015
        %v1017 = vpop.f32.mrb[0].mxu0
        %v1018 = vadd.f32 %v652, %v1017
        %1019 = vmatprep.mubr.f32.mxu0 0.0
        %1020 = vmatmul.mubr.f32.gmra.mrb[0].mxu0 %v730
        %v1021 = vpop.f32.mrb[0].mxu0
        %v1022 = vadd.f32 %v656, %v1021
        %v1023 = vpop.f32.mrb[0].mxu0
        %v1024 = vadd.f32 %v658, %v1023
        %1025 = vmatprep.mubr.f32.mxu0 0.0
        %1026 = vmatmul.mubr.f32.gmra.mrb[0].mxu0 %v732
        %v1027 = vpop.f32.mrb[0].mxu0
        %v1028 = vadd.f32 %v662, %v1027
        %v1029 = vpop.f32.mrb[0].mxu0
        %v1030 = vadd.f32 %v664, %v1029
        %1031 = vmatprep.mubr.f32.mxu0 0.0
        %1032 = vmatmul.mubr.f32.gmra.mrb[0].mxu0 %v734
        %v1033 = vpop.f32.mrb[0].mxu0
        %v1034 = vadd.f32 %v668, %v1033
        %v1035 = vpop.f32.mrb[0].mxu0
        %v1036 = vadd.f32 %v670, %v1035
        %1037 = vmatprep.mubr.f32.mxu0 0.0
        %1038 = vmatmul.mubr.f32.gmra.mrb[0].mxu0 %v736
        %v1039 = vpop.f32.mrb[0].mxu0
        %v1040 = vadd.f32 %v674, %v1039
        %v1041 = vpop.f32.mrb[0].mxu0
        %v1042 = vadd.f32 %v676, %v1041
        %1043 = vmatprep.mubr.f32.mxu0 0.0
        %1044 = vmatmul.mubr.f32.gmra.mrb[0].mxu0 %v738
        %v1045 = vpop.f32.mrb[0].mxu0
        %v1046 = vadd.f32 %v680, %v1045
        %v1047 = vpop.f32.mrb[0].mxu0
        %v1048 = vadd.f32 %v682, %v1047
        %1049 = vmatprep.mubr.f32.mxu0 0.0
        %1050 = vmatmul.mubr.f32.gmra.mrb[0].mxu0 %v740
        %v1051 = vpop.f32.mrb[0].mxu0
        %v1052 = vadd.f32 %v686, %v1051
        %v1053 = vpop.f32.mrb[0].mxu0
        %v1054 = vadd.f32 %v688, %v1053
        %1055 = vmatprep.mubr.f32.mxu0 0.0
        %1056 = vmatmul.mubr.f32.gmra.mrb[0].mxu0 %v742
        %v1057 = vpop.f32.mrb[0].mxu0
        %v1058 = vadd.f32 %v692, %v1057
        %v1059 = vpop.f32.mrb[0].mxu0
        %v1060 = vadd.f32 %v694, %v1059
        %1061 = vmatprep.mubr.f32.mxu0 0.0
        %1062 = vmatmul.mubr.f32.gmra.mrb[0].mxu0 %v744
        %v1063 = vpop.f32.mrb[0].mxu0
        %v1064 = vadd.f32 %v698, %v1063
        %v1065 = vpop.f32.mrb[0].mxu0
        %v1066 = vadd.f32 %v700, %v1065
        %1067 = vmatprep.mubr.f32.mxu0 0.0
        %1068 = vmatmul.mubr.f32.gmra.mrb[0].mxu0 %v746
        %v1069 = vpop.f32.mrb[0].mxu0
        %v1070 = vadd.f32 %v704, %v1069
        %v1071 = vpop.f32.mrb[0].mxu0
        %v1072 = vadd.f32 %v706, %v1071
        %1073 = vmatprep.mubr.f32.mxu0 0.0
        %1074 = vmatmul.mubr.f32.gmra.mrb[0].mxu0 %v748
        %v1075 = vpop.f32.mrb[0].mxu0
        %v1076 = vadd.f32 %v710, %v1075
        %v1077 = vpop.f32.mrb[0].mxu0
        %v1078 = vadd.f32 %v712, %v1077
        %1079 = vmatprep.mubr.f32.mxu0 0.0
        %1080 = vmatmul.mubr.f32.gmra.mrb[0].mxu0 %v750
        %v1081 = vpop.f32.mrb[0].mxu0
        %v1082 = vadd.f32 %v716, %v1081
        %v1083 = vpop.f32.mrb[0].mxu0
        %v1084 = vadd.f32 %v718, %v1083
        %1085 = vdwg.mxu0
        %s1086 = scalar_lea.vmem [#allocation2], 256
        %v1087 = vld [vmem:[%s1086] sm:$0xff]
        %v1088 = vld [vmem:[%s1086 + $0x8] sm:$0xff]
        %v1089 = vld [vmem:[%s1086 + $0x10] sm:$0xff]
        %v1090 = vld [vmem:[%s1086 + $0x18] sm:$0xff]
        %v1091 = vld [vmem:[%s1086 + $0x20] sm:$0xff]
        %v1092 = vld [vmem:[%s1086 + $0x28] sm:$0xff]
        %v1093 = vld [vmem:[%s1086 + $0x30] sm:$0xff]
        %v1094 = vld [vmem:[%s1086 + $0x38] sm:$0xff]
        %v1095 = vld [vmem:[%s1086 + $0x40] sm:$0xff]
        %v1096 = vld [vmem:[%s1086 + $0x48] sm:$0xff]
        %v1097 = vld [vmem:[%s1086 + $0x50] sm:$0xff]
        %v1098 = vld [vmem:[%s1086 + $0x58] sm:$0xff]
        %v1099 = vld [vmem:[%s1086 + $0x60] sm:$0x3f]
        %v1100 = vld [vmem:[%s1086 + $0x68] sm:$0x3f]
        %v1101 = vld [vmem:[%s1086 + $0x70] sm:$0x3f]
        %v1102 = vld [vmem:[%s1086 + $0x78] sm:$0x3f]
        %v1103 = vrot.slane %v255, 2
        %v1104 = vrot.slane %v256, 2
        %v1105 = vsel %vm385, %v1103, %v1104
        %v1106 = vrot.slane %v257, 2
        %v1107 = vsel %vm385, %v1104, %v1106
        %v1108 = vrot.slane %v258, 2
        %v1109 = vsel %vm385, %v1106, %v1108
        %v1110 = vrot.slane %v259, 2
        %v1111 = vsel %vm385, %v1108, %v1110
        %v1112 = vrot.slane %v260, 2
        %v1113 = vsel %vm385, %v1110, %v1112
        %v1114 = vrot.slane %v261, 2
        %v1115 = vsel %vm385, %v1112, %v1114
        %v1116 = vrot.slane %v262, 2
        %v1117 = vsel %vm385, %v1114, %v1116
        %v1118 = vrot.slane %v263, 2
        %v1119 = vsel %vm385, %v1116, %v1118
        %v1120 = vrot.slane %v264, 2
        %v1121 = vsel %vm385, %v1118, %v1120
        %v1122 = vrot.slane %v265, 2
        %v1123 = vsel %vm385, %v1120, %v1122
        %v1124 = vrot.slane %v266, 2
        %v1125 = vsel %vm385, %v1122, %v1124
        %v1126 = vrot.slane %v267, 2
        %v1127 = vsel %vm385, %v1124, %v1126
        %v1128 = vrot.slane %v268, 2
        %v1129 = vsel %vm385, %v1126, %v1128
        %v1130 = vrot.slane %v269, 2
        %v1131 = vsel %vm385, %v1128, %v1130
        %v1132 = vrot.slane %v270, 2
        %v1133 = vsel %vm385, %v1130, %v1132
        %v1134 = vsel %vm352, %v1105, 0
        %v1136 = vsel %vm352, %v1107, 0
        %v1138 = vsel %vm352, %v1109, 0
        %v1140 = vsel %vm352, %v1111, 0
        %v1142 = vsel %vm352, %v1113, 0
        %v1144 = vsel %vm352, %v1115, 0
        %v1146 = vsel %vm352, %v1117, 0
        %v1148 = vsel %vm352, %v1119, 0
        %v1150 = vsel %vm352, %v1121, 0
        %v1152 = vsel %vm352, %v1123, 0
        %v1154 = vsel %vm352, %v1125, 0
        %v1156 = vsel %vm352, %v1127, 0
        %v1158 = vsel %vm352, %v1129, 0
        %v1160 = vsel %vm352, %v1131, 0
        %v1162 = vsel %vm352, %v1133, 0
        %v1164 = vsel %vm352, %v1132, 0
        %v1167 = vsel %vm385, %v1099, 0
        %v1170 = vsel %vm385, %v1100, 0
        %v1173 = vsel %vm385, %v1101, 0
        %v1176 = vsel %vm385, %v1102, 0
        %1178 = vmatprep.subr.mxu0 %v1088
        %1179 = vmatpush1.msra.mxu0 %v1087
        %1180 = vmatprep.subr.mxu0 %v1092
        %1181 = vmatpush1.msra.mxu0 %v1091
        %1182 = vmatprep.subr.mxu0 %v1096
        %1183 = vmatpush1.msra.mxu0 %v1095
        %1184 = vmatprep.subr.mxu0 %v1170
        %1185 = vmatpush1.msra.mxu0 %v1167
        %1186 = vmatprep.subr.mxu0 0.0
        %1187 = vmatpush1.msra.mxu0 0.0
        %1188 = vmatprep.subr.mxu0 0.0
        %1189 = vmatpush1.msra.mxu0 0.0
        %1190 = vmatprep.subr.mxu0 0.0
        %1191 = vmatpush1.msra.mxu0 0.0
        %1192 = vmatprep.subr.mxu0 0.0
        %1193 = vmatpush1.msra.mxu0 0.0
        %1194 = vmatprep.subr.mxu0 0.0
        %1195 = vmatpush1.msra.mxu0 0.0
        %1196 = vmatprep.subr.mxu0 0.0
        %1197 = vmatpush1.msra.mxu0 0.0
        %1198 = vmatprep.subr.mxu0 0.0
        %1199 = vmatpush1.msra.mxu0 0.0
        %1200 = vmatprep.subr.mxu0 0.0
        %1201 = vmatpush1.msra.mxu0 0.0
        %1202 = vmatprep.subr.mxu0 0.0
        %1203 = vmatpush1.msra.mxu0 0.0
        %1204 = vmatprep.subr.mxu0 0.0
        %1205 = vmatpush1.msra.mxu0 0.0
        %1206 = vmatprep.subr.mxu0 0.0
        %1207 = vmatpush1.msra.mxu0 0.0
        %1208 = vmatprep.subr.mxu0 0.0
        %1209 = vmatpush1.msra.mxu0 0.0
        %1210 = vmatprep.subr.mxu0 0.0
        %1211 = vmatpush1.msra.mxu0 0.0
        %1212 = vmatprep.subr.mxu0 0.0
        %1213 = vmatpush1.msra.mxu0 0.0
        %1214 = vmatprep.subr.mxu0 0.0
        %1215 = vmatpush1.msra.mxu0 0.0
        %1216 = vmatprep.subr.mxu0 0.0
        %1217 = vmatpush1.msra.mxu0 0.0
        %1218 = vmatprep.subr.mxu0 0.0
        %1219 = vmatpush1.msra.mxu0 0.0
        %1220 = vmatprep.subr.mxu0 0.0
        %1221 = vmatpush1.msra.mxu0 0.0
        %1222 = vmatprep.subr.mxu0 0.0
        %1223 = vmatpush1.msra.mxu0 0.0
        %1224 = vmatprep.subr.mxu0 0.0
        %1225 = vmatpush1.msra.mxu0 0.0
        %1226 = vmatprep.subr.mxu0 0.0
        %1227 = vmatpush1.msra.mxu0 0.0
        %1228 = vmatprep.subr.mxu0 0.0
        %1229 = vmatpush1.msra.mxu0 0.0
        %1230 = vmatprep.subr.mxu0 0.0
        %1231 = vmatpush1.msra.mxu0 0.0
        %1232 = vmatprep.subr.mxu0 0.0
        %1233 = vmatpush1.msra.mxu0 0.0
        %1234 = vmatprep.subr.mxu0 0.0
        %1235 = vmatpush1.msra.mxu0 0.0
        %1236 = vmatprep.subr.mxu0 0.0
        %1237 = vmatpush1.msra.mxu0 0.0
        %1238 = vmatprep.subr.mxu0 0.0
        %1239 = vmatpush1.msra.mxu0 0.0
        %1240 = vmatprep.subr.mxu0 0.0
        %1241 = vmatpush1.msra.mxu0 0.0
        %1242 = vmatprep.mubr.f32.mxu0 0.0
        %1243 = vmatmul.mubr.f32.gmra.mrb[0].mxu0 %v1134
        %v1244 = vpop.f32.mrb[0].mxu0
        %v1245 = vadd.f32 0.0, %v1244
        %v1246 = vpop.f32.mrb[0].mxu0
        %v1247 = vadd.f32 0.0, %v1246
        %1248 = vmatprep.mubr.f32.mxu0 0.0
        %1249 = vmatmul.mubr.f32.gmra.mrb[0].mxu0 %v1136
        %v1250 = vpop.f32.mrb[0].mxu0
        %v1251 = vadd.f32 0.0, %v1250
        %v1252 = vpop.f32.mrb[0].mxu0
        %v1253 = vadd.f32 0.0, %v1252
        %1254 = vmatprep.mubr.f32.mxu0 0.0
        %1255 = vmatmul.mubr.f32.gmra.mrb[0].mxu0 %v1138
        %v1256 = vpop.f32.mrb[0].mxu0
        %v1257 = vadd.f32 0.0, %v1256
        %v1258 = vpop.f32.mrb[0].mxu0
        %v1259 = vadd.f32 0.0, %v1258
        %1260 = vmatprep.mubr.f32.mxu0 0.0
        %1261 = vmatmul.mubr.f32.gmra.mrb[0].mxu0 %v1140
        %v1262 = vpop.f32.mrb[0].mxu0
        %v1263 = vadd.f32 0.0, %v1262
        %v1264 = vpop.f32.mrb[0].mxu0
        %v1265 = vadd.f32 0.0, %v1264
        %1266 = vmatprep.mubr.f32.mxu0 0.0
        %1267 = vmatmul.mubr.f32.gmra.mrb[0].mxu0 %v1142
        %v1268 = vpop.f32.mrb[0].mxu0
        %v1269 = vadd.f32 0.0, %v1268
        %v1270 = vpop.f32.mrb[0].mxu0
        %v1271 = vadd.f32 0.0, %v1270
        %1272 = vmatprep.mubr.f32.mxu0 0.0
        %1273 = vmatmul.mubr.f32.gmra.mrb[0].mxu0 %v1144
        %v1274 = vpop.f32.mrb[0].mxu0
        %v1275 = vadd.f32 0.0, %v1274
        %v1276 = vpop.f32.mrb[0].mxu0
        %v1277 = vadd.f32 0.0, %v1276
        %1278 = vmatprep.mubr.f32.mxu0 0.0
        %1279 = vmatmul.mubr.f32.gmra.mrb[0].mxu0 %v1146
        %v1280 = vpop.f32.mrb[0].mxu0
        %v1281 = vadd.f32 0.0, %v1280
        %v1282 = vpop.f32.mrb[0].mxu0
        %v1283 = vadd.f32 0.0, %v1282
        %1284 = vmatprep.mubr.f32.mxu0 0.0
        %1285 = vmatmul.mubr.f32.gmra.mrb[0].mxu0 %v1148
        %v1286 = vpop.f32.mrb[0].mxu0
        %v1287 = vadd.f32 0.0, %v1286
        %v1288 = vpop.f32.mrb[0].mxu0
        %v1289 = vadd.f32 0.0, %v1288
        %1290 = vmatprep.mubr.f32.mxu0 0.0
        %1291 = vmatmul.mubr.f32.gmra.mrb[0].mxu0 %v1150
        %v1292 = vpop.f32.mrb[0].mxu0
        %v1293 = vadd.f32 0.0, %v1292
        %v1294 = vpop.f32.mrb[0].mxu0
        %v1295 = vadd.f32 0.0, %v1294
        %1296 = vmatprep.mubr.f32.mxu0 0.0
        %1297 = vmatmul.mubr.f32.gmra.mrb[0].mxu0 %v1152
        %v1298 = vpop.f32.mrb[0].mxu0
        %v1299 = vadd.f32 0.0, %v1298
        %v1300 = vpop.f32.mrb[0].mxu0
        %v1301 = vadd.f32 0.0, %v1300
        %1302 = vmatprep.mubr.f32.mxu0 0.0
        %1303 = vmatmul.mubr.f32.gmra.mrb[0].mxu0 %v1154
        %v1304 = vpop.f32.mrb[0].mxu0
        %v1305 = vadd.f32 0.0, %v1304
        %v1306 = vpop.f32.mrb[0].mxu0
        %v1307 = vadd.f32 0.0, %v1306
        %1308 = vmatprep.mubr.f32.mxu0 0.0
        %1309 = vmatmul.mubr.f32.gmra.mrb[0].mxu0 %v1156
        %v1310 = vpop.f32.mrb[0].mxu0
        %v1311 = vadd.f32 0.0, %v1310
        %v1312 = vpop.f32.mrb[0].mxu0
        %v1313 = vadd.f32 0.0, %v1312
        %1314 = vmatprep.mubr.f32.mxu0 0.0
        %1315 = vmatmul.mubr.f32.gmra.mrb[0].mxu0 %v1158
        %v1316 = vpop.f32.mrb[0].mxu0
        %v1317 = vadd.f32 0.0, %v1316
        %v1318 = vpop.f32.mrb[0].mxu0
        %v1319 = vadd.f32 0.0, %v1318
        %1320 = vmatprep.mubr.f32.mxu0 0.0
        %1321 = vmatmul.mubr.f32.gmra.mrb[0].mxu0 %v1160
        %v1322 = vpop.f32.mrb[0].mxu0
        %v1323 = vadd.f32 0.0, %v1322
        %v1324 = vpop.f32.mrb[0].mxu0
        %v1325 = vadd.f32 0.0, %v1324
        %1326 = vmatprep.mubr.f32.mxu0 0.0
        %1327 = vmatmul.mubr.f32.gmra.mrb[0].mxu0 %v1162
        %v1328 = vpop.f32.mrb[0].mxu0
        %v1329 = vadd.f32 0.0, %v1328
        %v1330 = vpop.f32.mrb[0].mxu0
        %v1331 = vadd.f32 0.0, %v1330
        %1332 = vmatprep.mubr.f32.mxu0 0.0
        %1333 = vmatmul.mubr.f32.gmra.mrb[0].mxu0 %v1164
        %v1334 = vpop.f32.mrb[0].mxu0
        %v1335 = vadd.f32 0.0, %v1334
        %v1336 = vpop.f32.mrb[0].mxu0
        %v1337 = vadd.f32 0.0, %v1336
        %1338 = vdwg.mxu0
        %1339 = vmatprep.subr.mxu0 %v1090
        %1340 = vmatpush1.msra.mxu0 %v1089
        %1341 = vmatprep.subr.mxu0 %v1094
        %1342 = vmatpush1.msra.mxu0 %v1093
        %1343 = vmatprep.subr.mxu0 %v1098
        %1344 = vmatpush1.msra.mxu0 %v1097
        %1345 = vmatprep.subr.mxu0 %v1176
        %1346 = vmatpush1.msra.mxu0 %v1173
        %1347 = vmatprep.subr.mxu0 0.0
        %1348 = vmatpush1.msra.mxu0 0.0
        %1349 = vmatprep.subr.mxu0 0.0
        %1350 = vmatpush1.msra.mxu0 0.0
        %1351 = vmatprep.subr.mxu0 0.0
        %1352 = vmatpush1.msra.mxu0 0.0
        %1353 = vmatprep.subr.mxu0 0.0
        %1354 = vmatpush1.msra.mxu0 0.0
        %1355 = vmatprep.subr.mxu0 0.0
        %1356 = vmatpush1.msra.mxu0 0.0
        %1357 = vmatprep.subr.mxu0 0.0
        %1358 = vmatpush1.msra.mxu0 0.0
        %1359 = vmatprep.subr.mxu0 0.0
        %1360 = vmatpush1.msra.mxu0 0.0
        %1361 = vmatprep.subr.mxu0 0.0
        %1362 = vmatpush1.msra.mxu0 0.0
        %1363 = vmatprep.subr.mxu0 0.0
        %1364 = vmatpush1.msra.mxu0 0.0
        %1365 = vmatprep.subr.mxu0 0.0
        %1366 = vmatpush1.msra.mxu0 0.0
        %1367 = vmatprep.subr.mxu0 0.0
        %1368 = vmatpush1.msra.mxu0 0.0
        %1369 = vmatprep.subr.mxu0 0.0
        %1370 = vmatpush1.msra.mxu0 0.0
        %1371 = vmatprep.subr.mxu0 0.0
        %1372 = vmatpush1.msra.mxu0 0.0
        %1373 = vmatprep.subr.mxu0 0.0
        %1374 = vmatpush1.msra.mxu0 0.0
        %1375 = vmatprep.subr.mxu0 0.0
        %1376 = vmatpush1.msra.mxu0 0.0
        %1377 = vmatprep.subr.mxu0 0.0
        %1378 = vmatpush1.msra.mxu0 0.0
        %1379 = vmatprep.subr.mxu0 0.0
        %1380 = vmatpush1.msra.mxu0 0.0
        %1381 = vmatprep.subr.mxu0 0.0
        %1382 = vmatpush1.msra.mxu0 0.0
        %1383 = vmatprep.subr.mxu0 0.0
        %1384 = vmatpush1.msra.mxu0 0.0
        %1385 = vmatprep.subr.mxu0 0.0
        %1386 = vmatpush1.msra.mxu0 0.0
        %1387 = vmatprep.subr.mxu0 0.0
        %1388 = vmatpush1.msra.mxu0 0.0
        %1389 = vmatprep.subr.mxu0 0.0
        %1390 = vmatpush1.msra.mxu0 0.0
        %1391 = vmatprep.subr.mxu0 0.0
        %1392 = vmatpush1.msra.mxu0 0.0
        %1393 = vmatprep.subr.mxu0 0.0
        %1394 = vmatpush1.msra.mxu0 0.0
        %1395 = vmatprep.subr.mxu0 0.0
        %1396 = vmatpush1.msra.mxu0 0.0
        %1397 = vmatprep.subr.mxu0 0.0
        %1398 = vmatpush1.msra.mxu0 0.0
        %1399 = vmatprep.subr.mxu0 0.0
        %1400 = vmatpush1.msra.mxu0 0.0
        %1401 = vmatprep.subr.mxu0 0.0
        %1402 = vmatpush1.msra.mxu0 0.0
        %1403 = vmatprep.mubr.f32.mxu0 0.0
        %1404 = vmatmul.mubr.f32.gmra.mrb[0].mxu0 %v1134
        %v1405 = vpop.f32.mrb[0].mxu0
        %v1406 = vadd.f32 0.0, %v1405
        %v1407 = vpop.f32.mrb[0].mxu0
        %v1408 = vadd.f32 0.0, %v1407
        %1409 = vmatprep.mubr.f32.mxu0 0.0
        %1410 = vmatmul.mubr.f32.gmra.mrb[0].mxu0 %v1136
        %v1411 = vpop.f32.mrb[0].mxu0
        %v1412 = vadd.f32 0.0, %v1411
        %v1413 = vpop.f32.mrb[0].mxu0
        %v1414 = vadd.f32 0.0, %v1413
        %1415 = vmatprep.mubr.f32.mxu0 0.0
        %1416 = vmatmul.mubr.f32.gmra.mrb[0].mxu0 %v1138
        %v1417 = vpop.f32.mrb[0].mxu0
        %v1418 = vadd.f32 0.0, %v1417
        %v1419 = vpop.f32.mrb[0].mxu0
        %v1420 = vadd.f32 0.0, %v1419
        %1421 = vmatprep.mubr.f32.mxu0 0.0
        %1422 = vmatmul.mubr.f32.gmra.mrb[0].mxu0 %v1140
        %v1423 = vpop.f32.mrb[0].mxu0
        %v1424 = vadd.f32 0.0, %v1423
        %v1425 = vpop.f32.mrb[0].mxu0
        %v1426 = vadd.f32 0.0, %v1425
        %1427 = vmatprep.mubr.f32.mxu0 0.0
        %1428 = vmatmul.mubr.f32.gmra.mrb[0].mxu0 %v1142
        %v1429 = vpop.f32.mrb[0].mxu0
        %v1430 = vadd.f32 0.0, %v1429
        %v1431 = vpop.f32.mrb[0].mxu0
        %v1432 = vadd.f32 0.0, %v1431
        %1433 = vmatprep.mubr.f32.mxu0 0.0
        %1434 = vmatmul.mubr.f32.gmra.mrb[0].mxu0 %v1144
        %v1435 = vpop.f32.mrb[0].mxu0
        %v1436 = vadd.f32 0.0, %v1435
        %v1437 = vpop.f32.mrb[0].mxu0
        %v1438 = vadd.f32 0.0, %v1437
        %1439 = vmatprep.mubr.f32.mxu0 0.0
        %1440 = vmatmul.mubr.f32.gmra.mrb[0].mxu0 %v1146
        %v1441 = vpop.f32.mrb[0].mxu0
        %v1442 = vadd.f32 0.0, %v1441
        %v1443 = vpop.f32.mrb[0].mxu0
        %v1444 = vadd.f32 0.0, %v1443
        %1445 = vmatprep.mubr.f32.mxu0 0.0
        %1446 = vmatmul.mubr.f32.gmra.mrb[0].mxu0 %v1148
        %v1447 = vpop.f32.mrb[0].mxu0
        %v1448 = vadd.f32 0.0, %v1447
        %v1449 = vpop.f32.mrb[0].mxu0
        %v1450 = vadd.f32 0.0, %v1449
        %1451 = vmatprep.mubr.f32.mxu0 0.0
        %1452 = vmatmul.mubr.f32.gmra.mrb[0].mxu0 %v1150
        %v1453 = vpop.f32.mrb[0].mxu0
        %v1454 = vadd.f32 0.0, %v1453
        %v1455 = vpop.f32.mrb[0].mxu0
        %v1456 = vadd.f32 0.0, %v1455
        %1457 = vmatprep.mubr.f32.mxu0 0.0
        %1458 = vmatmul.mubr.f32.gmra.mrb[0].mxu0 %v1152
        %v1459 = vpop.f32.mrb[0].mxu0
        %v1460 = vadd.f32 0.0, %v1459
        %v1461 = vpop.f32.mrb[0].mxu0
        %v1462 = vadd.f32 0.0, %v1461
        %1463 = vmatprep.mubr.f32.mxu0 0.0
        %1464 = vmatmul.mubr.f32.gmra.mrb[0].mxu0 %v1154
        %v1465 = vpop.f32.mrb[0].mxu0
        %v1466 = vadd.f32 0.0, %v1465
        %v1467 = vpop.f32.mrb[0].mxu0
        %v1468 = vadd.f32 0.0, %v1467
        %1469 = vmatprep.mubr.f32.mxu0 0.0
        %1470 = vmatmul.mubr.f32.gmra.mrb[0].mxu0 %v1156
        %v1471 = vpop.f32.mrb[0].mxu0
        %v1472 = vadd.f32 0.0, %v1471
        %v1473 = vpop.f32.mrb[0].mxu0
        %v1474 = vadd.f32 0.0, %v1473
        %1475 = vmatprep.mubr.f32.mxu0 0.0
        %1476 = vmatmul.mubr.f32.gmra.mrb[0].mxu0 %v1158
        %v1477 = vpop.f32.mrb[0].mxu0
        %v1478 = vadd.f32 0.0, %v1477
        %v1479 = vpop.f32.mrb[0].mxu0
        %v1480 = vadd.f32 0.0, %v1479
        %1481 = vmatprep.mubr.f32.mxu0 0.0
        %1482 = vmatmul.mubr.f32.gmra.mrb[0].mxu0 %v1160
        %v1483 = vpop.f32.mrb[0].mxu0
        %v1484 = vadd.f32 0.0, %v1483
        %v1485 = vpop.f32.mrb[0].mxu0
        %v1486 = vadd.f32 0.0, %v1485
        %1487 = vmatprep.mubr.f32.mxu0 0.0
        %1488 = vmatmul.mubr.f32.gmra.mrb[0].mxu0 %v1162
        %v1489 = vpop.f32.mrb[0].mxu0
        %v1490 = vadd.f32 0.0, %v1489
        %v1491 = vpop.f32.mrb[0].mxu0
        %v1492 = vadd.f32 0.0, %v1491
        %1493 = vmatprep.mubr.f32.mxu0 0.0
        %1494 = vmatmul.mubr.f32.gmra.mrb[0].mxu0 %v1164
        %v1495 = vpop.f32.mrb[0].mxu0
        %v1496 = vadd.f32 0.0, %v1495
        %v1497 = vpop.f32.mrb[0].mxu0
        %v1498 = vadd.f32 0.0, %v1497
        %1499 = vdwg.mxu0
        %v1500 = vadd.f32 %v831, %v1245
        %v1501 = vadd.f32 %v833, %v1247
        %v1502 = vadd.f32 %v992, %v1406
        %v1503 = vadd.f32 %v994, %v1408
        %v1504 = vadd.f32 %v837, %v1251
        %v1505 = vadd.f32 %v839, %v1253
        %v1506 = vadd.f32 %v998, %v1412
        %v1507 = vadd.f32 %v1000, %v1414
        %v1508 = vadd.f32 %v843, %v1257
        %v1509 = vadd.f32 %v845, %v1259
        %v1510 = vadd.f32 %v1004, %v1418
        %v1511 = vadd.f32 %v1006, %v1420
        %v1512 = vadd.f32 %v849, %v1263
        %v1513 = vadd.f32 %v851, %v1265
        %v1514 = vadd.f32 %v1010, %v1424
        %v1515 = vadd.f32 %v1012, %v1426
        %v1516 = vadd.f32 %v855, %v1269
        %v1517 = vadd.f32 %v857, %v1271
        %v1518 = vadd.f32 %v1016, %v1430
        %v1519 = vadd.f32 %v1018, %v1432
        %v1520 = vadd.f32 %v861, %v1275
        %v1521 = vadd.f32 %v863, %v1277
        %v1522 = vadd.f32 %v1022, %v1436
        %v1523 = vadd.f32 %v1024, %v1438
        %v1524 = vadd.f32 %v867, %v1281
        %v1525 = vadd.f32 %v869, %v1283
        %v1526 = vadd.f32 %v1028, %v1442
        %v1527 = vadd.f32 %v1030, %v1444
        %v1528 = vadd.f32 %v873, %v1287
        %v1529 = vadd.f32 %v875, %v1289
        %v1530 = vadd.f32 %v1034, %v1448
        %v1531 = vadd.f32 %v1036, %v1450
        %v1532 = vadd.f32 %v879, %v1293
        %v1533 = vadd.f32 %v881, %v1295
        %v1534 = vadd.f32 %v1040, %v1454
        %v1535 = vadd.f32 %v1042, %v1456
        %v1536 = vadd.f32 %v885, %v1299
        %v1537 = vadd.f32 %v887, %v1301
        %v1538 = vadd.f32 %v1046, %v1460
        %v1539 = vadd.f32 %v1048, %v1462
        %v1540 = vadd.f32 %v891, %v1305
        %v1541 = vadd.f32 %v893, %v1307
        %v1542 = vadd.f32 %v1052, %v1466
        %v1543 = vadd.f32 %v1054, %v1468
        %v1544 = vadd.f32 %v897, %v1311
        %v1545 = vadd.f32 %v899, %v1313
        %v1546 = vadd.f32 %v1058, %v1472
        %v1547 = vadd.f32 %v1060, %v1474
        %v1548 = vadd.f32 %v903, %v1317
        %v1549 = vadd.f32 %v905, %v1319
        %v1550 = vadd.f32 %v1064, %v1478
        %v1551 = vadd.f32 %v1066, %v1480
        %v1552 = vadd.f32 %v909, %v1323
        %v1553 = vadd.f32 %v911, %v1325
        %v1554 = vadd.f32 %v1070, %v1484
        %v1555 = vadd.f32 %v1072, %v1486
        %v1556 = vadd.f32 %v915, %v1329
        %v1557 = vadd.f32 %v917, %v1331
        %v1558 = vadd.f32 %v1076, %v1490
        %v1559 = vadd.f32 %v1078, %v1492
        %v1560 = vadd.f32 %v921, %v1335
        %v1561 = vadd.f32 %v923, %v1337
        %v1562 = vadd.f32 %v1082, %v1496
        %v1563 = vadd.f32 %v1084, %v1498
        %s1564 = scalar_lea.vmem [#allocation2], 384
        %v1565 = vld [vmem:[%s1564] sm:$0xff]
        %v1566 = vld [vmem:[%s1564 + $0x8] sm:$0xff]
        %v1567 = vld [vmem:[%s1564 + $0x10] sm:$0xff]
        %v1568 = vld [vmem:[%s1564 + $0x18] sm:$0xff]
        %v1569 = vld [vmem:[%s1564 + $0x20] sm:$0xff]
        %v1570 = vld [vmem:[%s1564 + $0x28] sm:$0xff]
        %v1571 = vld [vmem:[%s1564 + $0x30] sm:$0xff]
        %v1572 = vld [vmem:[%s1564 + $0x38] sm:$0xff]
        %v1573 = vld [vmem:[%s1564 + $0x40] sm:$0xff]
        %v1574 = vld [vmem:[%s1564 + $0x48] sm:$0xff]
        %v1575 = vld [vmem:[%s1564 + $0x50] sm:$0xff]
        %v1576 = vld [vmem:[%s1564 + $0x58] sm:$0xff]
        %v1577 = vld [vmem:[%s1564 + $0x60] sm:$0x3f]
        %v1578 = vld [vmem:[%s1564 + $0x68] sm:$0x3f]
        %v1579 = vld [vmem:[%s1564 + $0x70] sm:$0x3f]
        %v1580 = vld [vmem:[%s1564 + $0x78] sm:$0x3f]
        %vm1581 = vcmask 1044480
        %v1582 = vrot.slane %v255, 3
        %v1583 = vrot.slane %v256, 3
        %v1584 = vsel %vm1581, %v1582, %v1583
        %v1585 = vrot.slane %v257, 3
        %v1586 = vsel %vm1581, %v1583, %v1585
        %v1587 = vrot.slane %v258, 3
        %v1588 = vsel %vm1581, %v1585, %v1587
        %v1589 = vrot.slane %v259, 3
        %v1590 = vsel %vm1581, %v1587, %v1589
        %v1591 = vrot.slane %v260, 3
        %v1592 = vsel %vm1581, %v1589, %v1591
        %v1593 = vrot.slane %v261, 3
        %v1594 = vsel %vm1581, %v1591, %v1593
        %v1595 = vrot.slane %v262, 3
        %v1596 = vsel %vm1581, %v1593, %v1595
        %v1597 = vrot.slane %v263, 3
        %v1598 = vsel %vm1581, %v1595, %v1597
        %v1599 = vrot.slane %v264, 3
        %v1600 = vsel %vm1581, %v1597, %v1599
        %v1601 = vrot.slane %v265, 3
        %v1602 = vsel %vm1581, %v1599, %v1601
        %v1603 = vrot.slane %v266, 3
        %v1604 = vsel %vm1581, %v1601, %v1603
        %v1605 = vrot.slane %v267, 3
        %v1606 = vsel %vm1581, %v1603, %v1605
        %v1607 = vrot.slane %v268, 3
        %v1608 = vsel %vm1581, %v1605, %v1607
        %v1609 = vrot.slane %v269, 3
        %v1610 = vsel %vm1581, %v1607, %v1609
        %v1611 = vrot.slane %v270, 3
        %v1612 = vsel %vm1581, %v1609, %v1611
        %v1613 = vsel %vm352, %v1584, 0
        %v1615 = vsel %vm352, %v1586, 0
        %v1617 = vsel %vm352, %v1588, 0
        %v1619 = vsel %vm352, %v1590, 0
        %v1621 = vsel %vm352, %v1592, 0
        %v1623 = vsel %vm352, %v1594, 0
        %v1625 = vsel %vm352, %v1596, 0
        %v1627 = vsel %vm352, %v1598, 0
        %v1629 = vsel %vm352, %v1600, 0
        %v1631 = vsel %vm352, %v1602, 0
        %v1633 = vsel %vm352, %v1604, 0
        %v1635 = vsel %vm352, %v1606, 0
        %v1637 = vsel %vm352, %v1608, 0
        %v1639 = vsel %vm352, %v1610, 0
        %v1641 = vsel %vm352, %v1612, 0
        %v1643 = vsel %vm352, %v1611, 0
        %v1646 = vsel %vm385, %v1577, 0
        %v1649 = vsel %vm385, %v1578, 0
        %v1652 = vsel %vm385, %v1579, 0
        %v1655 = vsel %vm385, %v1580, 0
        %1657 = vmatprep.subr.mxu0 %v1566
        %1658 = vmatpush1.msra.mxu0 %v1565
        %1659 = vmatprep.subr.mxu0 %v1570
        %1660 = vmatpush1.msra.mxu0 %v1569
        %1661 = vmatprep.subr.mxu0 %v1574
        %1662 = vmatpush1.msra.mxu0 %v1573
        %1663 = vmatprep.subr.mxu0 %v1649
        %1664 = vmatpush1.msra.mxu0 %v1646
        %1665 = vmatprep.subr.mxu0 0.0
        %1666 = vmatpush1.msra.mxu0 0.0
        %1667 = vmatprep.subr.mxu0 0.0
        %1668 = vmatpush1.msra.mxu0 0.0
        %1669 = vmatprep.subr.mxu0 0.0
        %1670 = vmatpush1.msra.mxu0 0.0
        %1671 = vmatprep.subr.mxu0 0.0
        %1672 = vmatpush1.msra.mxu0 0.0
        %1673 = vmatprep.subr.mxu0 0.0
        %1674 = vmatpush1.msra.mxu0 0.0
        %1675 = vmatprep.subr.mxu0 0.0
        %1676 = vmatpush1.msra.mxu0 0.0
        %1677 = vmatprep.subr.mxu0 0.0
        %1678 = vmatpush1.msra.mxu0 0.0
        %1679 = vmatprep.subr.mxu0 0.0
        %1680 = vmatpush1.msra.mxu0 0.0
        %1681 = vmatprep.subr.mxu0 0.0
        %1682 = vmatpush1.msra.mxu0 0.0
        %1683 = vmatprep.subr.mxu0 0.0
        %1684 = vmatpush1.msra.mxu0 0.0
        %1685 = vmatprep.subr.mxu0 0.0
        %1686 = vmatpush1.msra.mxu0 0.0
        %1687 = vmatprep.subr.mxu0 0.0
        %1688 = vmatpush1.msra.mxu0 0.0
        %1689 = vmatprep.subr.mxu0 0.0
        %1690 = vmatpush1.msra.mxu0 0.0
        %1691 = vmatprep.subr.mxu0 0.0
        %1692 = vmatpush1.msra.mxu0 0.0
        %1693 = vmatprep.subr.mxu0 0.0
        %1694 = vmatpush1.msra.mxu0 0.0
        %1695 = vmatprep.subr.mxu0 0.0
        %1696 = vmatpush1.msra.mxu0 0.0
        %1697 = vmatprep.subr.mxu0 0.0
        %1698 = vmatpush1.msra.mxu0 0.0
        %1699 = vmatprep.subr.mxu0 0.0
        %1700 = vmatpush1.msra.mxu0 0.0
        %1701 = vmatprep.subr.mxu0 0.0
        %1702 = vmatpush1.msra.mxu0 0.0
        %1703 = vmatprep.subr.mxu0 0.0
        %1704 = vmatpush1.msra.mxu0 0.0
        %1705 = vmatprep.subr.mxu0 0.0
        %1706 = vmatpush1.msra.mxu0 0.0
        %1707 = vmatprep.subr.mxu0 0.0
        %1708 = vmatpush1.msra.mxu0 0.0
        %1709 = vmatprep.subr.mxu0 0.0
        %1710 = vmatpush1.msra.mxu0 0.0
        %1711 = vmatprep.subr.mxu0 0.0
        %1712 = vmatpush1.msra.mxu0 0.0
        %1713 = vmatprep.subr.mxu0 0.0
        %1714 = vmatpush1.msra.mxu0 0.0
        %1715 = vmatprep.subr.mxu0 0.0
        %1716 = vmatpush1.msra.mxu0 0.0
        %1717 = vmatprep.subr.mxu0 0.0
        %1718 = vmatpush1.msra.mxu0 0.0
        %1719 = vmatprep.subr.mxu0 0.0
        %1720 = vmatpush1.msra.mxu0 0.0
        %1721 = vmatprep.mubr.f32.mxu0 0.0
        %1722 = vmatmul.mubr.f32.gmra.mrb[0].mxu0 %v1613
        %v1723 = vpop.f32.mrb[0].mxu0
        %v1724 = vadd.f32 0.0, %v1723
        %v1725 = vpop.f32.mrb[0].mxu0
        %v1726 = vadd.f32 0.0, %v1725
        %1727 = vmatprep.mubr.f32.mxu0 0.0
        %1728 = vmatmul.mubr.f32.gmra.mrb[0].mxu0 %v1615
        %v1729 = vpop.f32.mrb[0].mxu0
        %v1730 = vadd.f32 0.0, %v1729
        %v1731 = vpop.f32.mrb[0].mxu0
        %v1732 = vadd.f32 0.0, %v1731
        %1733 = vmatprep.mubr.f32.mxu0 0.0
        %1734 = vmatmul.mubr.f32.gmra.mrb[0].mxu0 %v1617
        %v1735 = vpop.f32.mrb[0].mxu0
        %v1736 = vadd.f32 0.0, %v1735
        %v1737 = vpop.f32.mrb[0].mxu0
        %v1738 = vadd.f32 0.0, %v1737
        %1739 = vmatprep.mubr.f32.mxu0 0.0
        %1740 = vmatmul.mubr.f32.gmra.mrb[0].mxu0 %v1619
        %v1741 = vpop.f32.mrb[0].mxu0
        %v1742 = vadd.f32 0.0, %v1741
        %v1743 = vpop.f32.mrb[0].mxu0
        %v1744 = vadd.f32 0.0, %v1743
        %1745 = vmatprep.mubr.f32.mxu0 0.0
        %1746 = vmatmul.mubr.f32.gmra.mrb[0].mxu0 %v1621
        %v1747 = vpop.f32.mrb[0].mxu0
        %v1748 = vadd.f32 0.0, %v1747
        %v1749 = vpop.f32.mrb[0].mxu0
        %v1750 = vadd.f32 0.0, %v1749
        %1751 = vmatprep.mubr.f32.mxu0 0.0
        %1752 = vmatmul.mubr.f32.gmra.mrb[0].mxu0 %v1623
        %v1753 = vpop.f32.mrb[0].mxu0
        %v1754 = vadd.f32 0.0, %v1753
        %v1755 = vpop.f32.mrb[0].mxu0
        %v1756 = vadd.f32 0.0, %v1755
        %1757 = vmatprep.mubr.f32.mxu0 0.0
        %1758 = vmatmul.mubr.f32.gmra.mrb[0].mxu0 %v1625
        %v1759 = vpop.f32.mrb[0].mxu0
        %v1760 = vadd.f32 0.0, %v1759
        %v1761 = vpop.f32.mrb[0].mxu0
        %v1762 = vadd.f32 0.0, %v1761
        %1763 = vmatprep.mubr.f32.mxu0 0.0
        %1764 = vmatmul.mubr.f32.gmra.mrb[0].mxu0 %v1627
        %v1765 = vpop.f32.mrb[0].mxu0
        %v1766 = vadd.f32 0.0, %v1765
        %v1767 = vpop.f32.mrb[0].mxu0
        %v1768 = vadd.f32 0.0, %v1767
        %1769 = vmatprep.mubr.f32.mxu0 0.0
        %1770 = vmatmul.mubr.f32.gmra.mrb[0].mxu0 %v1629
        %v1771 = vpop.f32.mrb[0].mxu0
        %v1772 = vadd.f32 0.0, %v1771
        %v1773 = vpop.f32.mrb[0].mxu0
        %v1774 = vadd.f32 0.0, %v1773
        %1775 = vmatprep.mubr.f32.mxu0 0.0
        %1776 = vmatmul.mubr.f32.gmra.mrb[0].mxu0 %v1631
        %v1777 = vpop.f32.mrb[0].mxu0
        %v1778 = vadd.f32 0.0, %v1777
        %v1779 = vpop.f32.mrb[0].mxu0
        %v1780 = vadd.f32 0.0, %v1779
        %1781 = vmatprep.mubr.f32.mxu0 0.0
        %1782 = vmatmul.mubr.f32.gmra.mrb[0].mxu0 %v1633
        %v1783 = vpop.f32.mrb[0].mxu0
        %v1784 = vadd.f32 0.0, %v1783
        %v1785 = vpop.f32.mrb[0].mxu0
        %v1786 = vadd.f32 0.0, %v1785
        %1787 = vmatprep.mubr.f32.mxu0 0.0
        %1788 = vmatmul.mubr.f32.gmra.mrb[0].mxu0 %v1635
        %v1789 = vpop.f32.mrb[0].mxu0
        %v1790 = vadd.f32 0.0, %v1789
        %v1791 = vpop.f32.mrb[0].mxu0
        %v1792 = vadd.f32 0.0, %v1791
        %1793 = vmatprep.mubr.f32.mxu0 0.0
        %1794 = vmatmul.mubr.f32.gmra.mrb[0].mxu0 %v1637
        %v1795 = vpop.f32.mrb[0].mxu0
        %v1796 = vadd.f32 0.0, %v1795
        %v1797 = vpop.f32.mrb[0].mxu0
        %v1798 = vadd.f32 0.0, %v1797
        %1799 = vmatprep.mubr.f32.mxu0 0.0
        %1800 = vmatmul.mubr.f32.gmra.mrb[0].mxu0 %v1639
        %v1801 = vpop.f32.mrb[0].mxu0
        %v1802 = vadd.f32 0.0, %v1801
        %v1803 = vpop.f32.mrb[0].mxu0
        %v1804 = vadd.f32 0.0, %v1803
        %1805 = vmatprep.mubr.f32.mxu0 0.0
        %1806 = vmatmul.mubr.f32.gmra.mrb[0].mxu0 %v1641
        %v1807 = vpop.f32.mrb[0].mxu0
        %v1808 = vadd.f32 0.0, %v1807
        %v1809 = vpop.f32.mrb[0].mxu0
        %v1810 = vadd.f32 0.0, %v1809
        %1811 = vmatprep.mubr.f32.mxu0 0.0
        %1812 = vmatmul.mubr.f32.gmra.mrb[0].mxu0 %v1643
        %v1813 = vpop.f32.mrb[0].mxu0
        %v1814 = vadd.f32 0.0, %v1813
        %v1815 = vpop.f32.mrb[0].mxu0
        %v1816 = vadd.f32 0.0, %v1815
        %1817 = vdwg.mxu0
        %1818 = vmatprep.subr.mxu0 %v1568
        %1819 = vmatpush1.msra.mxu0 %v1567
        %1820 = vmatprep.subr.mxu0 %v1572
        %1821 = vmatpush1.msra.mxu0 %v1571
        %1822 = vmatprep.subr.mxu0 %v1576
        %1823 = vmatpush1.msra.mxu0 %v1575
        %1824 = vmatprep.subr.mxu0 %v1655
        %1825 = vmatpush1.msra.mxu0 %v1652
        %1826 = vmatprep.subr.mxu0 0.0
        %1827 = vmatpush1.msra.mxu0 0.0
        %1828 = vmatprep.subr.mxu0 0.0
        %1829 = vmatpush1.msra.mxu0 0.0
        %1830 = vmatprep.subr.mxu0 0.0
        %1831 = vmatpush1.msra.mxu0 0.0
        %1832 = vmatprep.subr.mxu0 0.0
        %1833 = vmatpush1.msra.mxu0 0.0
        %1834 = vmatprep.subr.mxu0 0.0
        %1835 = vmatpush1.msra.mxu0 0.0
        %1836 = vmatprep.subr.mxu0 0.0
        %1837 = vmatpush1.msra.mxu0 0.0
        %1838 = vmatprep.subr.mxu0 0.0
        %1839 = vmatpush1.msra.mxu0 0.0
        %1840 = vmatprep.subr.mxu0 0.0
        %1841 = vmatpush1.msra.mxu0 0.0
        %1842 = vmatprep.subr.mxu0 0.0
        %1843 = vmatpush1.msra.mxu0 0.0
        %1844 = vmatprep.subr.mxu0 0.0
        %1845 = vmatpush1.msra.mxu0 0.0
        %1846 = vmatprep.subr.mxu0 0.0
        %1847 = vmatpush1.msra.mxu0 0.0
        %1848 = vmatprep.subr.mxu0 0.0
        %1849 = vmatpush1.msra.mxu0 0.0
        %1850 = vmatprep.subr.mxu0 0.0
        %1851 = vmatpush1.msra.mxu0 0.0
        %1852 = vmatprep.subr.mxu0 0.0
        %1853 = vmatpush1.msra.mxu0 0.0
        %1854 = vmatprep.subr.mxu0 0.0
        %1855 = vmatpush1.msra.mxu0 0.0
        %1856 = vmatprep.subr.mxu0 0.0
        %1857 = vmatpush1.msra.mxu0 0.0
        %1858 = vmatprep.subr.mxu0 0.0
        %1859 = vmatpush1.msra.mxu0 0.0
        %1860 = vmatprep.subr.mxu0 0.0
        %1861 = vmatpush1.msra.mxu0 0.0
        %1862 = vmatprep.subr.mxu0 0.0
        %1863 = vmatpush1.msra.mxu0 0.0
        %1864 = vmatprep.subr.mxu0 0.0
        %1865 = vmatpush1.msra.mxu0 0.0
        %1866 = vmatprep.subr.mxu0 0.0
        %1867 = vmatpush1.msra.mxu0 0.0
        %1868 = vmatprep.subr.mxu0 0.0
        %1869 = vmatpush1.msra.mxu0 0.0
        %1870 = vmatprep.subr.mxu0 0.0
        %1871 = vmatpush1.msra.mxu0 0.0
        %1872 = vmatprep.subr.mxu0 0.0
        %1873 = vmatpush1.msra.mxu0 0.0
        %1874 = vmatprep.subr.mxu0 0.0
        %1875 = vmatpush1.msra.mxu0 0.0
        %1876 = vmatprep.subr.mxu0 0.0
        %1877 = vmatpush1.msra.mxu0 0.0
        %1878 = vmatprep.subr.mxu0 0.0
        %1879 = vmatpush1.msra.mxu0 0.0
        %1880 = vmatprep.subr.mxu0 0.0
        %1881 = vmatpush1.msra.mxu0 0.0
        %1882 = vmatprep.mubr.f32.mxu0 0.0
        %1883 = vmatmul.mubr.f32.gmra.mrb[0].mxu0 %v1613
        %v1884 = vpop.f32.mrb[0].mxu0
        %v1885 = vadd.f32 0.0, %v1884
        %v1886 = vpop.f32.mrb[0].mxu0
        %v1887 = vadd.f32 0.0, %v1886
        %1888 = vmatprep.mubr.f32.mxu0 0.0
        %1889 = vmatmul.mubr.f32.gmra.mrb[0].mxu0 %v1615
        %v1890 = vpop.f32.mrb[0].mxu0
        %v1891 = vadd.f32 0.0, %v1890
        %v1892 = vpop.f32.mrb[0].mxu0
        %v1893 = vadd.f32 0.0, %v1892
        %1894 = vmatprep.mubr.f32.mxu0 0.0
        %1895 = vmatmul.mubr.f32.gmra.mrb[0].mxu0 %v1617
        %v1896 = vpop.f32.mrb[0].mxu0
        %v1897 = vadd.f32 0.0, %v1896
        %v1898 = vpop.f32.mrb[0].mxu0
        %v1899 = vadd.f32 0.0, %v1898
        %1900 = vmatprep.mubr.f32.mxu0 0.0
        %1901 = vmatmul.mubr.f32.gmra.mrb[0].mxu0 %v1619
        %v1902 = vpop.f32.mrb[0].mxu0
        %v1903 = vadd.f32 0.0, %v1902
        %v1904 = vpop.f32.mrb[0].mxu0
        %v1905 = vadd.f32 0.0, %v1904
        %1906 = vmatprep.mubr.f32.mxu0 0.0
        %1907 = vmatmul.mubr.f32.gmra.mrb[0].mxu0 %v1621
        %v1908 = vpop.f32.mrb[0].mxu0
        %v1909 = vadd.f32 0.0, %v1908
        %v1910 = vpop.f32.mrb[0].mxu0
        %v1911 = vadd.f32 0.0, %v1910
        %1912 = vmatprep.mubr.f32.mxu0 0.0
        %1913 = vmatmul.mubr.f32.gmra.mrb[0].mxu0 %v1623
        %v1914 = vpop.f32.mrb[0].mxu0
        %v1915 = vadd.f32 0.0, %v1914
        %v1916 = vpop.f32.mrb[0].mxu0
        %v1917 = vadd.f32 0.0, %v1916
        %1918 = vmatprep.mubr.f32.mxu0 0.0
        %1919 = vmatmul.mubr.f32.gmra.mrb[0].mxu0 %v1625
        %v1920 = vpop.f32.mrb[0].mxu0
        %v1921 = vadd.f32 0.0, %v1920
        %v1922 = vpop.f32.mrb[0].mxu0
        %v1923 = vadd.f32 0.0, %v1922
        %1924 = vmatprep.mubr.f32.mxu0 0.0
        %1925 = vmatmul.mubr.f32.gmra.mrb[0].mxu0 %v1627
        %v1926 = vpop.f32.mrb[0].mxu0
        %v1927 = vadd.f32 0.0, %v1926
        %v1928 = vpop.f32.mrb[0].mxu0
        %v1929 = vadd.f32 0.0, %v1928
        %1930 = vmatprep.mubr.f32.mxu0 0.0
        %1931 = vmatmul.mubr.f32.gmra.mrb[0].mxu0 %v1629
        %v1932 = vpop.f32.mrb[0].mxu0
        %v1933 = vadd.f32 0.0, %v1932
        %v1934 = vpop.f32.mrb[0].mxu0
        %v1935 = vadd.f32 0.0, %v1934
        %1936 = vmatprep.mubr.f32.mxu0 0.0
        %1937 = vmatmul.mubr.f32.gmra.mrb[0].mxu0 %v1631
        %v1938 = vpop.f32.mrb[0].mxu0
        %v1939 = vadd.f32 0.0, %v1938
        %v1940 = vpop.f32.mrb[0].mxu0
        %v1941 = vadd.f32 0.0, %v1940
        %1942 = vmatprep.mubr.f32.mxu0 0.0
        %1943 = vmatmul.mubr.f32.gmra.mrb[0].mxu0 %v1633
        %v1944 = vpop.f32.mrb[0].mxu0
        %v1945 = vadd.f32 0.0, %v1944
        %v1946 = vpop.f32.mrb[0].mxu0
        %v1947 = vadd.f32 0.0, %v1946
        %1948 = vmatprep.mubr.f32.mxu0 0.0
        %1949 = vmatmul.mubr.f32.gmra.mrb[0].mxu0 %v1635
        %v1950 = vpop.f32.mrb[0].mxu0
        %v1951 = vadd.f32 0.0, %v1950
        %v1952 = vpop.f32.mrb[0].mxu0
        %v1953 = vadd.f32 0.0, %v1952
        %1954 = vmatprep.mubr.f32.mxu0 0.0
        %1955 = vmatmul.mubr.f32.gmra.mrb[0].mxu0 %v1637
        %v1956 = vpop.f32.mrb[0].mxu0
        %v1957 = vadd.f32 0.0, %v1956
        %v1958 = vpop.f32.mrb[0].mxu0
        %v1959 = vadd.f32 0.0, %v1958
        %1960 = vmatprep.mubr.f32.mxu0 0.0
        %1961 = vmatmul.mubr.f32.gmra.mrb[0].mxu0 %v1639
        %v1962 = vpop.f32.mrb[0].mxu0
        %v1963 = vadd.f32 0.0, %v1962
        %v1964 = vpop.f32.mrb[0].mxu0
        %v1965 = vadd.f32 0.0, %v1964
        %1966 = vmatprep.mubr.f32.mxu0 0.0
        %1967 = vmatmul.mubr.f32.gmra.mrb[0].mxu0 %v1641
        %v1968 = vpop.f32.mrb[0].mxu0
        %v1969 = vadd.f32 0.0, %v1968
        %v1970 = vpop.f32.mrb[0].mxu0
        %v1971 = vadd.f32 0.0, %v1970
        %1972 = vmatprep.mubr.f32.mxu0 0.0
        %1973 = vmatmul.mubr.f32.gmra.mrb[0].mxu0 %v1643
        %v1974 = vpop.f32.mrb[0].mxu0
        %v1975 = vadd.f32 0.0, %v1974
        %v1976 = vpop.f32.mrb[0].mxu0
        %v1977 = vadd.f32 0.0, %v1976
        %1978 = vdwg.mxu0
        %v1979 = vadd.f32 %v1500, %v1724
        %v1980 = vadd.f32 %v1501, %v1726
        %v1981 = vadd.f32 %v1502, %v1885
        %v1982 = vadd.f32 %v1503, %v1887
        %v1983 = vadd.f32 %v1504, %v1730
        %v1984 = vadd.f32 %v1505, %v1732
        %v1985 = vadd.f32 %v1506, %v1891
        %v1986 = vadd.f32 %v1507, %v1893
        %v1987 = vadd.f32 %v1508, %v1736
        %v1988 = vadd.f32 %v1509, %v1738
        %v1989 = vadd.f32 %v1510, %v1897
        %v1990 = vadd.f32 %v1511, %v1899
        %v1991 = vadd.f32 %v1512, %v1742
        %v1992 = vadd.f32 %v1513, %v1744
        %v1993 = vadd.f32 %v1514, %v1903
        %v1994 = vadd.f32 %v1515, %v1905
        %v1995 = vadd.f32 %v1516, %v1748
        %v1996 = vadd.f32 %v1517, %v1750
        %v1997 = vadd.f32 %v1518, %v1909
        %v1998 = vadd.f32 %v1519, %v1911
        %v1999 = vadd.f32 %v1520, %v1754
        %v2000 = vadd.f32 %v1521, %v1756
        %v2001 = vadd.f32 %v1522, %v1915
        %v2002 = vadd.f32 %v1523, %v1917
        %v2003 = vadd.f32 %v1524, %v1760
        %v2004 = vadd.f32 %v1525, %v1762
        %v2005 = vadd.f32 %v1526, %v1921
        %v2006 = vadd.f32 %v1527, %v1923
        %v2007 = vadd.f32 %v1528, %v1766
        %v2008 = vadd.f32 %v1529, %v1768
        %v2009 = vadd.f32 %v1530, %v1927
        %v2010 = vadd.f32 %v1531, %v1929
        %v2011 = vadd.f32 %v1532, %v1772
        %v2012 = vadd.f32 %v1533, %v1774
        %v2013 = vadd.f32 %v1534, %v1933
        %v2014 = vadd.f32 %v1535, %v1935
        %v2015 = vadd.f32 %v1536, %v1778
        %v2016 = vadd.f32 %v1537, %v1780
        %v2017 = vadd.f32 %v1538, %v1939
        %v2018 = vadd.f32 %v1539, %v1941
        %v2019 = vadd.f32 %v1540, %v1784
        %v2020 = vadd.f32 %v1541, %v1786
        %v2021 = vadd.f32 %v1542, %v1945
        %v2022 = vadd.f32 %v1543, %v1947
        %v2023 = vadd.f32 %v1544, %v1790
        %v2024 = vadd.f32 %v1545, %v1792
        %v2025 = vadd.f32 %v1546, %v1951
        %v2026 = vadd.f32 %v1547, %v1953
        %v2027 = vadd.f32 %v1548, %v1796
        %v2028 = vadd.f32 %v1549, %v1798
        %v2029 = vadd.f32 %v1550, %v1957
        %v2030 = vadd.f32 %v1551, %v1959
        %v2031 = vadd.f32 %v1552, %v1802
        %v2032 = vadd.f32 %v1553, %v1804
        %v2033 = vadd.f32 %v1554, %v1963
        %v2034 = vadd.f32 %v1555, %v1965
        %v2035 = vadd.f32 %v1556, %v1808
        %v2036 = vadd.f32 %v1557, %v1810
        %v2037 = vadd.f32 %v1558, %v1969
        %v2038 = vadd.f32 %v1559, %v1971
        %v2039 = vadd.f32 %v1560, %v1814
        %v2040 = vadd.f32 %v1561, %v1816
        %v2041 = vadd.f32 %v1562, %v1975
        %v2042 = vadd.f32 %v1563, %v1977
        %s2043 = scalar_lea.vmem [#allocation2], 512
        %v2044 = vld [vmem:[%s2043] sm:$0xff]
        %v2045 = vld [vmem:[%s2043 + $0x8] sm:$0xff]
        %v2046 = vld [vmem:[%s2043 + $0x10] sm:$0xff]
        %v2047 = vld [vmem:[%s2043 + $0x18] sm:$0xff]
        %v2048 = vld [vmem:[%s2043 + $0x20] sm:$0xff]
        %v2049 = vld [vmem:[%s2043 + $0x28] sm:$0xff]
        %v2050 = vld [vmem:[%s2043 + $0x30] sm:$0xff]
        %v2051 = vld [vmem:[%s2043 + $0x38] sm:$0xff]
        %v2052 = vld [vmem:[%s2043 + $0x40] sm:$0xff]
        %v2053 = vld [vmem:[%s2043 + $0x48] sm:$0xff]
        %v2054 = vld [vmem:[%s2043 + $0x50] sm:$0xff]
        %v2055 = vld [vmem:[%s2043 + $0x58] sm:$0xff]
        %v2056 = vld [vmem:[%s2043 + $0x60] sm:$0x3f]
        %v2057 = vld [vmem:[%s2043 + $0x68] sm:$0x3f]
        %v2058 = vld [vmem:[%s2043 + $0x70] sm:$0x3f]
        %v2059 = vld [vmem:[%s2043 + $0x78] sm:$0x3f]
        %vm2060 = vcmask 1043456
        %v2061 = vrot.slane %v255, 4
        %v2062 = vrot.slane %v256, 4
        %v2063 = vsel %vm2060, %v2061, %v2062
        %v2064 = vrot.slane %v257, 4
        %v2065 = vsel %vm2060, %v2062, %v2064
        %v2066 = vrot.slane %v258, 4
        %v2067 = vsel %vm2060, %v2064, %v2066
        %v2068 = vrot.slane %v259, 4
        %v2069 = vsel %vm2060, %v2066, %v2068
        %v2070 = vrot.slane %v260, 4
        %v2071 = vsel %vm2060, %v2068, %v2070
        %v2072 = vrot.slane %v261, 4
        %v2073 = vsel %vm2060, %v2070, %v2072
        %v2074 = vrot.slane %v262, 4
        %v2075 = vsel %vm2060, %v2072, %v2074
        %v2076 = vrot.slane %v263, 4
        %v2077 = vsel %vm2060, %v2074, %v2076
        %v2078 = vrot.slane %v264, 4
        %v2079 = vsel %vm2060, %v2076, %v2078
        %v2080 = vrot.slane %v265, 4
        %v2081 = vsel %vm2060, %v2078, %v2080
        %v2082 = vrot.slane %v266, 4
        %v2083 = vsel %vm2060, %v2080, %v2082
        %v2084 = vrot.slane %v267, 4
        %v2085 = vsel %vm2060, %v2082, %v2084
        %v2086 = vrot.slane %v268, 4
        %v2087 = vsel %vm2060, %v2084, %v2086
        %v2088 = vrot.slane %v269, 4
        %v2089 = vsel %vm2060, %v2086, %v2088
        %v2090 = vrot.slane %v270, 4
        %v2091 = vsel %vm2060, %v2088, %v2090
        %v2092 = vsel %vm352, %v2063, 0
        %v2094 = vsel %vm352, %v2065, 0
        %v2096 = vsel %vm352, %v2067, 0
        %v2098 = vsel %vm352, %v2069, 0
        %v2100 = vsel %vm352, %v2071, 0
        %v2102 = vsel %vm352, %v2073, 0
        %v2104 = vsel %vm352, %v2075, 0
        %v2106 = vsel %vm352, %v2077, 0
        %v2108 = vsel %vm352, %v2079, 0
        %v2110 = vsel %vm352, %v2081, 0
        %v2112 = vsel %vm352, %v2083, 0
        %v2114 = vsel %vm352, %v2085, 0
        %v2116 = vsel %vm352, %v2087, 0
        %v2118 = vsel %vm352, %v2089, 0
        %v2120 = vsel %vm352, %v2091, 0
        %v2122 = vsel %vm352, %v2090, 0
        %v2125 = vsel %vm385, %v2056, 0
        %v2128 = vsel %vm385, %v2057, 0
        %v2131 = vsel %vm385, %v2058, 0
        %v2134 = vsel %vm385, %v2059, 0
        %2136 = vmatprep.subr.mxu0 %v2045
        %2137 = vmatpush1.msra.mxu0 %v2044
        %2138 = vmatprep.subr.mxu0 %v2049
        %2139 = vmatpush1.msra.mxu0 %v2048
        %2140 = vmatprep.subr.mxu0 %v2053
        %2141 = vmatpush1.msra.mxu0 %v2052
        %2142 = vmatprep.subr.mxu0 %v2128
        %2143 = vmatpush1.msra.mxu0 %v2125
        %2144 = vmatprep.subr.mxu0 0.0
        %2145 = vmatpush1.msra.mxu0 0.0
        %2146 = vmatprep.subr.mxu0 0.0
        %2147 = vmatpush1.msra.mxu0 0.0
        %2148 = vmatprep.subr.mxu0 0.0
        %2149 = vmatpush1.msra.mxu0 0.0
        %2150 = vmatprep.subr.mxu0 0.0
        %2151 = vmatpush1.msra.mxu0 0.0
        %2152 = vmatprep.subr.mxu0 0.0
        %2153 = vmatpush1.msra.mxu0 0.0
        %2154 = vmatprep.subr.mxu0 0.0
        %2155 = vmatpush1.msra.mxu0 0.0
        %2156 = vmatprep.subr.mxu0 0.0
        %2157 = vmatpush1.msra.mxu0 0.0
        %2158 = vmatprep.subr.mxu0 0.0
        %2159 = vmatpush1.msra.mxu0 0.0
        %2160 = vmatprep.subr.mxu0 0.0
        %2161 = vmatpush1.msra.mxu0 0.0
        %2162 = vmatprep.subr.mxu0 0.0
        %2163 = vmatpush1.msra.mxu0 0.0
        %2164 = vmatprep.subr.mxu0 0.0
        %2165 = vmatpush1.msra.mxu0 0.0
        %2166 = vmatprep.subr.mxu0 0.0
        %2167 = vmatpush1.msra.mxu0 0.0
        %2168 = vmatprep.subr.mxu0 0.0
        %2169 = vmatpush1.msra.mxu0 0.0
        %2170 = vmatprep.subr.mxu0 0.0
        %2171 = vmatpush1.msra.mxu0 0.0
        %2172 = vmatprep.subr.mxu0 0.0
        %2173 = vmatpush1.msra.mxu0 0.0
        %2174 = vmatprep.subr.mxu0 0.0
        %2175 = vmatpush1.msra.mxu0 0.0
        %2176 = vmatprep.subr.mxu0 0.0
        %2177 = vmatpush1.msra.mxu0 0.0
        %2178 = vmatprep.subr.mxu0 0.0
        %2179 = vmatpush1.msra.mxu0 0.0
        %2180 = vmatprep.subr.mxu0 0.0
        %2181 = vmatpush1.msra.mxu0 0.0
        %2182 = vmatprep.subr.mxu0 0.0
        %2183 = vmatpush1.msra.mxu0 0.0
        %2184 = vmatprep.subr.mxu0 0.0
        %2185 = vmatpush1.msra.mxu0 0.0
        %2186 = vmatprep.subr.mxu0 0.0
        %2187 = vmatpush1.msra.mxu0 0.0
        %2188 = vmatprep.subr.mxu0 0.0
        %2189 = vmatpush1.msra.mxu0 0.0
        %2190 = vmatprep.subr.mxu0 0.0
        %2191 = vmatpush1.msra.mxu0 0.0
        %2192 = vmatprep.subr.mxu0 0.0
        %2193 = vmatpush1.msra.mxu0 0.0
        %2194 = vmatprep.subr.mxu0 0.0
        %2195 = vmatpush1.msra.mxu0 0.0
        %2196 = vmatprep.subr.mxu0 0.0
        %2197 = vmatpush1.msra.mxu0 0.0
        %2198 = vmatprep.subr.mxu0 0.0
        %2199 = vmatpush1.msra.mxu0 0.0
        %2200 = vmatprep.mubr.f32.mxu0 0.0
        %2201 = vmatmul.mubr.f32.gmra.mrb[0].mxu0 %v2092
        %v2202 = vpop.f32.mrb[0].mxu0
        %v2203 = vadd.f32 0.0, %v2202
        %v2204 = vpop.f32.mrb[0].mxu0
        %v2205 = vadd.f32 0.0, %v2204
        %2206 = vmatprep.mubr.f32.mxu0 0.0
        %2207 = vmatmul.mubr.f32.gmra.mrb[0].mxu0 %v2094
        %v2208 = vpop.f32.mrb[0].mxu0
        %v2209 = vadd.f32 0.0, %v2208
        %v2210 = vpop.f32.mrb[0].mxu0
        %v2211 = vadd.f32 0.0, %v2210
        %2212 = vmatprep.mubr.f32.mxu0 0.0
        %2213 = vmatmul.mubr.f32.gmra.mrb[0].mxu0 %v2096
        %v2214 = vpop.f32.mrb[0].mxu0
        %v2215 = vadd.f32 0.0, %v2214
        %v2216 = vpop.f32.mrb[0].mxu0
        %v2217 = vadd.f32 0.0, %v2216
        %2218 = vmatprep.mubr.f32.mxu0 0.0
        %2219 = vmatmul.mubr.f32.gmra.mrb[0].mxu0 %v2098
        %v2220 = vpop.f32.mrb[0].mxu0
        %v2221 = vadd.f32 0.0, %v2220
        %v2222 = vpop.f32.mrb[0].mxu0
        %v2223 = vadd.f32 0.0, %v2222
        %2224 = vmatprep.mubr.f32.mxu0 0.0
        %2225 = vmatmul.mubr.f32.gmra.mrb[0].mxu0 %v2100
        %v2226 = vpop.f32.mrb[0].mxu0
        %v2227 = vadd.f32 0.0, %v2226
        %v2228 = vpop.f32.mrb[0].mxu0
        %v2229 = vadd.f32 0.0, %v2228
        %2230 = vmatprep.mubr.f32.mxu0 0.0
        %2231 = vmatmul.mubr.f32.gmra.mrb[0].mxu0 %v2102
        %v2232 = vpop.f32.mrb[0].mxu0
        %v2233 = vadd.f32 0.0, %v2232
        %v2234 = vpop.f32.mrb[0].mxu0
        %v2235 = vadd.f32 0.0, %v2234
        %2236 = vmatprep.mubr.f32.mxu0 0.0
        %2237 = vmatmul.mubr.f32.gmra.mrb[0].mxu0 %v2104
        %v2238 = vpop.f32.mrb[0].mxu0
        %v2239 = vadd.f32 0.0, %v2238
        %v2240 = vpop.f32.mrb[0].mxu0
        %v2241 = vadd.f32 0.0, %v2240
        %2242 = vmatprep.mubr.f32.mxu0 0.0
        %2243 = vmatmul.mubr.f32.gmra.mrb[0].mxu0 %v2106
        %v2244 = vpop.f32.mrb[0].mxu0
        %v2245 = vadd.f32 0.0, %v2244
        %v2246 = vpop.f32.mrb[0].mxu0
        %v2247 = vadd.f32 0.0, %v2246
        %2248 = vmatprep.mubr.f32.mxu0 0.0
        %2249 = vmatmul.mubr.f32.gmra.mrb[0].mxu0 %v2108
        %v2250 = vpop.f32.mrb[0].mxu0
        %v2251 = vadd.f32 0.0, %v2250
        %v2252 = vpop.f32.mrb[0].mxu0
        %v2253 = vadd.f32 0.0, %v2252
        %2254 = vmatprep.mubr.f32.mxu0 0.0
        %2255 = vmatmul.mubr.f32.gmra.mrb[0].mxu0 %v2110
        %v2256 = vpop.f32.mrb[0].mxu0
        %v2257 = vadd.f32 0.0, %v2256
        %v2258 = vpop.f32.mrb[0].mxu0
        %v2259 = vadd.f32 0.0, %v2258
        %2260 = vmatprep.mubr.f32.mxu0 0.0
        %2261 = vmatmul.mubr.f32.gmra.mrb[0].mxu0 %v2112
        %v2262 = vpop.f32.mrb[0].mxu0
        %v2263 = vadd.f32 0.0, %v2262
        %v2264 = vpop.f32.mrb[0].mxu0
        %v2265 = vadd.f32 0.0, %v2264
        %2266 = vmatprep.mubr.f32.mxu0 0.0
        %2267 = vmatmul.mubr.f32.gmra.mrb[0].mxu0 %v2114
        %v2268 = vpop.f32.mrb[0].mxu0
        %v2269 = vadd.f32 0.0, %v2268
        %v2270 = vpop.f32.mrb[0].mxu0
        %v2271 = vadd.f32 0.0, %v2270
        %2272 = vmatprep.mubr.f32.mxu0 0.0
        %2273 = vmatmul.mubr.f32.gmra.mrb[0].mxu0 %v2116
        %v2274 = vpop.f32.mrb[0].mxu0
        %v2275 = vadd.f32 0.0, %v2274
        %v2276 = vpop.f32.mrb[0].mxu0
        %v2277 = vadd.f32 0.0, %v2276
        %2278 = vmatprep.mubr.f32.mxu0 0.0
        %2279 = vmatmul.mubr.f32.gmra.mrb[0].mxu0 %v2118
        %v2280 = vpop.f32.mrb[0].mxu0
        %v2281 = vadd.f32 0.0, %v2280
        %v2282 = vpop.f32.mrb[0].mxu0
        %v2283 = vadd.f32 0.0, %v2282
        %2284 = vmatprep.mubr.f32.mxu0 0.0
        %2285 = vmatmul.mubr.f32.gmra.mrb[0].mxu0 %v2120
        %v2286 = vpop.f32.mrb[0].mxu0
        %v2287 = vadd.f32 0.0, %v2286
        %v2288 = vpop.f32.mrb[0].mxu0
        %v2289 = vadd.f32 0.0, %v2288
        %2290 = vmatprep.mubr.f32.mxu0 0.0
        %2291 = vmatmul.mubr.f32.gmra.mrb[0].mxu0 %v2122
        %v2292 = vpop.f32.mrb[0].mxu0
        %v2293 = vadd.f32 0.0, %v2292
        %v2294 = vpop.f32.mrb[0].mxu0
        %v2295 = vadd.f32 0.0, %v2294
        %2296 = vdwg.mxu0
        %2297 = vmatprep.subr.mxu0 %v2047
        %2298 = vmatpush1.msra.mxu0 %v2046
        %2299 = vmatprep.subr.mxu0 %v2051
        %2300 = vmatpush1.msra.mxu0 %v2050
        %2301 = vmatprep.subr.mxu0 %v2055
        %2302 = vmatpush1.msra.mxu0 %v2054
        %2303 = vmatprep.subr.mxu0 %v2134
        %2304 = vmatpush1.msra.mxu0 %v2131
        %2305 = vmatprep.subr.mxu0 0.0
        %2306 = vmatpush1.msra.mxu0 0.0
        %2307 = vmatprep.subr.mxu0 0.0
        %2308 = vmatpush1.msra.mxu0 0.0
        %2309 = vmatprep.subr.mxu0 0.0
        %2310 = vmatpush1.msra.mxu0 0.0
        %2311 = vmatprep.subr.mxu0 0.0
        %2312 = vmatpush1.msra.mxu0 0.0
        %2313 = vmatprep.subr.mxu0 0.0
        %2314 = vmatpush1.msra.mxu0 0.0
        %2315 = vmatprep.subr.mxu0 0.0
        %2316 = vmatpush1.msra.mxu0 0.0
        %2317 = vmatprep.subr.mxu0 0.0
        %2318 = vmatpush1.msra.mxu0 0.0
        %2319 = vmatprep.subr.mxu0 0.0
        %2320 = vmatpush1.msra.mxu0 0.0
        %2321 = vmatprep.subr.mxu0 0.0
        %2322 = vmatpush1.msra.mxu0 0.0
        %2323 = vmatprep.subr.mxu0 0.0
        %2324 = vmatpush1.msra.mxu0 0.0
        %2325 = vmatprep.subr.mxu0 0.0
        %2326 = vmatpush1.msra.mxu0 0.0
        %2327 = vmatprep.subr.mxu0 0.0
        %2328 = vmatpush1.msra.mxu0 0.0
        %2329 = vmatprep.subr.mxu0 0.0
        %2330 = vmatpush1.msra.mxu0 0.0
        %2331 = vmatprep.subr.mxu0 0.0
        %2332 = vmatpush1.msra.mxu0 0.0
        %2333 = vmatprep.subr.mxu0 0.0
        %2334 = vmatpush1.msra.mxu0 0.0
        %2335 = vmatprep.subr.mxu0 0.0
        %2336 = vmatpush1.msra.mxu0 0.0
        %2337 = vmatprep.subr.mxu0 0.0
        %2338 = vmatpush1.msra.mxu0 0.0
        %2339 = vmatprep.subr.mxu0 0.0
        %2340 = vmatpush1.msra.mxu0 0.0
        %2341 = vmatprep.subr.mxu0 0.0
        %2342 = vmatpush1.msra.mxu0 0.0
        %2343 = vmatprep.subr.mxu0 0.0
        %2344 = vmatpush1.msra.mxu0 0.0
        %2345 = vmatprep.subr.mxu0 0.0
        %2346 = vmatpush1.msra.mxu0 0.0
        %2347 = vmatprep.subr.mxu0 0.0
        %2348 = vmatpush1.msra.mxu0 0.0
        %2349 = vmatprep.subr.mxu0 0.0
        %2350 = vmatpush1.msra.mxu0 0.0
        %2351 = vmatprep.subr.mxu0 0.0
        %2352 = vmatpush1.msra.mxu0 0.0
        %2353 = vmatprep.subr.mxu0 0.0
        %2354 = vmatpush1.msra.mxu0 0.0
        %2355 = vmatprep.subr.mxu0 0.0
        %2356 = vmatpush1.msra.mxu0 0.0
        %2357 = vmatprep.subr.mxu0 0.0
        %2358 = vmatpush1.msra.mxu0 0.0
        %2359 = vmatprep.subr.mxu0 0.0
        %2360 = vmatpush1.msra.mxu0 0.0
        %2361 = vmatprep.mubr.f32.mxu0 0.0
        %2362 = vmatmul.mubr.f32.gmra.mrb[0].mxu0 %v2092
        %v2363 = vpop.f32.mrb[0].mxu0
        %v2364 = vadd.f32 0.0, %v2363
        %v2365 = vpop.f32.mrb[0].mxu0
        %v2366 = vadd.f32 0.0, %v2365
        %2367 = vmatprep.mubr.f32.mxu0 0.0
        %2368 = vmatmul.mubr.f32.gmra.mrb[0].mxu0 %v2094
        %v2369 = vpop.f32.mrb[0].mxu0
        %v2370 = vadd.f32 0.0, %v2369
        %v2371 = vpop.f32.mrb[0].mxu0
        %v2372 = vadd.f32 0.0, %v2371
        %2373 = vmatprep.mubr.f32.mxu0 0.0
        %2374 = vmatmul.mubr.f32.gmra.mrb[0].mxu0 %v2096
        %v2375 = vpop.f32.mrb[0].mxu0
        %v2376 = vadd.f32 0.0, %v2375
        %v2377 = vpop.f32.mrb[0].mxu0
        %v2378 = vadd.f32 0.0, %v2377
        %2379 = vmatprep.mubr.f32.mxu0 0.0
        %2380 = vmatmul.mubr.f32.gmra.mrb[0].mxu0 %v2098
        %v2381 = vpop.f32.mrb[0].mxu0
        %v2382 = vadd.f32 0.0, %v2381
        %v2383 = vpop.f32.mrb[0].mxu0
        %v2384 = vadd.f32 0.0, %v2383
        %2385 = vmatprep.mubr.f32.mxu0 0.0
        %2386 = vmatmul.mubr.f32.gmra.mrb[0].mxu0 %v2100
        %v2387 = vpop.f32.mrb[0].mxu0
        %v2388 = vadd.f32 0.0, %v2387
        %v2389 = vpop.f32.mrb[0].mxu0
        %v2390 = vadd.f32 0.0, %v2389
        %2391 = vmatprep.mubr.f32.mxu0 0.0
        %2392 = vmatmul.mubr.f32.gmra.mrb[0].mxu0 %v2102
        %v2393 = vpop.f32.mrb[0].mxu0
        %v2394 = vadd.f32 0.0, %v2393
        %v2395 = vpop.f32.mrb[0].mxu0
        %v2396 = vadd.f32 0.0, %v2395
        %2397 = vmatprep.mubr.f32.mxu0 0.0
        %2398 = vmatmul.mubr.f32.gmra.mrb[0].mxu0 %v2104
        %v2399 = vpop.f32.mrb[0].mxu0
        %v2400 = vadd.f32 0.0, %v2399
        %v2401 = vpop.f32.mrb[0].mxu0
        %v2402 = vadd.f32 0.0, %v2401
        %2403 = vmatprep.mubr.f32.mxu0 0.0
        %2404 = vmatmul.mubr.f32.gmra.mrb[0].mxu0 %v2106
        %v2405 = vpop.f32.mrb[0].mxu0
        %v2406 = vadd.f32 0.0, %v2405
        %v2407 = vpop.f32.mrb[0].mxu0
        %v2408 = vadd.f32 0.0, %v2407
        %2409 = vmatprep.mubr.f32.mxu0 0.0
        %2410 = vmatmul.mubr.f32.gmra.mrb[0].mxu0 %v2108
        %v2411 = vpop.f32.mrb[0].mxu0
        %v2412 = vadd.f32 0.0, %v2411
        %v2413 = vpop.f32.mrb[0].mxu0
        %v2414 = vadd.f32 0.0, %v2413
        %2415 = vmatprep.mubr.f32.mxu0 0.0
        %2416 = vmatmul.mubr.f32.gmra.mrb[0].mxu0 %v2110
        %v2417 = vpop.f32.mrb[0].mxu0
        %v2418 = vadd.f32 0.0, %v2417
        %v2419 = vpop.f32.mrb[0].mxu0
        %v2420 = vadd.f32 0.0, %v2419
        %2421 = vmatprep.mubr.f32.mxu0 0.0
        %2422 = vmatmul.mubr.f32.gmra.mrb[0].mxu0 %v2112
        %v2423 = vpop.f32.mrb[0].mxu0
        %v2424 = vadd.f32 0.0, %v2423
        %v2425 = vpop.f32.mrb[0].mxu0
        %v2426 = vadd.f32 0.0, %v2425
        %2427 = vmatprep.mubr.f32.mxu0 0.0
        %2428 = vmatmul.mubr.f32.gmra.mrb[0].mxu0 %v2114
        %v2429 = vpop.f32.mrb[0].mxu0
        %v2430 = vadd.f32 0.0, %v2429
        %v2431 = vpop.f32.mrb[0].mxu0
        %v2432 = vadd.f32 0.0, %v2431
        %2433 = vmatprep.mubr.f32.mxu0 0.0
        %2434 = vmatmul.mubr.f32.gmra.mrb[0].mxu0 %v2116
        %v2435 = vpop.f32.mrb[0].mxu0
        %v2436 = vadd.f32 0.0, %v2435
        %v2437 = vpop.f32.mrb[0].mxu0
        %v2438 = vadd.f32 0.0, %v2437
        %2439 = vmatprep.mubr.f32.mxu0 0.0
        %2440 = vmatmul.mubr.f32.gmra.mrb[0].mxu0 %v2118
        %v2441 = vpop.f32.mrb[0].mxu0
        %v2442 = vadd.f32 0.0, %v2441
        %v2443 = vpop.f32.mrb[0].mxu0
        %v2444 = vadd.f32 0.0, %v2443
        %2445 = vmatprep.mubr.f32.mxu0 0.0
        %2446 = vmatmul.mubr.f32.gmra.mrb[0].mxu0 %v2120
        %v2447 = vpop.f32.mrb[0].mxu0
        %v2448 = vadd.f32 0.0, %v2447
        %v2449 = vpop.f32.mrb[0].mxu0
        %v2450 = vadd.f32 0.0, %v2449
        %2451 = vmatprep.mubr.f32.mxu0 0.0
        %2452 = vmatmul.mubr.f32.gmra.mrb[0].mxu0 %v2122
        %v2453 = vpop.f32.mrb[0].mxu0
        %v2454 = vadd.f32 0.0, %v2453
        %v2455 = vpop.f32.mrb[0].mxu0
        %v2456 = vadd.f32 0.0, %v2455
        %2457 = vdwg.mxu0
        %v2458 = vadd.f32 %v1979, %v2203
        %v2459 = vadd.f32 %v1980, %v2205
        %v2460 = vadd.f32 %v1981, %v2364
        %v2461 = vadd.f32 %v1982, %v2366
        %v2462 = vadd.f32 %v1983, %v2209
        %v2463 = vadd.f32 %v1984, %v2211
        %v2464 = vadd.f32 %v1985, %v2370
        %v2465 = vadd.f32 %v1986, %v2372
        %v2466 = vadd.f32 %v1987, %v2215
        %v2467 = vadd.f32 %v1988, %v2217
        %v2468 = vadd.f32 %v1989, %v2376
        %v2469 = vadd.f32 %v1990, %v2378
        %v2470 = vadd.f32 %v1991, %v2221
        %v2471 = vadd.f32 %v1992, %v2223
        %v2472 = vadd.f32 %v1993, %v2382
        %v2473 = vadd.f32 %v1994, %v2384
        %v2474 = vadd.f32 %v1995, %v2227
        %v2475 = vadd.f32 %v1996, %v2229
        %v2476 = vadd.f32 %v1997, %v2388
        %v2477 = vadd.f32 %v1998, %v2390
        %v2478 = vadd.f32 %v1999, %v2233
        %v2479 = vadd.f32 %v2000, %v2235
        %v2480 = vadd.f32 %v2001, %v2394
        %v2481 = vadd.f32 %v2002, %v2396
        %v2482 = vadd.f32 %v2003, %v2239
        %v2483 = vadd.f32 %v2004, %v2241
        %v2484 = vadd.f32 %v2005, %v2400
        %v2485 = vadd.f32 %v2006, %v2402
        %v2486 = vadd.f32 %v2007, %v2245
        %v2487 = vadd.f32 %v2008, %v2247
        %v2488 = vadd.f32 %v2009, %v2406
        %v2489 = vadd.f32 %v2010, %v2408
        %v2490 = vadd.f32 %v2011, %v2251
        %v2491 = vadd.f32 %v2012, %v2253
        %v2492 = vadd.f32 %v2013, %v2412
        %v2493 = vadd.f32 %v2014, %v2414
        %v2494 = vadd.f32 %v2015, %v2257
        %v2495 = vadd.f32 %v2016, %v2259
        %v2496 = vadd.f32 %v2017, %v2418
        %v2497 = vadd.f32 %v2018, %v2420
        %v2498 = vadd.f32 %v2019, %v2263
        %v2499 = vadd.f32 %v2020, %v2265
        %v2500 = vadd.f32 %v2021, %v2424
        %v2501 = vadd.f32 %v2022, %v2426
        %v2502 = vadd.f32 %v2023, %v2269
        %v2503 = vadd.f32 %v2024, %v2271
        %v2504 = vadd.f32 %v2025, %v2430
        %v2505 = vadd.f32 %v2026, %v2432
        %v2506 = vadd.f32 %v2027, %v2275
        %v2507 = vadd.f32 %v2028, %v2277
        %v2508 = vadd.f32 %v2029, %v2436
        %v2509 = vadd.f32 %v2030, %v2438
        %v2510 = vadd.f32 %v2031, %v2281
        %v2511 = vadd.f32 %v2032, %v2283
        %v2512 = vadd.f32 %v2033, %v2442
        %v2513 = vadd.f32 %v2034, %v2444
        %v2514 = vadd.f32 %v2035, %v2287
        %v2515 = vadd.f32 %v2036, %v2289
        %v2516 = vadd.f32 %v2037, %v2448
        %v2517 = vadd.f32 %v2038, %v2450
        %v2518 = vadd.f32 %v2039, %v2293
        %v2519 = vadd.f32 %v2040, %v2295
        %v2520 = vadd.f32 %v2041, %v2454
        %v2521 = vadd.f32 %v2042, %v2456
        %v2522 = vld [vmem:[%s2] sm:$0xf]
        %v2524 = vlaneseq
        %v2525 = vshrl.u32 %v2524, 7
        %v2526 = vsub.s32 0, %v2525
        %v2527 = vrot.slane %v2522, %v2526
        %v2528 = vlaneseq
        %v2529 = vshrl.u32 %v2528, 7
        %v2530 = vsub.s32 1, %v2529
        %v2531 = vrot.slane %v2522, %v2530
        %v2532 = vlaneseq
        %v2533 = vshrl.u32 %v2532, 7
        %v2534 = vsub.s32 2, %v2533
        %v2535 = vrot.slane %v2522, %v2534
        %v2536 = vlaneseq
        %v2537 = vshrl.u32 %v2536, 7
        %v2538 = vsub.s32 3, %v2537
        %v2539 = vrot.slane %v2522, %v2538
        %v2544 = vadd.f32 %v2458, %v2527
        %v2545 = vadd.f32 %v2459, %v2531
        %v2546 = vadd.f32 %v2460, %v2535
        %v2547 = vadd.f32 %v2461, %v2539
        %v2548 = vadd.f32 %v2462, %v2527
        %v2549 = vadd.f32 %v2463, %v2531
        %v2550 = vadd.f32 %v2464, %v2535
        %v2551 = vadd.f32 %v2465, %v2539
        %v2552 = vadd.f32 %v2466, %v2527
        %v2553 = vadd.f32 %v2467, %v2531
        %v2554 = vadd.f32 %v2468, %v2535
        %v2555 = vadd.f32 %v2469, %v2539
        %v2556 = vadd.f32 %v2470, %v2527
        %v2557 = vadd.f32 %v2471, %v2531
        %v2558 = vadd.f32 %v2472, %v2535
        %v2559 = vadd.f32 %v2473, %v2539
        %v2560 = vadd.f32 %v2474, %v2527
        %v2561 = vadd.f32 %v2475, %v2531
        %v2562 = vadd.f32 %v2476, %v2535
        %v2563 = vadd.f32 %v2477, %v2539
        %v2564 = vadd.f32 %v2478, %v2527
        %v2565 = vadd.f32 %v2479, %v2531
        %v2566 = vadd.f32 %v2480, %v2535
        %v2567 = vadd.f32 %v2481, %v2539
        %v2568 = vadd.f32 %v2482, %v2527
        %v2569 = vadd.f32 %v2483, %v2531
        %v2570 = vadd.f32 %v2484, %v2535
        %v2571 = vadd.f32 %v2485, %v2539
        %v2572 = vadd.f32 %v2486, %v2527
        %v2573 = vadd.f32 %v2487, %v2531
        %v2574 = vadd.f32 %v2488, %v2535
        %v2575 = vadd.f32 %v2489, %v2539
        %v2576 = vadd.f32 %v2490, %v2527
        %v2577 = vadd.f32 %v2491, %v2531
        %v2578 = vadd.f32 %v2492, %v2535
        %v2579 = vadd.f32 %v2493, %v2539
        %v2580 = vadd.f32 %v2494, %v2527
        %v2581 = vadd.f32 %v2495, %v2531
        %v2582 = vadd.f32 %v2496, %v2535
        %v2583 = vadd.f32 %v2497, %v2539
        %v2584 = vadd.f32 %v2498, %v2527
        %v2585 = vadd.f32 %v2499, %v2531
        %v2586 = vadd.f32 %v2500, %v2535
        %v2587 = vadd.f32 %v2501, %v2539
        %v2588 = vadd.f32 %v2502, %v2527
        %v2589 = vadd.f32 %v2503, %v2531
        %v2590 = vadd.f32 %v2504, %v2535
        %v2591 = vadd.f32 %v2505, %v2539
        %v2592 = vadd.f32 %v2506, %v2527
        %v2593 = vadd.f32 %v2507, %v2531
        %v2594 = vadd.f32 %v2508, %v2535
        %v2595 = vadd.f32 %v2509, %v2539
        %v2596 = vadd.f32 %v2510, %v2527
        %v2597 = vadd.f32 %v2511, %v2531
        %v2598 = vadd.f32 %v2512, %v2535
        %v2599 = vadd.f32 %v2513, %v2539
        %v2600 = vadd.f32 %v2514, %v2527
        %v2601 = vadd.f32 %v2515, %v2531
        %v2602 = vadd.f32 %v2516, %v2535
        %v2603 = vadd.f32 %v2517, %v2539
        %v2604 = vadd.f32 %v2518, %v2527
        %v2605 = vadd.f32 %v2519, %v2531
        %v2606 = vadd.f32 %v2520, %v2535
        %v2607 = vadd.f32 %v2521, %v2539
        %v2608 = vmax.f32 %v2544, 0.0
        %v2609 = vmax.f32 %v2545, 0.0
        %v2610 = vmax.f32 %v2546, 0.0
        %v2611 = vmax.f32 %v2547, 0.0
        %v2612 = vmax.f32 %v2548, 0.0
        %v2613 = vmax.f32 %v2549, 0.0
        %v2614 = vmax.f32 %v2550, 0.0
        %v2615 = vmax.f32 %v2551, 0.0
        %v2616 = vmax.f32 %v2552, 0.0
        %v2617 = vmax.f32 %v2553, 0.0
        %v2618 = vmax.f32 %v2554, 0.0
        %v2619 = vmax.f32 %v2555, 0.0
        %v2620 = vmax.f32 %v2556, 0.0
        %v2621 = vmax.f32 %v2557, 0.0
        %v2622 = vmax.f32 %v2558, 0.0
        %v2623 = vmax.f32 %v2559, 0.0
        %v2624 = vmax.f32 %v2560, 0.0
        %v2625 = vmax.f32 %v2561, 0.0
        %v2626 = vmax.f32 %v2562, 0.0
        %v2627 = vmax.f32 %v2563, 0.0
        %v2628 = vmax.f32 %v2564, 0.0
        %v2629 = vmax.f32 %v2565, 0.0
        %v2630 = vmax.f32 %v2566, 0.0
        %v2631 = vmax.f32 %v2567, 0.0
        %v2632 = vmax.f32 %v2568, 0.0
        %v2633 = vmax.f32 %v2569, 0.0
        %v2634 = vmax.f32 %v2570, 0.0
        %v2635 = vmax.f32 %v2571, 0.0
        %v2636 = vmax.f32 %v2572, 0.0
        %v2637 = vmax.f32 %v2573, 0.0
        %v2638 = vmax.f32 %v2574, 0.0
        %v2639 = vmax.f32 %v2575, 0.0
        %v2640 = vmax.f32 %v2576, 0.0
        %v2641 = vmax.f32 %v2577, 0.0
        %v2642 = vmax.f32 %v2578, 0.0
        %v2643 = vmax.f32 %v2579, 0.0
        %v2644 = vmax.f32 %v2580, 0.0
        %v2645 = vmax.f32 %v2581, 0.0
        %v2646 = vmax.f32 %v2582, 0.0
        %v2647 = vmax.f32 %v2583, 0.0
        %v2648 = vmax.f32 %v2584, 0.0
        %v2649 = vmax.f32 %v2585, 0.0
        %v2650 = vmax.f32 %v2586, 0.0
        %v2651 = vmax.f32 %v2587, 0.0
        %v2652 = vmax.f32 %v2588, 0.0
        %v2653 = vmax.f32 %v2589, 0.0
        %v2654 = vmax.f32 %v2590, 0.0
        %v2655 = vmax.f32 %v2591, 0.0
        %v2656 = vmax.f32 %v2592, 0.0
        %v2657 = vmax.f32 %v2593, 0.0
        %v2658 = vmax.f32 %v2594, 0.0
        %v2659 = vmax.f32 %v2595, 0.0
        %v2660 = vmax.f32 %v2596, 0.0
        %v2661 = vmax.f32 %v2597, 0.0
        %v2662 = vmax.f32 %v2598, 0.0
        %v2663 = vmax.f32 %v2599, 0.0
        %v2664 = vmax.f32 %v2600, 0.0
        %v2665 = vmax.f32 %v2601, 0.0
        %v2666 = vmax.f32 %v2602, 0.0
        %v2667 = vmax.f32 %v2603, 0.0
        %v2668 = vmax.f32 %v2604, 0.0
        %v2669 = vmax.f32 %v2605, 0.0
        %v2670 = vmax.f32 %v2606, 0.0
        %v2671 = vmax.f32 %v2607, 0.0
        %v2672 = vld [vmem:[#allocation4] sm:$0xff]
        %v2673 = vld [vmem:[#allocation4 + $0x8] sm:$0xff]
        %v2674 = vld [vmem:[#allocation4 + $0x10] sm:$0xff]
        %v2675 = vld [vmem:[#allocation4 + $0x18] sm:$0xff]
        %v2676 = vld [vmem:[#allocation4 + $0x20] sm:$0xff]
        %v2677 = vld [vmem:[#allocation4 + $0x28] sm:$0xff]
        %v2678 = vld [vmem:[#allocation4 + $0x30] sm:$0xff]
        %v2679 = vld [vmem:[#allocation4 + $0x38] sm:$0xff]
        %v2680 = vld [vmem:[#allocation4 + $0x40] sm:$0xff]
        %v2681 = vld [vmem:[#allocation4 + $0x48] sm:$0xff]
        %v2682 = vld [vmem:[#allocation4 + $0x50] sm:$0xff]
        %v2683 = vld [vmem:[#allocation4 + $0x58] sm:$0xff]
        %v2684 = vld [vmem:[#allocation4 + $0x60] sm:$0xff]
        %v2685 = vld [vmem:[#allocation4 + $0x68] sm:$0xff]
        %v2686 = vld [vmem:[#allocation4 + $0x70] sm:$0xff]
        %v2687 = vld [vmem:[#allocation4 + $0x78] sm:$0xff]
        %v2688 = vld [vmem:[#allocation4 + $0x80] sm:$0xff]
        %v2689 = vld [vmem:[#allocation4 + $0x88] sm:$0xff]
        %v2690 = vld [vmem:[#allocation4 + $0x90] sm:$0xff]
        %v2691 = vld [vmem:[#allocation4 + $0x98] sm:$0xff]
        %v2692 = vld [vmem:[#allocation4 + $0xa0] sm:$0xff]
        %v2693 = vld [vmem:[#allocation4 + $0xa8] sm:$0xff]
        %v2694 = vld [vmem:[#allocation4 + $0xb0] sm:$0xff]
        %v2695 = vld [vmem:[#allocation4 + $0xb8] sm:$0xff]
        %v2696 = vld [vmem:[#allocation4 + $0xc0] sm:$0xff]
        %v2697 = vld [vmem:[#allocation4 + $0xc8] sm:$0xff]
        %v2698 = vld [vmem:[#allocation4 + $0xd0] sm:$0xff]
        %v2699 = vld [vmem:[#allocation4 + $0xd8] sm:$0xff]
        %v2700 = vld [vmem:[#allocation4 + $0xe0] sm:$0xff]
        %v2701 = vld [vmem:[#allocation4 + $0xe8] sm:$0xff]
        %v2702 = vld [vmem:[#allocation4 + $0xf0] sm:$0xff]
        %v2703 = vld [vmem:[#allocation4 + $0xf8] sm:$0xff]
        %v2704 = vld [vmem:[#allocation4 + $0x100] sm:$0xff]
        %v2705 = vld [vmem:[#allocation4 + $0x108] sm:$0xff]
        %v2706 = vld [vmem:[#allocation4 + $0x110] sm:$0xff]
        %v2707 = vld [vmem:[#allocation4 + $0x118] sm:$0xff]
        %v2708 = vld [vmem:[#allocation4 + $0x120] sm:$0xff]
        %v2709 = vld [vmem:[#allocation4 + $0x128] sm:$0xff]
        %v2710 = vld [vmem:[#allocation4 + $0x130] sm:$0xff]
        %v2711 = vld [vmem:[#allocation4 + $0x138] sm:$0xff]
        %v2712 = vld [vmem:[#allocation4 + $0x140] sm:$0xff]
        %v2713 = vld [vmem:[#allocation4 + $0x148] sm:$0xff]
        %v2714 = vld [vmem:[#allocation4 + $0x150] sm:$0xff]
        %v2715 = vld [vmem:[#allocation4 + $0x158] sm:$0xff]
        %v2716 = vld [vmem:[#allocation4 + $0x160] sm:$0xff]
        %v2717 = vld [vmem:[#allocation4 + $0x168] sm:$0xff]
        %v2718 = vld [vmem:[#allocation4 + $0x170] sm:$0xff]
        %v2719 = vld [vmem:[#allocation4 + $0x178] sm:$0xff]
        %v2720 = vld [vmem:[#allocation4 + $0x180] sm:$0xff]
        %v2721 = vld [vmem:[#allocation4 + $0x188] sm:$0xff]
        %v2722 = vld [vmem:[#allocation4 + $0x190] sm:$0xff]
        %v2723 = vld [vmem:[#allocation4 + $0x198] sm:$0xff]
        %v2724 = vld [vmem:[#allocation4 + $0x1a0] sm:$0xff]
        %v2725 = vld [vmem:[#allocation4 + $0x1a8] sm:$0xff]
        %v2726 = vld [vmem:[#allocation4 + $0x1b0] sm:$0xff]
        %v2727 = vld [vmem:[#allocation4 + $0x1b8] sm:$0xff]
        %v2728 = vld [vmem:[#allocation4 + $0x1c0] sm:$0xff]
        %v2729 = vld [vmem:[#allocation4 + $0x1c8] sm:$0xff]
        %v2730 = vld [vmem:[#allocation4 + $0x1d0] sm:$0xff]
        %v2731 = vld [vmem:[#allocation4 + $0x1d8] sm:$0xff]
        %v2732 = vld [vmem:[#allocation4 + $0x1e0] sm:$0xff]
        %v2733 = vld [vmem:[#allocation4 + $0x1e8] sm:$0xff]
        %v2734 = vld [vmem:[#allocation4 + $0x1f0] sm:$0xff]
        %v2735 = vld [vmem:[#allocation4 + $0x1f8] sm:$0xff]
        %v2736 = vld [vmem:[#allocation4 + $0x200] sm:$0xff]
        %v2737 = vld [vmem:[#allocation4 + $0x208] sm:$0xff]
        %v2738 = vld [vmem:[#allocation4 + $0x210] sm:$0xff]
        %v2739 = vld [vmem:[#allocation4 + $0x218] sm:$0xff]
        %v2740 = vld [vmem:[#allocation4 + $0x220] sm:$0xff]
        %v2741 = vld [vmem:[#allocation4 + $0x228] sm:$0xff]
        %v2742 = vld [vmem:[#allocation4 + $0x230] sm:$0xff]
        %v2743 = vld [vmem:[#allocation4 + $0x238] sm:$0xff]
        %v2744 = vld [vmem:[#allocation4 + $0x240] sm:$0xff]
        %v2745 = vld [vmem:[#allocation4 + $0x248] sm:$0xff]
        %v2746 = vld [vmem:[#allocation4 + $0x250] sm:$0xff]
        %v2747 = vld [vmem:[#allocation4 + $0x258] sm:$0xff]
        %v2748 = vld [vmem:[#allocation4 + $0x260] sm:$0xff]
        %v2749 = vld [vmem:[#allocation4 + $0x268] sm:$0xff]
        %v2750 = vld [vmem:[#allocation4 + $0x270] sm:$0xff]
        %v2751 = vld [vmem:[#allocation4 + $0x278] sm:$0xff]
        %v2752 = vld [vmem:[#allocation4 + $0x280] sm:$0xff]
        %v2753 = vld [vmem:[#allocation4 + $0x288] sm:$0xff]
        %v2754 = vld [vmem:[#allocation4 + $0x290] sm:$0xff]
        %v2755 = vld [vmem:[#allocation4 + $0x298] sm:$0xff]
        %v2756 = vld [vmem:[#allocation4 + $0x2a0] sm:$0xff]
        %v2757 = vld [vmem:[#allocation4 + $0x2a8] sm:$0xff]
        %v2758 = vld [vmem:[#allocation4 + $0x2b0] sm:$0xff]
        %v2759 = vld [vmem:[#allocation4 + $0x2b8] sm:$0xff]
        %v2760 = vld [vmem:[#allocation4 + $0x2c0] sm:$0xff]
        %v2761 = vld [vmem:[#allocation4 + $0x2c8] sm:$0xff]
        %v2762 = vld [vmem:[#allocation4 + $0x2d0] sm:$0xff]
        %v2763 = vld [vmem:[#allocation4 + $0x2d8] sm:$0xff]
        %v2764 = vld [vmem:[#allocation4 + $0x2e0] sm:$0xff]
        %v2765 = vld [vmem:[#allocation4 + $0x2e8] sm:$0xff]
        %v2766 = vld [vmem:[#allocation4 + $0x2f0] sm:$0xff]
        %v2767 = vld [vmem:[#allocation4 + $0x2f8] sm:$0xff]
        %v2768 = vld [vmem:[#allocation4 + $0x300] sm:$0xff]
        %v2769 = vld [vmem:[#allocation4 + $0x308] sm:$0xff]
        %v2770 = vld [vmem:[#allocation4 + $0x310] sm:$0xff]
        %v2771 = vld [vmem:[#allocation4 + $0x318] sm:$0xff]
        %v2772 = vld [vmem:[#allocation4 + $0x320] sm:$0xff]
        %v2773 = vld [vmem:[#allocation4 + $0x328] sm:$0xff]
        %v2774 = vld [vmem:[#allocation4 + $0x330] sm:$0xff]
        %v2775 = vld [vmem:[#allocation4 + $0x338] sm:$0xff]
        %v2776 = vld [vmem:[#allocation4 + $0x340] sm:$0xff]
        %v2777 = vld [vmem:[#allocation4 + $0x348] sm:$0xff]
        %v2778 = vld [vmem:[#allocation4 + $0x350] sm:$0xff]
        %v2779 = vld [vmem:[#allocation4 + $0x358] sm:$0xff]
        %v2780 = vld [vmem:[#allocation4 + $0x360] sm:$0xff]
        %v2781 = vld [vmem:[#allocation4 + $0x368] sm:$0xff]
        %v2782 = vld [vmem:[#allocation4 + $0x370] sm:$0xff]
        %v2783 = vld [vmem:[#allocation4 + $0x378] sm:$0xff]
        %v2784 = vld [vmem:[#allocation4 + $0x380] sm:$0xff]
        %v2785 = vld [vmem:[#allocation4 + $0x388] sm:$0xff]
        %v2786 = vld [vmem:[#allocation4 + $0x390] sm:$0xff]
        %v2787 = vld [vmem:[#allocation4 + $0x398] sm:$0xff]
        %v2788 = vld [vmem:[#allocation4 + $0x3a0] sm:$0xff]
        %v2789 = vld [vmem:[#allocation4 + $0x3a8] sm:$0xff]
        %v2790 = vld [vmem:[#allocation4 + $0x3b0] sm:$0xff]
        %v2791 = vld [vmem:[#allocation4 + $0x3b8] sm:$0xff]
        %v2792 = vld [vmem:[#allocation4 + $0x3c0] sm:$0xff]
        %v2793 = vld [vmem:[#allocation4 + $0x3c8] sm:$0xff]
        %v2794 = vld [vmem:[#allocation4 + $0x3d0] sm:$0xff]
        %v2795 = vld [vmem:[#allocation4 + $0x3d8] sm:$0xff]
        %v2796 = vld [vmem:[#allocation4 + $0x3e0] sm:$0xff]
        %v2797 = vld [vmem:[#allocation4 + $0x3e8] sm:$0xff]
        %v2798 = vld [vmem:[#allocation4 + $0x3f0] sm:$0xff]
        %v2799 = vld [vmem:[#allocation4 + $0x3f8] sm:$0xff]
        %v2800 = vld [vmem:[#allocation4 + $0x400] sm:$0xff]
        %v2801 = vld [vmem:[#allocation4 + $0x408] sm:$0xff]
        %v2802 = vld [vmem:[#allocation4 + $0x410] sm:$0xff]
        %v2803 = vld [vmem:[#allocation4 + $0x418] sm:$0xff]
        %v2804 = vld [vmem:[#allocation4 + $0x420] sm:$0xff]
        %v2805 = vld [vmem:[#allocation4 + $0x428] sm:$0xff]
        %v2806 = vld [vmem:[#allocation4 + $0x430] sm:$0xff]
        %v2807 = vld [vmem:[#allocation4 + $0x438] sm:$0xff]
        %v2808 = vld [vmem:[#allocation4 + $0x440] sm:$0xff]
        %v2809 = vld [vmem:[#allocation4 + $0x448] sm:$0xff]
        %v2810 = vld [vmem:[#allocation4 + $0x450] sm:$0xff]
        %v2811 = vld [vmem:[#allocation4 + $0x458] sm:$0xff]
        %v2812 = vld [vmem:[#allocation4 + $0x460] sm:$0xff]
        %v2813 = vld [vmem:[#allocation4 + $0x468] sm:$0xff]
        %v2814 = vld [vmem:[#allocation4 + $0x470] sm:$0xff]
        %v2815 = vld [vmem:[#allocation4 + $0x478] sm:$0xff]
        %v2816 = vld [vmem:[#allocation4 + $0x480] sm:$0xff]
        %v2817 = vld [vmem:[#allocation4 + $0x488] sm:$0xff]
        %v2818 = vld [vmem:[#allocation4 + $0x490] sm:$0xff]
        %v2819 = vld [vmem:[#allocation4 + $0x498] sm:$0xff]
        %v2820 = vld [vmem:[#allocation4 + $0x4a0] sm:$0xff]
        %v2821 = vld [vmem:[#allocation4 + $0x4a8] sm:$0xff]
        %v2822 = vld [vmem:[#allocation4 + $0x4b0] sm:$0xff]
        %v2823 = vld [vmem:[#allocation4 + $0x4b8] sm:$0xff]
        %v2824 = vld [vmem:[#allocation4 + $0x4c0] sm:$0xff]
        %v2825 = vld [vmem:[#allocation4 + $0x4c8] sm:$0xff]
        %v2826 = vld [vmem:[#allocation4 + $0x4d0] sm:$0xff]
        %v2827 = vld [vmem:[#allocation4 + $0x4d8] sm:$0xff]
        %v2828 = vld [vmem:[#allocation4 + $0x4e0] sm:$0xff]
        %v2829 = vld [vmem:[#allocation4 + $0x4e8] sm:$0xff]
        %v2830 = vld [vmem:[#allocation4 + $0x4f0] sm:$0xff]
        %v2831 = vld [vmem:[#allocation4 + $0x4f8] sm:$0xff]
        %v2832 = vld [vmem:[#allocation4 + $0x500] sm:$0xff]
        %v2833 = vld [vmem:[#allocation4 + $0x508] sm:$0xff]
        %v2834 = vld [vmem:[#allocation4 + $0x510] sm:$0xff]
        %v2835 = vld [vmem:[#allocation4 + $0x518] sm:$0xff]
        %v2836 = vld [vmem:[#allocation4 + $0x520] sm:$0xff]
        %v2837 = vld [vmem:[#allocation4 + $0x528] sm:$0xff]
        %v2838 = vld [vmem:[#allocation4 + $0x530] sm:$0xff]
        %v2839 = vld [vmem:[#allocation4 + $0x538] sm:$0xff]
        %v2840 = vld [vmem:[#allocation4 + $0x540] sm:$0xff]
        %v2841 = vld [vmem:[#allocation4 + $0x548] sm:$0xff]
        %v2842 = vld [vmem:[#allocation4 + $0x550] sm:$0xff]
        %v2843 = vld [vmem:[#allocation4 + $0x558] sm:$0xff]
        %v2844 = vld [vmem:[#allocation4 + $0x560] sm:$0xff]
        %v2845 = vld [vmem:[#allocation4 + $0x568] sm:$0xff]
        %v2846 = vld [vmem:[#allocation4 + $0x570] sm:$0xff]
        %v2847 = vld [vmem:[#allocation4 + $0x578] sm:$0xff]
        %v2848 = vld [vmem:[#allocation4 + $0x580] sm:$0xff]
        %v2849 = vld [vmem:[#allocation4 + $0x588] sm:$0xff]
        %v2850 = vld [vmem:[#allocation4 + $0x590] sm:$0xff]
        %v2851 = vld [vmem:[#allocation4 + $0x598] sm:$0xff]
        %v2852 = vld [vmem:[#allocation4 + $0x5a0] sm:$0xff]
        %v2853 = vld [vmem:[#allocation4 + $0x5a8] sm:$0xff]
        %v2854 = vld [vmem:[#allocation4 + $0x5b0] sm:$0xff]
        %v2855 = vld [vmem:[#allocation4 + $0x5b8] sm:$0xff]
        %v2856 = vld [vmem:[#allocation4 + $0x5c0] sm:$0xff]
        %v2857 = vld [vmem:[#allocation4 + $0x5c8] sm:$0xff]
        %v2858 = vld [vmem:[#allocation4 + $0x5d0] sm:$0xff]
        %v2859 = vld [vmem:[#allocation4 + $0x5d8] sm:$0xff]
        %v2860 = vld [vmem:[#allocation4 + $0x5e0] sm:$0xff]
        %v2861 = vld [vmem:[#allocation4 + $0x5e8] sm:$0xff]
        %v2862 = vld [vmem:[#allocation4 + $0x5f0] sm:$0xff]
        %v2863 = vld [vmem:[#allocation4 + $0x5f8] sm:$0xff]
        %v2864 = vld [vmem:[#allocation4 + $0x600] sm:$0xff]
        %v2865 = vld [vmem:[#allocation4 + $0x608] sm:$0xff]
        %v2866 = vld [vmem:[#allocation4 + $0x610] sm:$0xff]
        %v2867 = vld [vmem:[#allocation4 + $0x618] sm:$0xff]
        %v2868 = vld [vmem:[#allocation4 + $0x620] sm:$0xff]
        %v2869 = vld [vmem:[#allocation4 + $0x628] sm:$0xff]
        %v2870 = vld [vmem:[#allocation4 + $0x630] sm:$0xff]
        %v2871 = vld [vmem:[#allocation4 + $0x638] sm:$0xff]
        %v2872 = vld [vmem:[#allocation4 + $0x640] sm:$0xff]
        %v2873 = vld [vmem:[#allocation4 + $0x648] sm:$0xff]
        %v2874 = vld [vmem:[#allocation4 + $0x650] sm:$0xff]
        %v2875 = vld [vmem:[#allocation4 + $0x658] sm:$0xff]
        %v2876 = vld [vmem:[#allocation4 + $0x660] sm:$0xff]
        %v2877 = vld [vmem:[#allocation4 + $0x668] sm:$0xff]
        %v2878 = vld [vmem:[#allocation4 + $0x670] sm:$0xff]
        %v2879 = vld [vmem:[#allocation4 + $0x678] sm:$0xff]
        %v2880 = vld [vmem:[#allocation4 + $0x680] sm:$0xff]
        %v2881 = vld [vmem:[#allocation4 + $0x688] sm:$0xff]
        %v2882 = vld [vmem:[#allocation4 + $0x690] sm:$0xff]
        %v2883 = vld [vmem:[#allocation4 + $0x698] sm:$0xff]
        %v2884 = vld [vmem:[#allocation4 + $0x6a0] sm:$0xff]
        %v2885 = vld [vmem:[#allocation4 + $0x6a8] sm:$0xff]
        %v2886 = vld [vmem:[#allocation4 + $0x6b0] sm:$0xff]
        %v2887 = vld [vmem:[#allocation4 + $0x6b8] sm:$0xff]
        %v2888 = vld [vmem:[#allocation4 + $0x6c0] sm:$0xff]
        %v2889 = vld [vmem:[#allocation4 + $0x6c8] sm:$0xff]
        %v2890 = vld [vmem:[#allocation4 + $0x6d0] sm:$0xff]
        %v2891 = vld [vmem:[#allocation4 + $0x6d8] sm:$0xff]
        %v2892 = vld [vmem:[#allocation4 + $0x6e0] sm:$0xff]
        %v2893 = vld [vmem:[#allocation4 + $0x6e8] sm:$0xff]
        %v2894 = vld [vmem:[#allocation4 + $0x6f0] sm:$0xff]
        %v2895 = vld [vmem:[#allocation4 + $0x6f8] sm:$0xff]
        %v2896 = vld [vmem:[#allocation4 + $0x700] sm:$0xff]
        %v2897 = vld [vmem:[#allocation4 + $0x708] sm:$0xff]
        %v2898 = vld [vmem:[#allocation4 + $0x710] sm:$0xff]
        %v2899 = vld [vmem:[#allocation4 + $0x718] sm:$0xff]
        %v2900 = vld [vmem:[#allocation4 + $0x720] sm:$0xff]
        %v2901 = vld [vmem:[#allocation4 + $0x728] sm:$0xff]
        %v2902 = vld [vmem:[#allocation4 + $0x730] sm:$0xff]
        %v2903 = vld [vmem:[#allocation4 + $0x738] sm:$0xff]
        %v2904 = vld [vmem:[#allocation4 + $0x740] sm:$0xff]
        %v2905 = vld [vmem:[#allocation4 + $0x748] sm:$0xff]
        %v2906 = vld [vmem:[#allocation4 + $0x750] sm:$0xff]
        %v2907 = vld [vmem:[#allocation4 + $0x758] sm:$0xff]
        %v2908 = vld [vmem:[#allocation4 + $0x760] sm:$0xff]
        %v2909 = vld [vmem:[#allocation4 + $0x768] sm:$0xff]
        %v2910 = vld [vmem:[#allocation4 + $0x770] sm:$0xff]
        %v2911 = vld [vmem:[#allocation4 + $0x778] sm:$0xff]
        %v2912 = vld [vmem:[#allocation4 + $0x780] sm:$0xff]
        %v2913 = vld [vmem:[#allocation4 + $0x788] sm:$0xff]
        %v2914 = vld [vmem:[#allocation4 + $0x790] sm:$0xff]
        %v2915 = vld [vmem:[#allocation4 + $0x798] sm:$0xff]
        %v2916 = vld [vmem:[#allocation4 + $0x7a0] sm:$0xff]
        %v2917 = vld [vmem:[#allocation4 + $0x7a8] sm:$0xff]
        %v2918 = vld [vmem:[#allocation4 + $0x7b0] sm:$0xff]
        %v2919 = vld [vmem:[#allocation4 + $0x7b8] sm:$0xff]
        %v2920 = vld [vmem:[#allocation4 + $0x7c0] sm:$0xff]
        %v2921 = vld [vmem:[#allocation4 + $0x7c8] sm:$0xff]
        %v2922 = vld [vmem:[#allocation4 + $0x7d0] sm:$0xff]
        %v2923 = vld [vmem:[#allocation4 + $0x7d8] sm:$0xff]
        %v2924 = vld [vmem:[#allocation4 + $0x7e0] sm:$0xff]
        %v2925 = vld [vmem:[#allocation4 + $0x7e8] sm:$0xff]
        %v2926 = vld [vmem:[#allocation4 + $0x7f0] sm:$0xff]
        %v2927 = vld [vmem:[#allocation4 + $0x7f8] sm:$0xff]
        %v2928 = vld [vmem:[%s4] sm:$0xf]
        %v2930 = vlaneseq
        %v2931 = vshrl.u32 %v2930, 7
        %v2932 = vsub.s32 0, %v2931
        %v2933 = vrot.slane %v2928, %v2932
        %v2934 = vlaneseq
        %v2935 = vshrl.u32 %v2934, 7
        %v2936 = vsub.s32 1, %v2935
        %v2937 = vrot.slane %v2928, %v2936
        %v2938 = vlaneseq
        %v2939 = vshrl.u32 %v2938, 7
        %v2940 = vsub.s32 2, %v2939
        %v2941 = vrot.slane %v2928, %v2940
        %v2942 = vlaneseq
        %v2943 = vshrl.u32 %v2942, 7
        %v2944 = vsub.s32 3, %v2943
        %v2945 = vrot.slane %v2928, %v2944
        %2950 = vmatprep.subr.mxu0 %v2673
        %2951 = vmatpush1.msra.mxu0 %v2672
        %2952 = vmatprep.subr.mxu0 %v2677
        %2953 = vmatpush1.msra.mxu0 %v2676
        %2954 = vmatprep.subr.mxu0 %v2681
        %2955 = vmatpush1.msra.mxu0 %v2680
        %2956 = vmatprep.subr.mxu0 %v2685
        %2957 = vmatpush1.msra.mxu0 %v2684
        %2958 = vmatprep.subr.mxu0 %v2689
        %2959 = vmatpush1.msra.mxu0 %v2688
        %2960 = vmatprep.subr.mxu0 %v2693
        %2961 = vmatpush1.msra.mxu0 %v2692
        %2962 = vmatprep.subr.mxu0 %v2697
        %2963 = vmatpush1.msra.mxu0 %v2696
        %2964 = vmatprep.subr.mxu0 %v2701
        %2965 = vmatpush1.msra.mxu0 %v2700
        %2966 = vmatprep.subr.mxu0 %v2705
        %2967 = vmatpush1.msra.mxu0 %v2704
        %2968 = vmatprep.subr.mxu0 %v2709
        %2969 = vmatpush1.msra.mxu0 %v2708
        %2970 = vmatprep.subr.mxu0 %v2713
        %2971 = vmatpush1.msra.mxu0 %v2712
        %2972 = vmatprep.subr.mxu0 %v2717
        %2973 = vmatpush1.msra.mxu0 %v2716
        %2974 = vmatprep.subr.mxu0 %v2721
        %2975 = vmatpush1.msra.mxu0 %v2720
        %2976 = vmatprep.subr.mxu0 %v2725
        %2977 = vmatpush1.msra.mxu0 %v2724
        %2978 = vmatprep.subr.mxu0 %v2729
        %2979 = vmatpush1.msra.mxu0 %v2728
        %2980 = vmatprep.subr.mxu0 %v2733
        %2981 = vmatpush1.msra.mxu0 %v2732
        %2982 = vmatprep.subr.mxu0 %v2737
        %2983 = vmatpush1.msra.mxu0 %v2736
        %2984 = vmatprep.subr.mxu0 %v2741
        %2985 = vmatpush1.msra.mxu0 %v2740
        %2986 = vmatprep.subr.mxu0 %v2745
        %2987 = vmatpush1.msra.mxu0 %v2744
        %2988 = vmatprep.subr.mxu0 %v2749
        %2989 = vmatpush1.msra.mxu0 %v2748
        %2990 = vmatprep.subr.mxu0 %v2753
        %2991 = vmatpush1.msra.mxu0 %v2752
        %2992 = vmatprep.subr.mxu0 %v2757
        %2993 = vmatpush1.msra.mxu0 %v2756
        %2994 = vmatprep.subr.mxu0 %v2761
        %2995 = vmatpush1.msra.mxu0 %v2760
        %2996 = vmatprep.subr.mxu0 %v2765
        %2997 = vmatpush1.msra.mxu0 %v2764
        %2998 = vmatprep.subr.mxu0 %v2769
        %2999 = vmatpush1.msra.mxu0 %v2768
        %3000 = vmatprep.subr.mxu0 %v2773
        %3001 = vmatpush1.msra.mxu0 %v2772
        %3002 = vmatprep.subr.mxu0 %v2777
        %3003 = vmatpush1.msra.mxu0 %v2776
        %3004 = vmatprep.subr.mxu0 %v2781
        %3005 = vmatpush1.msra.mxu0 %v2780
        %3006 = vmatprep.subr.mxu0 %v2785
        %3007 = vmatpush1.msra.mxu0 %v2784
        %3008 = vmatprep.subr.mxu0 %v2789
        %3009 = vmatpush1.msra.mxu0 %v2788
        %3010 = vmatprep.subr.mxu0 %v2793
        %3011 = vmatpush1.msra.mxu0 %v2792
        %3012 = vmatprep.subr.mxu0 %v2797
        %3013 = vmatpush1.msra.mxu0 %v2796
        %3014 = vmatprep.mubr.f32.mxu0 %v2609
        %3015 = vmatmul.mubr.f32.gmra.mrb[0].mxu0 %v2608
        %v3016 = vpop.f32.mrb[0].mxu0
        %v3017 = vadd.f32 %v2933, %v3016
        %v3018 = vpop.f32.mrb[0].mxu0
        %v3019 = vadd.f32 %v2937, %v3018
        %3020 = vmatprep.mubr.f32.mxu0 %v2613
        %3021 = vmatmul.mubr.f32.gmra.mrb[0].mxu0 %v2612
        %v3022 = vpop.f32.mrb[0].mxu0
        %v3023 = vadd.f32 %v2933, %v3022
        %v3024 = vpop.f32.mrb[0].mxu0
        %v3025 = vadd.f32 %v2937, %v3024
        %3026 = vmatprep.mubr.f32.mxu0 %v2617
        %3027 = vmatmul.mubr.f32.gmra.mrb[0].mxu0 %v2616
        %v3028 = vpop.f32.mrb[0].mxu0
        %v3029 = vadd.f32 %v2933, %v3028
        %v3030 = vpop.f32.mrb[0].mxu0
        %v3031 = vadd.f32 %v2937, %v3030
        %3032 = vmatprep.mubr.f32.mxu0 %v2621
        %3033 = vmatmul.mubr.f32.gmra.mrb[0].mxu0 %v2620
        %v3034 = vpop.f32.mrb[0].mxu0
        %v3035 = vadd.f32 %v2933, %v3034
        %v3036 = vpop.f32.mrb[0].mxu0
        %v3037 = vadd.f32 %v2937, %v3036
        %3038 = vmatprep.mubr.f32.mxu0 %v2625
        %3039 = vmatmul.mubr.f32.gmra.mrb[0].mxu0 %v2624
        %v3040 = vpop.f32.mrb[0].mxu0
        %v3041 = vadd.f32 %v2933, %v3040
        %v3042 = vpop.f32.mrb[0].mxu0
        %v3043 = vadd.f32 %v2937, %v3042
        %3044 = vmatprep.mubr.f32.mxu0 %v2629
        %3045 = vmatmul.mubr.f32.gmra.mrb[0].mxu0 %v2628
        %v3046 = vpop.f32.mrb[0].mxu0
        %v3047 = vadd.f32 %v2933, %v3046
        %v3048 = vpop.f32.mrb[0].mxu0
        %v3049 = vadd.f32 %v2937, %v3048
        %3050 = vmatprep.mubr.f32.mxu0 %v2633
        %3051 = vmatmul.mubr.f32.gmra.mrb[0].mxu0 %v2632
        %v3052 = vpop.f32.mrb[0].mxu0
        %v3053 = vadd.f32 %v2933, %v3052
        %v3054 = vpop.f32.mrb[0].mxu0
        %v3055 = vadd.f32 %v2937, %v3054
        %3056 = vmatprep.mubr.f32.mxu0 %v2637
        %3057 = vmatmul.mubr.f32.gmra.mrb[0].mxu0 %v2636
        %v3058 = vpop.f32.mrb[0].mxu0
        %v3059 = vadd.f32 %v2933, %v3058
        %v3060 = vpop.f32.mrb[0].mxu0
        %v3061 = vadd.f32 %v2937, %v3060
        %3062 = vmatprep.mubr.f32.mxu0 %v2641
        %3063 = vmatmul.mubr.f32.gmra.mrb[0].mxu0 %v2640
        %v3064 = vpop.f32.mrb[0].mxu0
        %v3065 = vadd.f32 %v2933, %v3064
        %v3066 = vpop.f32.mrb[0].mxu0
        %v3067 = vadd.f32 %v2937, %v3066
        %3068 = vmatprep.mubr.f32.mxu0 %v2645
        %3069 = vmatmul.mubr.f32.gmra.mrb[0].mxu0 %v2644
        %v3070 = vpop.f32.mrb[0].mxu0
        %v3071 = vadd.f32 %v2933, %v3070
        %v3072 = vpop.f32.mrb[0].mxu0
        %v3073 = vadd.f32 %v2937, %v3072
        %3074 = vmatprep.mubr.f32.mxu0 %v2649
        %3075 = vmatmul.mubr.f32.gmra.mrb[0].mxu0 %v2648
        %v3076 = vpop.f32.mrb[0].mxu0
        %v3077 = vadd.f32 %v2933, %v3076
        %v3078 = vpop.f32.mrb[0].mxu0
        %v3079 = vadd.f32 %v2937, %v3078
        %3080 = vmatprep.mubr.f32.mxu0 %v2653
        %3081 = vmatmul.mubr.f32.gmra.mrb[0].mxu0 %v2652
        %v3082 = vpop.f32.mrb[0].mxu0
        %v3083 = vadd.f32 %v2933, %v3082
        %v3084 = vpop.f32.mrb[0].mxu0
        %v3085 = vadd.f32 %v2937, %v3084
        %3086 = vmatprep.mubr.f32.mxu0 %v2657
        %3087 = vmatmul.mubr.f32.gmra.mrb[0].mxu0 %v2656
        %v3088 = vpop.f32.mrb[0].mxu0
        %v3089 = vadd.f32 %v2933, %v3088
        %v3090 = vpop.f32.mrb[0].mxu0
        %v3091 = vadd.f32 %v2937, %v3090
        %3092 = vmatprep.mubr.f32.mxu0 %v2661
        %3093 = vmatmul.mubr.f32.gmra.mrb[0].mxu0 %v2660
        %v3094 = vpop.f32.mrb[0].mxu0
        %v3095 = vadd.f32 %v2933, %v3094
        %v3096 = vpop.f32.mrb[0].mxu0
        %v3097 = vadd.f32 %v2937, %v3096
        %3098 = vmatprep.mubr.f32.mxu0 %v2665
        %3099 = vmatmul.mubr.f32.gmra.mrb[0].mxu0 %v2664
        %v3100 = vpop.f32.mrb[0].mxu0
        %v3101 = vadd.f32 %v2933, %v3100
        %v3102 = vpop.f32.mrb[0].mxu0
        %v3103 = vadd.f32 %v2937, %v3102
        %3104 = vmatprep.mubr.f32.mxu0 %v2669
        %3105 = vmatmul.mubr.f32.gmra.mrb[0].mxu0 %v2668
        %v3106 = vpop.f32.mrb[0].mxu0
        %v3107 = vadd.f32 %v2933, %v3106
        %v3108 = vpop.f32.mrb[0].mxu0
        %v3109 = vadd.f32 %v2937, %v3108
        %3110 = vdwg.mxu0
        %3111 = vmatprep.subr.mxu0 %v2801
        %3112 = vmatpush1.msra.mxu0 %v2800
        %3113 = vmatprep.subr.mxu0 %v2805
        %3114 = vmatpush1.msra.mxu0 %v2804
        %3115 = vmatprep.subr.mxu0 %v2809
        %3116 = vmatpush1.msra.mxu0 %v2808
        %3117 = vmatprep.subr.mxu0 %v2813
        %3118 = vmatpush1.msra.mxu0 %v2812
        %3119 = vmatprep.subr.mxu0 %v2817
        %3120 = vmatpush1.msra.mxu0 %v2816
        %3121 = vmatprep.subr.mxu0 %v2821
        %3122 = vmatpush1.msra.mxu0 %v2820
        %3123 = vmatprep.subr.mxu0 %v2825
        %3124 = vmatpush1.msra.mxu0 %v2824
        %3125 = vmatprep.subr.mxu0 %v2829
        %3126 = vmatpush1.msra.mxu0 %v2828
        %3127 = vmatprep.subr.mxu0 %v2833
        %3128 = vmatpush1.msra.mxu0 %v2832
        %3129 = vmatprep.subr.mxu0 %v2837
        %3130 = vmatpush1.msra.mxu0 %v2836
        %3131 = vmatprep.subr.mxu0 %v2841
        %3132 = vmatpush1.msra.mxu0 %v2840
        %3133 = vmatprep.subr.mxu0 %v2845
        %3134 = vmatpush1.msra.mxu0 %v2844
        %3135 = vmatprep.subr.mxu0 %v2849
        %3136 = vmatpush1.msra.mxu0 %v2848
        %3137 = vmatprep.subr.mxu0 %v2853
        %3138 = vmatpush1.msra.mxu0 %v2852
        %3139 = vmatprep.subr.mxu0 %v2857
        %3140 = vmatpush1.msra.mxu0 %v2856
        %3141 = vmatprep.subr.mxu0 %v2861
        %3142 = vmatpush1.msra.mxu0 %v2860
        %3143 = vmatprep.subr.mxu0 %v2865
        %3144 = vmatpush1.msra.mxu0 %v2864
        %3145 = vmatprep.subr.mxu0 %v2869
        %3146 = vmatpush1.msra.mxu0 %v2868
        %3147 = vmatprep.subr.mxu0 %v2873
        %3148 = vmatpush1.msra.mxu0 %v2872
        %3149 = vmatprep.subr.mxu0 %v2877
        %3150 = vmatpush1.msra.mxu0 %v2876
        %3151 = vmatprep.subr.mxu0 %v2881
        %3152 = vmatpush1.msra.mxu0 %v2880
        %3153 = vmatprep.subr.mxu0 %v2885
        %3154 = vmatpush1.msra.mxu0 %v2884
        %3155 = vmatprep.subr.mxu0 %v2889
        %3156 = vmatpush1.msra.mxu0 %v2888
        %3157 = vmatprep.subr.mxu0 %v2893
        %3158 = vmatpush1.msra.mxu0 %v2892
        %3159 = vmatprep.subr.mxu0 %v2897
        %3160 = vmatpush1.msra.mxu0 %v2896
        %3161 = vmatprep.subr.mxu0 %v2901
        %3162 = vmatpush1.msra.mxu0 %v2900
        %3163 = vmatprep.subr.mxu0 %v2905
        %3164 = vmatpush1.msra.mxu0 %v2904
        %3165 = vmatprep.subr.mxu0 %v2909
        %3166 = vmatpush1.msra.mxu0 %v2908
        %3167 = vmatprep.subr.mxu0 %v2913
        %3168 = vmatpush1.msra.mxu0 %v2912
        %3169 = vmatprep.subr.mxu0 %v2917
        %3170 = vmatpush1.msra.mxu0 %v2916
        %3171 = vmatprep.subr.mxu0 %v2921
        %3172 = vmatpush1.msra.mxu0 %v2920
        %3173 = vmatprep.subr.mxu0 %v2925
        %3174 = vmatpush1.msra.mxu0 %v2924
        %3175 = vmatprep.mubr.f32.mxu0 %v2611
        %3176 = vmatmul.mubr.f32.gmra.mrb[0].mxu0 %v2610
        %v3177 = vpop.f32.mrb[0].mxu0
        %v3178 = vadd.f32 %v3017, %v3177
        %v3179 = vpop.f32.mrb[0].mxu0
        %v3180 = vadd.f32 %v3019, %v3179
        %3181 = vmatprep.mubr.f32.mxu0 %v2615
        %3182 = vmatmul.mubr.f32.gmra.mrb[0].mxu0 %v2614
        %v3183 = vpop.f32.mrb[0].mxu0
        %v3184 = vadd.f32 %v3023, %v3183
        %v3185 = vpop.f32.mrb[0].mxu0
        %v3186 = vadd.f32 %v3025, %v3185
        %3187 = vmatprep.mubr.f32.mxu0 %v2619
        %3188 = vmatmul.mubr.f32.gmra.mrb[0].mxu0 %v2618
        %v3189 = vpop.f32.mrb[0].mxu0
        %v3190 = vadd.f32 %v3029, %v3189
        %v3191 = vpop.f32.mrb[0].mxu0
        %v3192 = vadd.f32 %v3031, %v3191
        %3193 = vmatprep.mubr.f32.mxu0 %v2623
        %3194 = vmatmul.mubr.f32.gmra.mrb[0].mxu0 %v2622
        %v3195 = vpop.f32.mrb[0].mxu0
        %v3196 = vadd.f32 %v3035, %v3195
        %v3197 = vpop.f32.mrb[0].mxu0
        %v3198 = vadd.f32 %v3037, %v3197
        %3199 = vmatprep.mubr.f32.mxu0 %v2627
        %3200 = vmatmul.mubr.f32.gmra.mrb[0].mxu0 %v2626
        %v3201 = vpop.f32.mrb[0].mxu0
        %v3202 = vadd.f32 %v3041, %v3201
        %v3203 = vpop.f32.mrb[0].mxu0
        %v3204 = vadd.f32 %v3043, %v3203
        %3205 = vmatprep.mubr.f32.mxu0 %v2631
        %3206 = vmatmul.mubr.f32.gmra.mrb[0].mxu0 %v2630
        %v3207 = vpop.f32.mrb[0].mxu0
        %v3208 = vadd.f32 %v3047, %v3207
        %v3209 = vpop.f32.mrb[0].mxu0
        %v3210 = vadd.f32 %v3049, %v3209
        %3211 = vmatprep.mubr.f32.mxu0 %v2635
        %3212 = vmatmul.mubr.f32.gmra.mrb[0].mxu0 %v2634
        %v3213 = vpop.f32.mrb[0].mxu0
        %v3214 = vadd.f32 %v3053, %v3213
        %v3215 = vpop.f32.mrb[0].mxu0
        %v3216 = vadd.f32 %v3055, %v3215
        %3217 = vmatprep.mubr.f32.mxu0 %v2639
        %3218 = vmatmul.mubr.f32.gmra.mrb[0].mxu0 %v2638
        %v3219 = vpop.f32.mrb[0].mxu0
        %v3220 = vadd.f32 %v3059, %v3219
        %v3221 = vpop.f32.mrb[0].mxu0
        %v3222 = vadd.f32 %v3061, %v3221
        %3223 = vmatprep.mubr.f32.mxu0 %v2643
        %3224 = vmatmul.mubr.f32.gmra.mrb[0].mxu0 %v2642
        %v3225 = vpop.f32.mrb[0].mxu0
        %v3226 = vadd.f32 %v3065, %v3225
        %v3227 = vpop.f32.mrb[0].mxu0
        %v3228 = vadd.f32 %v3067, %v3227
        %3229 = vmatprep.mubr.f32.mxu0 %v2647
        %3230 = vmatmul.mubr.f32.gmra.mrb[0].mxu0 %v2646
        %v3231 = vpop.f32.mrb[0].mxu0
        %v3232 = vadd.f32 %v3071, %v3231
        %v3233 = vpop.f32.mrb[0].mxu0
        %v3234 = vadd.f32 %v3073, %v3233
        %3235 = vmatprep.mubr.f32.mxu0 %v2651
        %3236 = vmatmul.mubr.f32.gmra.mrb[0].mxu0 %v2650
        %v3237 = vpop.f32.mrb[0].mxu0
        %v3238 = vadd.f32 %v3077, %v3237
        %v3239 = vpop.f32.mrb[0].mxu0
        %v3240 = vadd.f32 %v3079, %v3239
        %3241 = vmatprep.mubr.f32.mxu0 %v2655
        %3242 = vmatmul.mubr.f32.gmra.mrb[0].mxu0 %v2654
        %v3243 = vpop.f32.mrb[0].mxu0
        %v3244 = vadd.f32 %v3083, %v3243
        %v3245 = vpop.f32.mrb[0].mxu0
        %v3246 = vadd.f32 %v3085, %v3245
        %3247 = vmatprep.mubr.f32.mxu0 %v2659
        %3248 = vmatmul.mubr.f32.gmra.mrb[0].mxu0 %v2658
        %v3249 = vpop.f32.mrb[0].mxu0
        %v3250 = vadd.f32 %v3089, %v3249
        %v3251 = vpop.f32.mrb[0].mxu0
        %v3252 = vadd.f32 %v3091, %v3251
        %3253 = vmatprep.mubr.f32.mxu0 %v2663
        %3254 = vmatmul.mubr.f32.gmra.mrb[0].mxu0 %v2662
        %v3255 = vpop.f32.mrb[0].mxu0
        %v3256 = vadd.f32 %v3095, %v3255
        %v3257 = vpop.f32.mrb[0].mxu0
        %v3258 = vadd.f32 %v3097, %v3257
        %3259 = vmatprep.mubr.f32.mxu0 %v2667
        %3260 = vmatmul.mubr.f32.gmra.mrb[0].mxu0 %v2666
        %v3261 = vpop.f32.mrb[0].mxu0
        %v3262 = vadd.f32 %v3101, %v3261
        %v3263 = vpop.f32.mrb[0].mxu0
        %v3264 = vadd.f32 %v3103, %v3263
        %3265 = vmatprep.mubr.f32.mxu0 %v2671
        %3266 = vmatmul.mubr.f32.gmra.mrb[0].mxu0 %v2670
        %v3267 = vpop.f32.mrb[0].mxu0
        %v3268 = vadd.f32 %v3107, %v3267
        %v3269 = vpop.f32.mrb[0].mxu0
        %v3270 = vadd.f32 %v3109, %v3269
        %3271 = vdwg.mxu0
        %3272 = vmatprep.subr.mxu0 %v2675
        %3273 = vmatpush1.msra.mxu0 %v2674
        %3274 = vmatprep.subr.mxu0 %v2679
        %3275 = vmatpush1.msra.mxu0 %v2678
        %3276 = vmatprep.subr.mxu0 %v2683
        %3277 = vmatpush1.msra.mxu0 %v2682
        %3278 = vmatprep.subr.mxu0 %v2687
        %3279 = vmatpush1.msra.mxu0 %v2686
        %3280 = vmatprep.subr.mxu0 %v2691
        %3281 = vmatpush1.msra.mxu0 %v2690
        %3282 = vmatprep.subr.mxu0 %v2695
        %3283 = vmatpush1.msra.mxu0 %v2694
        %3284 = vmatprep.subr.mxu0 %v2699
        %3285 = vmatpush1.msra.mxu0 %v2698
        %3286 = vmatprep.subr.mxu0 %v2703
        %3287 = vmatpush1.msra.mxu0 %v2702
        %3288 = vmatprep.subr.mxu0 %v2707
        %3289 = vmatpush1.msra.mxu0 %v2706
        %3290 = vmatprep.subr.mxu0 %v2711
        %3291 = vmatpush1.msra.mxu0 %v2710
        %3292 = vmatprep.subr.mxu0 %v2715
        %3293 = vmatpush1.msra.mxu0 %v2714
        %3294 = vmatprep.subr.mxu0 %v2719
        %3295 = vmatpush1.msra.mxu0 %v2718
        %3296 = vmatprep.subr.mxu0 %v2723
        %3297 = vmatpush1.msra.mxu0 %v2722
        %3298 = vmatprep.subr.mxu0 %v2727
        %3299 = vmatpush1.msra.mxu0 %v2726
        %3300 = vmatprep.subr.mxu0 %v2731
        %3301 = vmatpush1.msra.mxu0 %v2730
        %3302 = vmatprep.subr.mxu0 %v2735
        %3303 = vmatpush1.msra.mxu0 %v2734
        %3304 = vmatprep.subr.mxu0 %v2739
        %3305 = vmatpush1.msra.mxu0 %v2738
        %3306 = vmatprep.subr.mxu0 %v2743
        %3307 = vmatpush1.msra.mxu0 %v2742
        %3308 = vmatprep.subr.mxu0 %v2747
        %3309 = vmatpush1.msra.mxu0 %v2746
        %3310 = vmatprep.subr.mxu0 %v2751
        %3311 = vmatpush1.msra.mxu0 %v2750
        %3312 = vmatprep.subr.mxu0 %v2755
        %3313 = vmatpush1.msra.mxu0 %v2754
        %3314 = vmatprep.subr.mxu0 %v2759
        %3315 = vmatpush1.msra.mxu0 %v2758
        %3316 = vmatprep.subr.mxu0 %v2763
        %3317 = vmatpush1.msra.mxu0 %v2762
        %3318 = vmatprep.subr.mxu0 %v2767
        %3319 = vmatpush1.msra.mxu0 %v2766
        %3320 = vmatprep.subr.mxu0 %v2771
        %3321 = vmatpush1.msra.mxu0 %v2770
        %3322 = vmatprep.subr.mxu0 %v2775
        %3323 = vmatpush1.msra.mxu0 %v2774
        %3324 = vmatprep.subr.mxu0 %v2779
        %3325 = vmatpush1.msra.mxu0 %v2778
        %3326 = vmatprep.subr.mxu0 %v2783
        %3327 = vmatpush1.msra.mxu0 %v2782
        %3328 = vmatprep.subr.mxu0 %v2787
        %3329 = vmatpush1.msra.mxu0 %v2786
        %3330 = vmatprep.subr.mxu0 %v2791
        %3331 = vmatpush1.msra.mxu0 %v2790
        %3332 = vmatprep.subr.mxu0 %v2795
        %3333 = vmatpush1.msra.mxu0 %v2794
        %3334 = vmatprep.subr.mxu0 %v2799
        %3335 = vmatpush1.msra.mxu0 %v2798
        %3336 = vmatprep.mubr.f32.mxu0 %v2609
        %3337 = vmatmul.mubr.f32.gmra.mrb[0].mxu0 %v2608
        %v3338 = vpop.f32.mrb[0].mxu0
        %v3339 = vadd.f32 %v2941, %v3338
        %v3340 = vpop.f32.mrb[0].mxu0
        %v3341 = vadd.f32 %v2945, %v3340
        %3342 = vmatprep.mubr.f32.mxu0 %v2613
        %3343 = vmatmul.mubr.f32.gmra.mrb[0].mxu0 %v2612
        %v3344 = vpop.f32.mrb[0].mxu0
        %v3345 = vadd.f32 %v2941, %v3344
        %v3346 = vpop.f32.mrb[0].mxu0
        %v3347 = vadd.f32 %v2945, %v3346
        %3348 = vmatprep.mubr.f32.mxu0 %v2617
        %3349 = vmatmul.mubr.f32.gmra.mrb[0].mxu0 %v2616
        %v3350 = vpop.f32.mrb[0].mxu0
        %v3351 = vadd.f32 %v2941, %v3350
        %v3352 = vpop.f32.mrb[0].mxu0
        %v3353 = vadd.f32 %v2945, %v3352
        %3354 = vmatprep.mubr.f32.mxu0 %v2621
        %3355 = vmatmul.mubr.f32.gmra.mrb[0].mxu0 %v2620
        %v3356 = vpop.f32.mrb[0].mxu0
        %v3357 = vadd.f32 %v2941, %v3356
        %v3358 = vpop.f32.mrb[0].mxu0
        %v3359 = vadd.f32 %v2945, %v3358
        %3360 = vmatprep.mubr.f32.mxu0 %v2625
        %3361 = vmatmul.mubr.f32.gmra.mrb[0].mxu0 %v2624
        %v3362 = vpop.f32.mrb[0].mxu0
        %v3363 = vadd.f32 %v2941, %v3362
        %v3364 = vpop.f32.mrb[0].mxu0
        %v3365 = vadd.f32 %v2945, %v3364
        %3366 = vmatprep.mubr.f32.mxu0 %v2629
        %3367 = vmatmul.mubr.f32.gmra.mrb[0].mxu0 %v2628
        %v3368 = vpop.f32.mrb[0].mxu0
        %v3369 = vadd.f32 %v2941, %v3368
        %v3370 = vpop.f32.mrb[0].mxu0
        %v3371 = vadd.f32 %v2945, %v3370
        %3372 = vmatprep.mubr.f32.mxu0 %v2633
        %3373 = vmatmul.mubr.f32.gmra.mrb[0].mxu0 %v2632
        %v3374 = vpop.f32.mrb[0].mxu0
        %v3375 = vadd.f32 %v2941, %v3374
        %v3376 = vpop.f32.mrb[0].mxu0
        %v3377 = vadd.f32 %v2945, %v3376
        %3378 = vmatprep.mubr.f32.mxu0 %v2637
        %3379 = vmatmul.mubr.f32.gmra.mrb[0].mxu0 %v2636
        %v3380 = vpop.f32.mrb[0].mxu0
        %v3381 = vadd.f32 %v2941, %v3380
        %v3382 = vpop.f32.mrb[0].mxu0
        %v3383 = vadd.f32 %v2945, %v3382
        %3384 = vmatprep.mubr.f32.mxu0 %v2641
        %3385 = vmatmul.mubr.f32.gmra.mrb[0].mxu0 %v2640
        %v3386 = vpop.f32.mrb[0].mxu0
        %v3387 = vadd.f32 %v2941, %v3386
        %v3388 = vpop.f32.mrb[0].mxu0
        %v3389 = vadd.f32 %v2945, %v3388
        %3390 = vmatprep.mubr.f32.mxu0 %v2645
        %3391 = vmatmul.mubr.f32.gmra.mrb[0].mxu0 %v2644
        %v3392 = vpop.f32.mrb[0].mxu0
        %v3393 = vadd.f32 %v2941, %v3392
        %v3394 = vpop.f32.mrb[0].mxu0
        %v3395 = vadd.f32 %v2945, %v3394
        %3396 = vmatprep.mubr.f32.mxu0 %v2649
        %3397 = vmatmul.mubr.f32.gmra.mrb[0].mxu0 %v2648
        %v3398 = vpop.f32.mrb[0].mxu0
        %v3399 = vadd.f32 %v2941, %v3398
        %v3400 = vpop.f32.mrb[0].mxu0
        %v3401 = vadd.f32 %v2945, %v3400
        %3402 = vmatprep.mubr.f32.mxu0 %v2653
        %3403 = vmatmul.mubr.f32.gmra.mrb[0].mxu0 %v2652
        %v3404 = vpop.f32.mrb[0].mxu0
        %v3405 = vadd.f32 %v2941, %v3404
        %v3406 = vpop.f32.mrb[0].mxu0
        %v3407 = vadd.f32 %v2945, %v3406
        %3408 = vmatprep.mubr.f32.mxu0 %v2657
        %3409 = vmatmul.mubr.f32.gmra.mrb[0].mxu0 %v2656
        %v3410 = vpop.f32.mrb[0].mxu0
        %v3411 = vadd.f32 %v2941, %v3410
        %v3412 = vpop.f32.mrb[0].mxu0
        %v3413 = vadd.f32 %v2945, %v3412
        %3414 = vmatprep.mubr.f32.mxu0 %v2661
        %3415 = vmatmul.mubr.f32.gmra.mrb[0].mxu0 %v2660
        %v3416 = vpop.f32.mrb[0].mxu0
        %v3417 = vadd.f32 %v2941, %v3416
        %v3418 = vpop.f32.mrb[0].mxu0
        %v3419 = vadd.f32 %v2945, %v3418
        %3420 = vmatprep.mubr.f32.mxu0 %v2665
        %3421 = vmatmul.mubr.f32.gmra.mrb[0].mxu0 %v2664
        %v3422 = vpop.f32.mrb[0].mxu0
        %v3423 = vadd.f32 %v2941, %v3422
        %v3424 = vpop.f32.mrb[0].mxu0
        %v3425 = vadd.f32 %v2945, %v3424
        %3426 = vmatprep.mubr.f32.mxu0 %v2669
        %3427 = vmatmul.mubr.f32.gmra.mrb[0].mxu0 %v2668
        %v3428 = vpop.f32.mrb[0].mxu0
        %v3429 = vadd.f32 %v2941, %v3428
        %v3430 = vpop.f32.mrb[0].mxu0
        %v3431 = vadd.f32 %v2945, %v3430
        %3432 = vdwg.mxu0
        %3433 = vmatprep.subr.mxu0 %v2803
        %3434 = vmatpush1.msra.mxu0 %v2802
        %3435 = vmatprep.subr.mxu0 %v2807
        %3436 = vmatpush1.msra.mxu0 %v2806
        %3437 = vmatprep.subr.mxu0 %v2811
        %3438 = vmatpush1.msra.mxu0 %v2810
        %3439 = vmatprep.subr.mxu0 %v2815
        %3440 = vmatpush1.msra.mxu0 %v2814
        %3441 = vmatprep.subr.mxu0 %v2819
        %3442 = vmatpush1.msra.mxu0 %v2818
        %3443 = vmatprep.subr.mxu0 %v2823
        %3444 = vmatpush1.msra.mxu0 %v2822
        %3445 = vmatprep.subr.mxu0 %v2827
        %3446 = vmatpush1.msra.mxu0 %v2826
        %3447 = vmatprep.subr.mxu0 %v2831
        %3448 = vmatpush1.msra.mxu0 %v2830
        %3449 = vmatprep.subr.mxu0 %v2835
        %3450 = vmatpush1.msra.mxu0 %v2834
        %3451 = vmatprep.subr.mxu0 %v2839
        %3452 = vmatpush1.msra.mxu0 %v2838
        %3453 = vmatprep.subr.mxu0 %v2843
        %3454 = vmatpush1.msra.mxu0 %v2842
        %3455 = vmatprep.subr.mxu0 %v2847
        %3456 = vmatpush1.msra.mxu0 %v2846
        %3457 = vmatprep.subr.mxu0 %v2851
        %3458 = vmatpush1.msra.mxu0 %v2850
        %3459 = vmatprep.subr.mxu0 %v2855
        %3460 = vmatpush1.msra.mxu0 %v2854
        %3461 = vmatprep.subr.mxu0 %v2859
        %3462 = vmatpush1.msra.mxu0 %v2858
        %3463 = vmatprep.subr.mxu0 %v2863
        %3464 = vmatpush1.msra.mxu0 %v2862
        %3465 = vmatprep.subr.mxu0 %v2867
        %3466 = vmatpush1.msra.mxu0 %v2866
        %3467 = vmatprep.subr.mxu0 %v2871
        %3468 = vmatpush1.msra.mxu0 %v2870
        %3469 = vmatprep.subr.mxu0 %v2875
        %3470 = vmatpush1.msra.mxu0 %v2874
        %3471 = vmatprep.subr.mxu0 %v2879
        %3472 = vmatpush1.msra.mxu0 %v2878
        %3473 = vmatprep.subr.mxu0 %v2883
        %3474 = vmatpush1.msra.mxu0 %v2882
        %3475 = vmatprep.subr.mxu0 %v2887
        %3476 = vmatpush1.msra.mxu0 %v2886
        %3477 = vmatprep.subr.mxu0 %v2891
        %3478 = vmatpush1.msra.mxu0 %v2890
        %3479 = vmatprep.subr.mxu0 %v2895
        %3480 = vmatpush1.msra.mxu0 %v2894
        %3481 = vmatprep.subr.mxu0 %v2899
        %3482 = vmatpush1.msra.mxu0 %v2898
        %3483 = vmatprep.subr.mxu0 %v2903
        %3484 = vmatpush1.msra.mxu0 %v2902
        %3485 = vmatprep.subr.mxu0 %v2907
        %3486 = vmatpush1.msra.mxu0 %v2906
        %3487 = vmatprep.subr.mxu0 %v2911
        %3488 = vmatpush1.msra.mxu0 %v2910
        %3489 = vmatprep.subr.mxu0 %v2915
        %3490 = vmatpush1.msra.mxu0 %v2914
        %3491 = vmatprep.subr.mxu0 %v2919
        %3492 = vmatpush1.msra.mxu0 %v2918
        %3493 = vmatprep.subr.mxu0 %v2923
        %3494 = vmatpush1.msra.mxu0 %v2922
        %3495 = vmatprep.subr.mxu0 %v2927
        %3496 = vmatpush1.msra.mxu0 %v2926
        %3497 = vmatprep.mubr.f32.mxu0 %v2611
        %3498 = vmatmul.mubr.f32.gmra.mrb[0].mxu0 %v2610
        %v3499 = vpop.f32.mrb[0].mxu0
        %v3500 = vadd.f32 %v3339, %v3499
        %v3501 = vpop.f32.mrb[0].mxu0
        %v3502 = vadd.f32 %v3341, %v3501
        %3503 = vmatprep.mubr.f32.mxu0 %v2615
        %3504 = vmatmul.mubr.f32.gmra.mrb[0].mxu0 %v2614
        %v3505 = vpop.f32.mrb[0].mxu0
        %v3506 = vadd.f32 %v3345, %v3505
        %v3507 = vpop.f32.mrb[0].mxu0
        %v3508 = vadd.f32 %v3347, %v3507
        %3509 = vmatprep.mubr.f32.mxu0 %v2619
        %3510 = vmatmul.mubr.f32.gmra.mrb[0].mxu0 %v2618
        %v3511 = vpop.f32.mrb[0].mxu0
        %v3512 = vadd.f32 %v3351, %v3511
        %v3513 = vpop.f32.mrb[0].mxu0
        %v3514 = vadd.f32 %v3353, %v3513
        %3515 = vmatprep.mubr.f32.mxu0 %v2623
        %3516 = vmatmul.mubr.f32.gmra.mrb[0].mxu0 %v2622
        %v3517 = vpop.f32.mrb[0].mxu0
        %v3518 = vadd.f32 %v3357, %v3517
        %v3519 = vpop.f32.mrb[0].mxu0
        %v3520 = vadd.f32 %v3359, %v3519
        %3521 = vmatprep.mubr.f32.mxu0 %v2627
        %3522 = vmatmul.mubr.f32.gmra.mrb[0].mxu0 %v2626
        %v3523 = vpop.f32.mrb[0].mxu0
        %v3524 = vadd.f32 %v3363, %v3523
        %v3525 = vpop.f32.mrb[0].mxu0
        %v3526 = vadd.f32 %v3365, %v3525
        %3527 = vmatprep.mubr.f32.mxu0 %v2631
        %3528 = vmatmul.mubr.f32.gmra.mrb[0].mxu0 %v2630
        %v3529 = vpop.f32.mrb[0].mxu0
        %v3530 = vadd.f32 %v3369, %v3529
        %v3531 = vpop.f32.mrb[0].mxu0
        %v3532 = vadd.f32 %v3371, %v3531
        %3533 = vmatprep.mubr.f32.mxu0 %v2635
        %3534 = vmatmul.mubr.f32.gmra.mrb[0].mxu0 %v2634
        %v3535 = vpop.f32.mrb[0].mxu0
        %v3536 = vadd.f32 %v3375, %v3535
        %v3537 = vpop.f32.mrb[0].mxu0
        %v3538 = vadd.f32 %v3377, %v3537
        %3539 = vmatprep.mubr.f32.mxu0 %v2639
        %3540 = vmatmul.mubr.f32.gmra.mrb[0].mxu0 %v2638
        %v3541 = vpop.f32.mrb[0].mxu0
        %v3542 = vadd.f32 %v3381, %v3541
        %v3543 = vpop.f32.mrb[0].mxu0
        %v3544 = vadd.f32 %v3383, %v3543
        %3545 = vmatprep.mubr.f32.mxu0 %v2643
        %3546 = vmatmul.mubr.f32.gmra.mrb[0].mxu0 %v2642
        %v3547 = vpop.f32.mrb[0].mxu0
        %v3548 = vadd.f32 %v3387, %v3547
        %v3549 = vpop.f32.mrb[0].mxu0
        %v3550 = vadd.f32 %v3389, %v3549
        %3551 = vmatprep.mubr.f32.mxu0 %v2647
        %3552 = vmatmul.mubr.f32.gmra.mrb[0].mxu0 %v2646
        %v3553 = vpop.f32.mrb[0].mxu0
        %v3554 = vadd.f32 %v3393, %v3553
        %v3555 = vpop.f32.mrb[0].mxu0
        %v3556 = vadd.f32 %v3395, %v3555
        %3557 = vmatprep.mubr.f32.mxu0 %v2651
        %3558 = vmatmul.mubr.f32.gmra.mrb[0].mxu0 %v2650
        %v3559 = vpop.f32.mrb[0].mxu0
        %v3560 = vadd.f32 %v3399, %v3559
        %v3561 = vpop.f32.mrb[0].mxu0
        %v3562 = vadd.f32 %v3401, %v3561
        %3563 = vmatprep.mubr.f32.mxu0 %v2655
        %3564 = vmatmul.mubr.f32.gmra.mrb[0].mxu0 %v2654
        %v3565 = vpop.f32.mrb[0].mxu0
        %v3566 = vadd.f32 %v3405, %v3565
        %v3567 = vpop.f32.mrb[0].mxu0
        %v3568 = vadd.f32 %v3407, %v3567
        %3569 = vmatprep.mubr.f32.mxu0 %v2659
        %3570 = vmatmul.mubr.f32.gmra.mrb[0].mxu0 %v2658
        %v3571 = vpop.f32.mrb[0].mxu0
        %v3572 = vadd.f32 %v3411, %v3571
        %v3573 = vpop.f32.mrb[0].mxu0
        %v3574 = vadd.f32 %v3413, %v3573
        %3575 = vmatprep.mubr.f32.mxu0 %v2663
        %3576 = vmatmul.mubr.f32.gmra.mrb[0].mxu0 %v2662
        %v3577 = vpop.f32.mrb[0].mxu0
        %v3578 = vadd.f32 %v3417, %v3577
        %v3579 = vpop.f32.mrb[0].mxu0
        %v3580 = vadd.f32 %v3419, %v3579
        %3581 = vmatprep.mubr.f32.mxu0 %v2667
        %3582 = vmatmul.mubr.f32.gmra.mrb[0].mxu0 %v2666
        %v3583 = vpop.f32.mrb[0].mxu0
        %v3584 = vadd.f32 %v3423, %v3583
        %v3585 = vpop.f32.mrb[0].mxu0
        %v3586 = vadd.f32 %v3425, %v3585
        %3587 = vmatprep.mubr.f32.mxu0 %v2671
        %3588 = vmatmul.mubr.f32.gmra.mrb[0].mxu0 %v2670
        %v3589 = vpop.f32.mrb[0].mxu0
        %v3590 = vadd.f32 %v3429, %v3589
        %v3591 = vpop.f32.mrb[0].mxu0
        %v3592 = vadd.f32 %v3431, %v3591
        %3593 = vdwg.mxu0
        %v3594 = vmax.f32 %v3178, 0.0
        %v3595 = vmax.f32 %v3180, 0.0
        %v3596 = vmax.f32 %v3500, 0.0
        %v3597 = vmax.f32 %v3502, 0.0
        %v3598 = vmax.f32 %v3184, 0.0
        %v3599 = vmax.f32 %v3186, 0.0
        %v3600 = vmax.f32 %v3506, 0.0
        %v3601 = vmax.f32 %v3508, 0.0
        %v3602 = vmax.f32 %v3190, 0.0
        %v3603 = vmax.f32 %v3192, 0.0
        %v3604 = vmax.f32 %v3512, 0.0
        %v3605 = vmax.f32 %v3514, 0.0
        %v3606 = vmax.f32 %v3196, 0.0
        %v3607 = vmax.f32 %v3198, 0.0
        %v3608 = vmax.f32 %v3518, 0.0
        %v3609 = vmax.f32 %v3520, 0.0
        %v3610 = vmax.f32 %v3202, 0.0
        %v3611 = vmax.f32 %v3204, 0.0
        %v3612 = vmax.f32 %v3524, 0.0
        %v3613 = vmax.f32 %v3526, 0.0
        %v3614 = vmax.f32 %v3208, 0.0
        %v3615 = vmax.f32 %v3210, 0.0
        %v3616 = vmax.f32 %v3530, 0.0
        %v3617 = vmax.f32 %v3532, 0.0
        %v3618 = vmax.f32 %v3214, 0.0
        %v3619 = vmax.f32 %v3216, 0.0
        %v3620 = vmax.f32 %v3536, 0.0
        %v3621 = vmax.f32 %v3538, 0.0
        %v3622 = vmax.f32 %v3220, 0.0
        %v3623 = vmax.f32 %v3222, 0.0
        %v3624 = vmax.f32 %v3542, 0.0
        %v3625 = vmax.f32 %v3544, 0.0
        %v3626 = vmax.f32 %v3226, 0.0
        %v3627 = vmax.f32 %v3228, 0.0
        %v3628 = vmax.f32 %v3548, 0.0
        %v3629 = vmax.f32 %v3550, 0.0
        %v3630 = vmax.f32 %v3232, 0.0
        %v3631 = vmax.f32 %v3234, 0.0
        %v3632 = vmax.f32 %v3554, 0.0
        %v3633 = vmax.f32 %v3556, 0.0
        %v3634 = vmax.f32 %v3238, 0.0
        %v3635 = vmax.f32 %v3240, 0.0
        %v3636 = vmax.f32 %v3560, 0.0
        %v3637 = vmax.f32 %v3562, 0.0
        %v3638 = vmax.f32 %v3244, 0.0
        %v3639 = vmax.f32 %v3246, 0.0
        %v3640 = vmax.f32 %v3566, 0.0
        %v3641 = vmax.f32 %v3568, 0.0
        %v3642 = vmax.f32 %v3250, 0.0
        %v3643 = vmax.f32 %v3252, 0.0
        %v3644 = vmax.f32 %v3572, 0.0
        %v3645 = vmax.f32 %v3574, 0.0
        %v3646 = vmax.f32 %v3256, 0.0
        %v3647 = vmax.f32 %v3258, 0.0
        %v3648 = vmax.f32 %v3578, 0.0
        %v3649 = vmax.f32 %v3580, 0.0
        %v3650 = vmax.f32 %v3262, 0.0
        %v3651 = vmax.f32 %v3264, 0.0
        %v3652 = vmax.f32 %v3584, 0.0
        %v3653 = vmax.f32 %v3586, 0.0
        %v3654 = vmax.f32 %v3268, 0.0
        %v3655 = vmax.f32 %v3270, 0.0
        %v3656 = vmax.f32 %v3590, 0.0
        %v3657 = vmax.f32 %v3592, 0.0
        %3658 = vst [vmem:[%s254] sm:$0xff] %v3594
        %3659 = vst [vmem:[%s254 + $0x8] sm:$0xff] %v3595
        %3660 = vst [vmem:[%s254 + $0x10] sm:$0xff] %v3596
        %3661 = vst [vmem:[%s254 + $0x18] sm:$0xff] %v3597
        %3662 = vst [vmem:[%s254 + $0x20] sm:$0xff] %v3598
        %3663 = vst [vmem:[%s254 + $0x28] sm:$0xff] %v3599
        %3664 = vst [vmem:[%s254 + $0x30] sm:$0xff] %v3600
        %3665 = vst [vmem:[%s254 + $0x38] sm:$0xff] %v3601
        %3666 = vst [vmem:[%s254 + $0x40] sm:$0xff] %v3602
        %3667 = vst [vmem:[%s254 + $0x48] sm:$0xff] %v3603
        %3668 = vst [vmem:[%s254 + $0x50] sm:$0xff] %v3604
        %3669 = vst [vmem:[%s254 + $0x58] sm:$0xff] %v3605
        %3670 = vst [vmem:[%s254 + $0x60] sm:$0xff] %v3606
        %3671 = vst [vmem:[%s254 + $0x68] sm:$0xff] %v3607
        %3672 = vst [vmem:[%s254 + $0x70] sm:$0xff] %v3608
        %3673 = vst [vmem:[%s254 + $0x78] sm:$0xff] %v3609
        %3674 = vst [vmem:[%s254 + $0x80] sm:$0xff] %v3610
        %3675 = vst [vmem:[%s254 + $0x88] sm:$0xff] %v3611
        %3676 = vst [vmem:[%s254 + $0x90] sm:$0xff] %v3612
        %3677 = vst [vmem:[%s254 + $0x98] sm:$0xff] %v3613
        %3678 = vst [vmem:[%s254 + $0xa0] sm:$0xff] %v3614
        %3679 = vst [vmem:[%s254 + $0xa8] sm:$0xff] %v3615
        %3680 = vst [vmem:[%s254 + $0xb0] sm:$0xff] %v3616
        %3681 = vst [vmem:[%s254 + $0xb8] sm:$0xff] %v3617
        %3682 = vst [vmem:[%s254 + $0xc0] sm:$0xff] %v3618
        %3683 = vst [vmem:[%s254 + $0xc8] sm:$0xff] %v3619
        %3684 = vst [vmem:[%s254 + $0xd0] sm:$0xff] %v3620
        %3685 = vst [vmem:[%s254 + $0xd8] sm:$0xff] %v3621
        %3686 = vst [vmem:[%s254 + $0xe0] sm:$0xff] %v3622
        %3687 = vst [vmem:[%s254 + $0xe8] sm:$0xff] %v3623
        %3688 = vst [vmem:[%s254 + $0xf0] sm:$0xff] %v3624
        %3689 = vst [vmem:[%s254 + $0xf8] sm:$0xff] %v3625
        %3690 = vst [vmem:[%s254 + $0x100] sm:$0xff] %v3626
        %3691 = vst [vmem:[%s254 + $0x108] sm:$0xff] %v3627
        %3692 = vst [vmem:[%s254 + $0x110] sm:$0xff] %v3628
        %3693 = vst [vmem:[%s254 + $0x118] sm:$0xff] %v3629
        %3694 = vst [vmem:[%s254 + $0x120] sm:$0xff] %v3630
        %3695 = vst [vmem:[%s254 + $0x128] sm:$0xff] %v3631
        %3696 = vst [vmem:[%s254 + $0x130] sm:$0xff] %v3632
        %3697 = vst [vmem:[%s254 + $0x138] sm:$0xff] %v3633
        %3698 = vst [vmem:[%s254 + $0x140] sm:$0xff] %v3634
        %3699 = vst [vmem:[%s254 + $0x148] sm:$0xff] %v3635
        %3700 = vst [vmem:[%s254 + $0x150] sm:$0xff] %v3636
        %3701 = vst [vmem:[%s254 + $0x158] sm:$0xff] %v3637
        %3702 = vst [vmem:[%s254 + $0x160] sm:$0xff] %v3638
        %3703 = vst [vmem:[%s254 + $0x168] sm:$0xff] %v3639
        %3704 = vst [vmem:[%s254 + $0x170] sm:$0xff] %v3640
        %3705 = vst [vmem:[%s254 + $0x178] sm:$0xff] %v3641
        %3706 = vst [vmem:[%s254 + $0x180] sm:$0xff] %v3642
        %3707 = vst [vmem:[%s254 + $0x188] sm:$0xff] %v3643
        %3708 = vst [vmem:[%s254 + $0x190] sm:$0xff] %v3644
        %3709 = vst [vmem:[%s254 + $0x198] sm:$0xff] %v3645
        %3710 = vst [vmem:[%s254 + $0x1a0] sm:$0xff] %v3646
        %3711 = vst [vmem:[%s254 + $0x1a8] sm:$0xff] %v3647
        %3712 = vst [vmem:[%s254 + $0x1b0] sm:$0xff] %v3648
        %3713 = vst [vmem:[%s254 + $0x1b8] sm:$0xff] %v3649
        %3714 = vst [vmem:[%s254 + $0x1c0] sm:$0xff] %v3650
        %3715 = vst [vmem:[%s254 + $0x1c8] sm:$0xff] %v3651
        %3716 = vst [vmem:[%s254 + $0x1d0] sm:$0xff] %v3652
        %3717 = vst [vmem:[%s254 + $0x1d8] sm:$0xff] %v3653
        %3718 = vst [vmem:[%s254 + $0x1e0] sm:$0xf] %v3654
        %3719 = vst [vmem:[%s254 + $0x1e8] sm:$0xf] %v3655
        %3720 = vst [vmem:[%s254 + $0x1f0] sm:$0xf] %v3656
        %3721 = vst [vmem:[%s254 + $0x1f8] sm:$0xf] %v3657
        %p3722 = scmp.lt.s32.totalorder %s18, 1
        %s3723 = scalar_select %p3722, %s18, 1
        %s3724 = smul.addr %s3723, 64
        %s3725 = smul.addr %s3724, 8
        %s3726 = scalar_lea.vmem %s5, %s3725
        // Predicated region
        $region49: #{tpu_custom_call.1} parent=39 // pred_check
          %p3727 = pneg %p146
        $region50: #{tpu_custom_call.1} parent=39 // pred_check_branch
          %3729 = sbr.rel (%p3727) target = $region52
        $region51: #{tpu_custom_call.1} parent=39 // pred_region
          _
        $region52: #{tpu_custom_call.1} parent=39 // pred_fallthru
          _
      $region40: #{tpu_custom_call.1} parent=5 // pred_fallthru
        _
      %p3730 = scmp.le.s32.totalorder 2, %s13
      // Predicated region
      $region53: #{tpu_custom_call.1} parent=5 // pred_check
        %p3731 = pneg %p3730
      $region54: #{tpu_custom_call.1} parent=5 // pred_check_branch
        %3733 = sbr.rel (%p3731) target = $region56
      $region55: #{tpu_custom_call.1} parent=5 // pred_region
        %s3734 = ssub.s32 %s13, 2
        // Predicated region
        $region57: #{tpu_custom_call.1} parent=55 // pred_check
          %p3735 = pneg %p152
        $region58: #{tpu_custom_call.1} parent=55 // pred_check_branch
          %3737 = sbr.rel (%p3735) target = $region60
        $region59: #{tpu_custom_call.1} parent=55 // pred_region
          %p3738 = scmp.lt.s32.totalorder %s19, 1
          %s3739 = scalar_select %p3738, %s19, 1
          %s3740 = smul.addr %s3739, 64
          %s3741 = smul.addr %s3740, 8
          %s3742 = scalar_lea.vmem %s5, %s3741
        $region60: #{tpu_custom_call.1} parent=55 // pred_fallthru
          _
      $region56: #{tpu_custom_call.1} parent=5 // pred_fallthru
        _
    $region6: #{tpu_custom_call.1} parent=1 // loop_footer
      %s17 = sadd.s32 1, %s13
    $region7: #{tpu_custom_call.1} parent=1 // loop_footer_branch
      %12 = sbr.rel target = $region3
    $region8: #{tpu_custom_call.1} parent=1 // loop_exit
      _
    %3743 = vsyncpa [#allocation3], 1
    %s3744 = scalar_lea.sflag [#allocation3], 1
    %3745 = vsyncpa %s3744, 1
    %3746 = vsyncpa [#allocation5], 1

</llo_original>
